<compile_context>
chip_gen: v5e
topology: v5e:2x2
jax: 0.10.0
libtpu: 0.0.40
codegen_flags: <defaults>
</compile_context>

<pallas_src>
import functools

import jax
import jax.numpy as jnp
import numpy as np
from jax import lax
from jax.experimental import pallas as pl
from jax.experimental.pallas import tpu as pltpu

EPS = 1e-5
MAX_IMAGES_PER_STEP = 8      # M = 8 * 16 = 128 rows: fills the MXU row dimension


def _channel_total(s, width, channels):
    """(1, W*C) row (lane = j*C + c) -> every lane holds its channel's total over W.

    Power-of-two W: log2(W)-step cyclic lane-roll butterfly (XLU ops, no cross-lane
    relayout, no tile/broadcast needed afterwards).  Otherwise fall back to an explicit
    fold + tile.
    """
    wc = width * channels
    if width & (width - 1) == 0:           # power of two (includes width == 1: no-op)
        shift = channels
        while shift < wc:
            s = s + pltpu.roll(s, shift=shift, axis=1)
            shift *= 2
        return s
    sc = jnp.sum(s.reshape(width, channels), axis=0, keepdims=True)   # (1, C)
    return jnp.tile(sc, (1, width))                                   # (1, W*C)


def _instance_norm_relu(x, images, height, width, channels):
    """Two-pass InstanceNorm (biased var, eps=1e-5) + ReLU on an (images*H, W*C) slab.

    Stats are per (image, channel); only the tiny (1, W*C) stat rows are handled
    per-image (static unroll) -- all heavy elementwise work stays full-slab, lane-dense.
    """
    hh = height
    wc = x.shape[1]
    inv_n = 1.0 / (hh * width)

    def per_image_channel_sums(v):
        rows = []
        for b in range(images):                                    # cheap static unroll
            # aligned 16-row slice -> sublane reduce -> lane butterfly -> sublane bcast
            s = jnp.sum(v[b * hh:(b + 1) * hh, :], axis=0, keepdims=True)   # (1, W*C)
            s = _channel_total(s, width, channels)
            rows.append(jnp.broadcast_to(s, (hh, wc)))
        return jnp.concatenate(rows, axis=0)                       # (images*H, W*C)

    mean = per_image_channel_sums(x) * inv_n
    d = x - mean
    var = per_image_channel_sums(d * d) * inv_n                    # two-pass variance
    return jnp.maximum(d * lax.rsqrt(var + EPS), 0.0)              # rsqrt on the EUP


def _conv3x3_batched(y, wexp_ref, height, precision):
    """3x3 SAME conv of row-stacked images as ONE MXU matmul.

    y: (images*H, W*C).  wexp_ref: (3*W*C, W*C) block-banded weights (horizontal taps +
    channel mixing + SAME padding along W folded into the contraction).  The 3 vertical
    taps are row-shifted copies concatenated along lanes; rows at image boundaries are
    zeroed (SAME padding along H + independence of the stacked images).
    """
    m, wc = y.shape
    zrow = jnp.zeros((1, wc), dtype=y.dtype)
    up = jnp.concatenate([zrow, y[:-1, :]], axis=0)    # row r sees row r-1
    dn = jnp.concatenate([y[1:, :], zrow], axis=0)     # row r sees row r+1
    local = lax.broadcasted_iota(jnp.int32, (m, wc), 0) % height
    up = jnp.where(local == 0, 0.0, up)                # top padding / image boundary
    dn = jnp.where(local == height - 1, 0.0, dn)       # bottom padding / image boundary
    pmat = jnp.concatenate([up, y, dn], axis=1)        # (images*H, 3*W*C), lane aligned
    return jnp.dot(pmat, wexp_ref[...],
                   preferred_element_type=jnp.float32, precision=precision)


def _resblock_kernel(x_ref, w1_ref, w2_ref, o_ref, *, images, height, width,
                     channels, precision):
    # x_ref / o_ref: (images*H, W*C) slab; w*_ref: (3*W*C, W*C) resident weights.
    x = x_ref[...].astype(jnp.float32)
    h = _instance_norm_relu(x, images, height, width, channels)
    h = _conv3x3_batched(h, w1_ref, height, precision)
    h = _instance_norm_relu(h, images, height, width, channels)
    h = _conv3x3_batched(h, w2_ref, height, precision)
    o_ref[...] = (h + x).astype(o_ref.dtype)           # one full-slab lane-dense store


def _expand_conv_weight(w_hwio, width):
    """(KH, KW, Cin, Cout) HWIO -> (KH*W*Cin, W*Cout) block-banded matrix.

    Row index = ky*(W*Cin) + jp*Cin + ci  (jp = input column)
    Col index = j*Cout + co               (j  = output column)
    Entry     = w[ky, jp - j + KW//2, ci, co] if |jp - j| <= KW//2 else 0,
    encoding the horizontal taps + SAME zero padding along W.
    """
    kh, kw, cin, cout = w_hwio.shape
    jp = jnp.arange(width)[None, :, None]
    j = jnp.arange(width)[None, None, :]
    kx = jnp.arange(kw)[:, None, None]
    sel = (jp == j + kx - (kw // 2)).astype(w_hwio.dtype)        # (KW, W, W)
    big = jnp.einsum("xpj,yxio->ypijo", sel, w_hwio)             # (KH, W, Cin, W, Cout)
    return big.reshape(kh * width * cin, width * cout)


def resblock_pallas(x_nhwc, w1_hwio, w2_hwio, *,
                    max_images_per_step=MAX_IMAGES_PER_STEP,
                    precision=lax.Precision.HIGHEST):
    n, h, w, c = x_nhwc.shape
    wc = w * c
    w1e = _expand_conv_weight(w1_hwio, w)      # (3*W*C, W*C), built once in the wrapper
    w2e = _expand_conv_weight(w2_hwio, w)

    nb = min(n, max_images_per_step)           # images per grid step
    steps = -(-n // nb)                        # cdiv; pad N so no silent nb=1 fallback
    n_pad = steps * nb
    x2d = x_nhwc.reshape(n * h, wc)            # lane-dense layout seen by the kernel
    if n_pad != n:
        x2d = jnp.concatenate(
            [x2d, jnp.zeros(((n_pad - n) * h, wc), x2d.dtype)], axis=0)
    # (8,128) rule only binds when the block is not the full array extent.
    assert steps == 1 or (nb * h) % 8 == 0, "nb*H must be a multiple of 8 when tiling N"

    kernel = functools.partial(_resblock_kernel, images=nb, height=h, width=w,
                               channels=c, precision=precision)
    # VMEM footprint (double-buffered activations + 2 resident 192 KiB weights) is well
    # under even v7x's 64 MiB at these sizes; re-derive if scaling W*C or H up.
    out = pl.pallas_call(
        kernel,
        out_shape=jax.ShapeDtypeStruct((n_pad * h, wc), x_nhwc.dtype),
        grid_spec=pltpu.PrefetchScalarGridSpec(
            num_scalar_prefetch=0,
            grid=(steps,),
            in_specs=[
                pl.BlockSpec((nb * h, wc), lambda i: (i, 0)),
                pl.BlockSpec((3 * wc, wc), lambda i: (0, 0)),   # weights stay resident
                pl.BlockSpec((3 * wc, wc), lambda i: (0, 0)),
            ],
            out_specs=pl.BlockSpec((nb * h, wc), lambda i: (i, 0)),
        ),
        compiler_params=pltpu.CompilerParams(
            dimension_semantics=("parallel",)),
    )(x2d, w1e, w2e)
    return out[: n * h].reshape(n, h, w, c)


# ----------------------- pure-JAX reference (for checking) -----------------------
def _ref_in_relu(x):
    mean = jnp.mean(x, axis=(1, 2), keepdims=True)
    var = jnp.mean(jnp.square(x - mean), axis=(1, 2), keepdims=True)
    return jnp.maximum((x - mean) * lax.rsqrt(var + EPS), 0.0)


def resblock_reference(x_nhwc, w1_hwio, w2_hwio):
    dn = lax.conv_dimension_numbers(x_nhwc.shape, w1_hwio.shape,
                                    ("NHWC", "HWIO", "NHWC"))
    h = _ref_in_relu(x_nhwc)
    h = lax.conv_general_dilated(h, w1_hwio, (1, 1), "SAME", dimension_numbers=dn,
                                 precision=lax.Precision.HIGHEST)
    h = _ref_in_relu(h)
    h = lax.conv_general_dilated(h, w2_hwio, (1, 1), "SAME", dimension_numbers=dn,
                                 precision=lax.Precision.HIGHEST)
    return h + x_nhwc


if __name__ == "__main__":
    # ResBlock(in_channels=8) on NCHW (2, 8, 16, 16) == NHWC (2, 16, 16, 8);
    # W * C = 128 so the kernel's lane axis is exactly one full vreg row.
    N, C, H, W = 2, 8, 16, 16

    key = jax.random.PRNGKey(0)
    kx, k1, k2 = jax.random.split(key, 3)

    x = jax.random.normal(kx, (N, H, W, C), dtype=jnp.float32)
    scale = 1.0 / np.sqrt(C * 9)                      # Kaiming-ish scale
    w1 = jax.random.normal(k1, (3, 3, C, C), dtype=jnp.float32) * scale
    w2 = jax.random.normal(k2, (3, 3, C, C), dtype=jnp.float32) * scale

    out = jax.block_until_ready(resblock_pallas(x, w1, w2))
    ref = jax.block_until_ready(resblock_reference(x, w1, w2))

    # fp32-contraction pinned on both sides; only summation-order-level deviations.
    np.testing.assert_allclose(np.asarray(out), np.asarray(ref),
                               rtol=1e-5, atol=5e-5)

    print("KERNEL_OK")
</pallas_src>

<mosaic_0001>
module attributes {stable_mosaic.version = 11 : i64} {
  func.func @_resblock_kernel(%arg0: i32, %arg1: memref<32x128xf32, #tpu.memory_space<vmem>>, %arg2: memref<384x128xf32, #tpu.memory_space<vmem>>, %arg3: memref<384x128xf32, #tpu.memory_space<vmem>>, %arg4: memref<32x128xf32, #tpu.memory_space<vmem>>) attributes {dimension_semantics = [#tpu.dimension_semantics<parallel>], iteration_bounds = array<i64: 1>, scalar_prefetch = 0 : i64, scratch_operands = 0 : i64, tpu.core_type = #tpu.core_type<tc>, window_params = [{transform_indices = @transform_0, window_bounds = array<i64: 32, 128>}, {pipeline_mode = #tpu.pipeline_mode<synchronous>, transform_indices = @transform_1, window_bounds = array<i64: 384, 128>}, {pipeline_mode = #tpu.pipeline_mode<synchronous>, transform_indices = @transform_2, window_bounds = array<i64: 384, 128>}, {transform_indices = @transform_3, window_bounds = array<i64: 32, 128>}]} {
    %c0 = arith.constant 0 : index
    %c0_0 = arith.constant 0 : index
    %0 = vector.load %arg1[%c0, %c0_0] : memref<32x128xf32, #tpu.memory_space<vmem>>, vector<32x128xf32>
    %1 = vector.extract_strided_slice %0 {offsets = [0, 0], sizes = [16, 128], strides = [1, 1]} : vector<32x128xf32> to vector<16x128xf32>
    %cst = arith.constant dense<0.000000e+00> : vector<128xf32>
    %2 = vector.multi_reduction <add>, %1, %cst [0] : vector<16x128xf32> to vector<128xf32>
    %3 = vector.shape_cast %2 : vector<128xf32> to vector<1x128xf32>
    %c8_i32 = arith.constant 8 : i32
    %4 = tpu.dynamic_rotate %3 by %c8_i32 dim 1 : vector<1x128xf32>, i32 -> vector<1x128xf32>
    %5 = arith.addf %3, %4 : vector<1x128xf32>
    %c16_i32 = arith.constant 16 : i32
    %6 = tpu.dynamic_rotate %5 by %c16_i32 dim 1 : vector<1x128xf32>, i32 -> vector<1x128xf32>
    %7 = arith.addf %5, %6 : vector<1x128xf32>
    %c32_i32 = arith.constant 32 : i32
    %8 = tpu.dynamic_rotate %7 by %c32_i32 dim 1 : vector<1x128xf32>, i32 -> vector<1x128xf32>
    %9 = arith.addf %7, %8 : vector<1x128xf32>
    %c64_i32 = arith.constant 64 : i32
    %10 = tpu.dynamic_rotate %9 by %c64_i32 dim 1 : vector<1x128xf32>, i32 -> vector<1x128xf32>
    %11 = arith.addf %9, %10 : vector<1x128xf32>
    %12 = vector.shape_cast %11 : vector<1x128xf32> to vector<1x128xf32>
    %13 = vector.broadcast %12 : vector<1x128xf32> to vector<16x128xf32>
    %14 = vector.extract_strided_slice %0 {offsets = [16, 0], sizes = [16, 128], strides = [1, 1]} : vector<32x128xf32> to vector<16x128xf32>
    %cst_1 = arith.constant dense<0.000000e+00> : vector<128xf32>
    %15 = vector.multi_reduction <add>, %14, %cst_1 [0] : vector<16x128xf32> to vector<128xf32>
    %16 = vector.shape_cast %15 : vector<128xf32> to vector<1x128xf32>
    %c8_i32_2 = arith.constant 8 : i32
    %17 = tpu.dynamic_rotate %16 by %c8_i32_2 dim 1 : vector<1x128xf32>, i32 -> vector<1x128xf32>
    %18 = arith.addf %16, %17 : vector<1x128xf32>
    %c16_i32_3 = arith.constant 16 : i32
    %19 = tpu.dynamic_rotate %18 by %c16_i32_3 dim 1 : vector<1x128xf32>, i32 -> vector<1x128xf32>
    %20 = arith.addf %18, %19 : vector<1x128xf32>
    %c32_i32_4 = arith.constant 32 : i32
    %21 = tpu.dynamic_rotate %20 by %c32_i32_4 dim 1 : vector<1x128xf32>, i32 -> vector<1x128xf32>
    %22 = arith.addf %20, %21 : vector<1x128xf32>
    %c64_i32_5 = arith.constant 64 : i32
    %23 = tpu.dynamic_rotate %22 by %c64_i32_5 dim 1 : vector<1x128xf32>, i32 -> vector<1x128xf32>
    %24 = arith.addf %22, %23 : vector<1x128xf32>
    %25 = vector.shape_cast %24 : vector<1x128xf32> to vector<1x128xf32>
    %26 = vector.broadcast %25 : vector<1x128xf32> to vector<16x128xf32>
    %27 = tpu.concatenate %13, %26 in 0 : vector<16x128xf32>, vector<16x128xf32> -> vector<32x128xf32>
    %cst_6 = arith.constant 3.906250e-03 : f32
    %28 = vector.broadcast %cst_6 : f32 to vector<32x128xf32>
    %29 = arith.mulf %27, %28 : vector<32x128xf32>
    %30 = arith.subf %0, %29 : vector<32x128xf32>
    %31 = arith.mulf %30, %30 : vector<32x128xf32>
    %32 = vector.extract_strided_slice %31 {offsets = [0, 0], sizes = [16, 128], strides = [1, 1]} : vector<32x128xf32> to vector<16x128xf32>
    %cst_7 = arith.constant dense<0.000000e+00> : vector<128xf32>
    %33 = vector.multi_reduction <add>, %32, %cst_7 [0] : vector<16x128xf32> to vector<128xf32>
    %34 = vector.shape_cast %33 : vector<128xf32> to vector<1x128xf32>
    %c8_i32_8 = arith.constant 8 : i32
    %35 = tpu.dynamic_rotate %34 by %c8_i32_8 dim 1 : vector<1x128xf32>, i32 -> vector<1x128xf32>
    %36 = arith.addf %34, %35 : vector<1x128xf32>
    %c16_i32_9 = arith.constant 16 : i32
    %37 = tpu.dynamic_rotate %36 by %c16_i32_9 dim 1 : vector<1x128xf32>, i32 -> vector<1x128xf32>
    %38 = arith.addf %36, %37 : vector<1x128xf32>
    %c32_i32_10 = arith.constant 32 : i32
    %39 = tpu.dynamic_rotate %38 by %c32_i32_10 dim 1 : vector<1x128xf32>, i32 -> vector<1x128xf32>
    %40 = arith.addf %38, %39 : vector<1x128xf32>
    %c64_i32_11 = arith.constant 64 : i32
    %41 = tpu.dynamic_rotate %40 by %c64_i32_11 dim 1 : vector<1x128xf32>, i32 -> vector<1x128xf32>
    %42 = arith.addf %40, %41 : vector<1x128xf32>
    %43 = vector.shape_cast %42 : vector<1x128xf32> to vector<1x128xf32>
    %44 = vector.broadcast %43 : vector<1x128xf32> to vector<16x128xf32>
    %45 = vector.extract_strided_slice %31 {offsets = [16, 0], sizes = [16, 128], strides = [1, 1]} : vector<32x128xf32> to vector<16x128xf32>
    %cst_12 = arith.constant dense<0.000000e+00> : vector<128xf32>
    %46 = vector.multi_reduction <add>, %45, %cst_12 [0] : vector<16x128xf32> to vector<128xf32>
    %47 = vector.shape_cast %46 : vector<128xf32> to vector<1x128xf32>
    %c8_i32_13 = arith.constant 8 : i32
    %48 = tpu.dynamic_rotate %47 by %c8_i32_13 dim 1 : vector<1x128xf32>, i32 -> vector<1x128xf32>
    %49 = arith.addf %47, %48 : vector<1x128xf32>
    %c16_i32_14 = arith.constant 16 : i32
    %50 = tpu.dynamic_rotate %49 by %c16_i32_14 dim 1 : vector<1x128xf32>, i32 -> vector<1x128xf32>
    %51 = arith.addf %49, %50 : vector<1x128xf32>
    %c32_i32_15 = arith.constant 32 : i32
    %52 = tpu.dynamic_rotate %51 by %c32_i32_15 dim 1 : vector<1x128xf32>, i32 -> vector<1x128xf32>
    %53 = arith.addf %51, %52 : vector<1x128xf32>
    %c64_i32_16 = arith.constant 64 : i32
    %54 = tpu.dynamic_rotate %53 by %c64_i32_16 dim 1 : vector<1x128xf32>, i32 -> vector<1x128xf32>
    %55 = arith.addf %53, %54 : vector<1x128xf32>
    %56 = vector.shape_cast %55 : vector<1x128xf32> to vector<1x128xf32>
    %57 = vector.broadcast %56 : vector<1x128xf32> to vector<16x128xf32>
    %58 = tpu.concatenate %44, %57 in 0 : vector<16x128xf32>, vector<16x128xf32> -> vector<32x128xf32>
    %cst_17 = arith.constant 3.906250e-03 : f32
    %59 = vector.broadcast %cst_17 : f32 to vector<32x128xf32>
    %60 = arith.mulf %58, %59 : vector<32x128xf32>
    %cst_18 = arith.constant 9.99999974E-6 : f32
    %61 = vector.broadcast %cst_18 : f32 to vector<32x128xf32>
    %62 = arith.addf %60, %61 : vector<32x128xf32>
    %63 = math.rsqrt %62 : vector<32x128xf32>
    %64 = arith.mulf %30, %63 : vector<32x128xf32>
    %cst_19 = arith.constant 0.000000e+00 : f32
    %65 = vector.broadcast %cst_19 : f32 to vector<32x128xf32>
    %66 = arith.maximumf %64, %65 : vector<32x128xf32>
    %cst_20 = arith.constant 0.000000e+00 : f32
    %67 = vector.broadcast %cst_20 : f32 to vector<1x128xf32>
    %68 = vector.extract_strided_slice %66 {offsets = [0, 0], sizes = [31, 128], strides = [1, 1]} : vector<32x128xf32> to vector<31x128xf32>
    %69 = tpu.concatenate %67, %68 in 0 : vector<1x128xf32>, vector<31x128xf32> -> vector<32x128xf32>
    %70 = vector.extract_strided_slice %66 {offsets = [1, 0], sizes = [31, 128], strides = [1, 1]} : vector<32x128xf32> to vector<31x128xf32>
    %71 = tpu.concatenate %70, %67 in 0 : vector<31x128xf32>, vector<1x128xf32> -> vector<32x128xf32>
    %72 = tpu.iota {dimensions = array<i32: 0>} : vector<32x128xi32>
    %c16_i32_21 = arith.constant 16 : i32
    %c0_i32 = arith.constant 0 : i32
    %73 = arith.cmpi eq, %c16_i32_21, %c0_i32 : i32
    %c1_i32 = arith.constant 1 : i32
    %74 = arith.select %73, %c1_i32, %c16_i32_21 : i32
    %75 = vector.broadcast %74 : i32 to vector<32x128xi32>
    %76 = arith.remsi %72, %75 : vector<32x128xi32>
    %c0_i32_22 = arith.constant 0 : i32
    %77 = vector.broadcast %c0_i32_22 : i32 to vector<32x128xi32>
    %78 = arith.cmpi ne, %76, %77 : vector<32x128xi32>
    %c0_i32_23 = arith.constant 0 : i32
    %79 = vector.broadcast %c0_i32_23 : i32 to vector<32x128xi32>
    %80 = arith.cmpi slt, %76, %79 : vector<32x128xi32>
    %c0_i32_24 = arith.constant 0 : i32
    %81 = arith.cmpi slt, %74, %c0_i32_24 : i32
    %82 = vector.broadcast %81 : i1 to vector<32x128xi1>
    %83 = vector.broadcast %82 : vector<32x128xi1> to vector<32x128xi1>
    %84 = arith.xori %80, %83 : vector<32x128xi1>
    %85 = arith.andi %84, %78 : vector<32x128xi1>
    %86 = vector.broadcast %74 : i32 to vector<32x128xi32>
    %87 = arith.addi %76, %86 : vector<32x128xi32>
    %88 = arith.select %85, %87, %76 : vector<32x128xi1>, vector<32x128xi32>
    %c0_i32_25 = arith.constant 0 : i32
    %89 = vector.broadcast %c0_i32_25 : i32 to vector<32x128xi32>
    %90 = arith.cmpi eq, %88, %89 : vector<32x128xi32>
    %cst_26 = arith.constant 0.000000e+00 : f32
    %91 = vector.broadcast %cst_26 : f32 to vector<32x128xf32>
    %92 = arith.select %90, %91, %69 : vector<32x128xi1>, vector<32x128xf32>
    %c15_i32 = arith.constant 15 : i32
    %93 = vector.broadcast %c15_i32 : i32 to vector<32x128xi32>
    %94 = arith.cmpi eq, %88, %93 : vector<32x128xi32>
    %cst_27 = arith.constant 0.000000e+00 : f32
    %95 = vector.broadcast %cst_27 : f32 to vector<32x128xf32>
    %96 = arith.select %94, %95, %71 : vector<32x128xi1>, vector<32x128xf32>
    %97 = tpu.concatenate %92, %66, %96 in 1 : vector<32x128xf32>, vector<32x128xf32>, vector<32x128xf32> -> vector<32x384xf32>
    %c0_28 = arith.constant 0 : index
    %c0_29 = arith.constant 0 : index
    %98 = vector.load %arg2[%c0_28, %c0_29] : memref<384x128xf32, #tpu.memory_space<vmem>>, vector<384x128xf32>
    %cst_30 = arith.constant dense<0.000000e+00> : vector<32x128xf32>
    %99 = tpu.matmul %97, %98, %cst_30 {dimension_numbers = #tpu.dot_dimension_numbers<[1], [0], [0], [1], [0, 0, 1, 1], [], []>, precision = #tpu.contract_precision<fp32>} : vector<32x384xf32>, vector<384x128xf32>, vector<32x128xf32> -> vector<32x128xf32>
    %100 = vector.extract_strided_slice %99 {offsets = [0, 0], sizes = [16, 128], strides = [1, 1]} : vector<32x128xf32> to vector<16x128xf32>
    %cst_31 = arith.constant dense<0.000000e+00> : vector<128xf32>
    %101 = vector.multi_reduction <add>, %100, %cst_31 [0] : vector<16x128xf32> to vector<128xf32>
    %102 = vector.shape_cast %101 : vector<128xf32> to vector<1x128xf32>
    %c8_i32_32 = arith.constant 8 : i32
    %103 = tpu.dynamic_rotate %102 by %c8_i32_32 dim 1 : vector<1x128xf32>, i32 -> vector<1x128xf32>
    %104 = arith.addf %102, %103 : vector<1x128xf32>
    %c16_i32_33 = arith.constant 16 : i32
    %105 = tpu.dynamic_rotate %104 by %c16_i32_33 dim 1 : vector<1x128xf32>, i32 -> vector<1x128xf32>
    %106 = arith.addf %104, %105 : vector<1x128xf32>
    %c32_i32_34 = arith.constant 32 : i32
    %107 = tpu.dynamic_rotate %106 by %c32_i32_34 dim 1 : vector<1x128xf32>, i32 -> vector<1x128xf32>
    %108 = arith.addf %106, %107 : vector<1x128xf32>
    %c64_i32_35 = arith.constant 64 : i32
    %109 = tpu.dynamic_rotate %108 by %c64_i32_35 dim 1 : vector<1x128xf32>, i32 -> vector<1x128xf32>
    %110 = arith.addf %108, %109 : vector<1x128xf32>
    %111 = vector.shape_cast %110 : vector<1x128xf32> to vector<1x128xf32>
    %112 = vector.broadcast %111 : vector<1x128xf32> to vector<16x128xf32>
    %113 = vector.extract_strided_slice %99 {offsets = [16, 0], sizes = [16, 128], strides = [1, 1]} : vector<32x128xf32> to vector<16x128xf32>
    %cst_36 = arith.constant dense<0.000000e+00> : vector<128xf32>
    %114 = vector.multi_reduction <add>, %113, %cst_36 [0] : vector<16x128xf32> to vector<128xf32>
    %115 = vector.shape_cast %114 : vector<128xf32> to vector<1x128xf32>
    %c8_i32_37 = arith.constant 8 : i32
    %116 = tpu.dynamic_rotate %115 by %c8_i32_37 dim 1 : vector<1x128xf32>, i32 -> vector<1x128xf32>
    %117 = arith.addf %115, %116 : vector<1x128xf32>
    %c16_i32_38 = arith.constant 16 : i32
    %118 = tpu.dynamic_rotate %117 by %c16_i32_38 dim 1 : vector<1x128xf32>, i32 -> vector<1x128xf32>
    %119 = arith.addf %117, %118 : vector<1x128xf32>
    %c32_i32_39 = arith.constant 32 : i32
    %120 = tpu.dynamic_rotate %119 by %c32_i32_39 dim 1 : vector<1x128xf32>, i32 -> vector<1x128xf32>
    %121 = arith.addf %119, %120 : vector<1x128xf32>
    %c64_i32_40 = arith.constant 64 : i32
    %122 = tpu.dynamic_rotate %121 by %c64_i32_40 dim 1 : vector<1x128xf32>, i32 -> vector<1x128xf32>
    %123 = arith.addf %121, %122 : vector<1x128xf32>
    %124 = vector.shape_cast %123 : vector<1x128xf32> to vector<1x128xf32>
    %125 = vector.broadcast %124 : vector<1x128xf32> to vector<16x128xf32>
    %126 = tpu.concatenate %112, %125 in 0 : vector<16x128xf32>, vector<16x128xf32> -> vector<32x128xf32>
    %cst_41 = arith.constant 3.906250e-03 : f32
    %127 = vector.broadcast %cst_41 : f32 to vector<32x128xf32>
    %128 = arith.mulf %126, %127 : vector<32x128xf32>
    %129 = arith.subf %99, %128 : vector<32x128xf32>
    %130 = arith.mulf %129, %129 : vector<32x128xf32>
    %131 = vector.extract_strided_slice %130 {offsets = [0, 0], sizes = [16, 128], strides = [1, 1]} : vector<32x128xf32> to vector<16x128xf32>
    %cst_42 = arith.constant dense<0.000000e+00> : vector<128xf32>
    %132 = vector.multi_reduction <add>, %131, %cst_42 [0] : vector<16x128xf32> to vector<128xf32>
    %133 = vector.shape_cast %132 : vector<128xf32> to vector<1x128xf32>
    %c8_i32_43 = arith.constant 8 : i32
    %134 = tpu.dynamic_rotate %133 by %c8_i32_43 dim 1 : vector<1x128xf32>, i32 -> vector<1x128xf32>
    %135 = arith.addf %133, %134 : vector<1x128xf32>
    %c16_i32_44 = arith.constant 16 : i32
    %136 = tpu.dynamic_rotate %135 by %c16_i32_44 dim 1 : vector<1x128xf32>, i32 -> vector<1x128xf32>
    %137 = arith.addf %135, %136 : vector<1x128xf32>
    %c32_i32_45 = arith.constant 32 : i32
    %138 = tpu.dynamic_rotate %137 by %c32_i32_45 dim 1 : vector<1x128xf32>, i32 -> vector<1x128xf32>
    %139 = arith.addf %137, %138 : vector<1x128xf32>
    %c64_i32_46 = arith.constant 64 : i32
    %140 = tpu.dynamic_rotate %139 by %c64_i32_46 dim 1 : vector<1x128xf32>, i32 -> vector<1x128xf32>
    %141 = arith.addf %139, %140 : vector<1x128xf32>
    %142 = vector.shape_cast %141 : vector<1x128xf32> to vector<1x128xf32>
    %143 = vector.broadcast %142 : vector<1x128xf32> to vector<16x128xf32>
    %144 = vector.extract_strided_slice %130 {offsets = [16, 0], sizes = [16, 128], strides = [1, 1]} : vector<32x128xf32> to vector<16x128xf32>
    %cst_47 = arith.constant dense<0.000000e+00> : vector<128xf32>
    %145 = vector.multi_reduction <add>, %144, %cst_47 [0] : vector<16x128xf32> to vector<128xf32>
    %146 = vector.shape_cast %145 : vector<128xf32> to vector<1x128xf32>
    %c8_i32_48 = arith.constant 8 : i32
    %147 = tpu.dynamic_rotate %146 by %c8_i32_48 dim 1 : vector<1x128xf32>, i32 -> vector<1x128xf32>
    %148 = arith.addf %146, %147 : vector<1x128xf32>
    %c16_i32_49 = arith.constant 16 : i32
    %149 = tpu.dynamic_rotate %148 by %c16_i32_49 dim 1 : vector<1x128xf32>, i32 -> vector<1x128xf32>
    %150 = arith.addf %148, %149 : vector<1x128xf32>
    %c32_i32_50 = arith.constant 32 : i32
    %151 = tpu.dynamic_rotate %150 by %c32_i32_50 dim 1 : vector<1x128xf32>, i32 -> vector<1x128xf32>
    %152 = arith.addf %150, %151 : vector<1x128xf32>
    %c64_i32_51 = arith.constant 64 : i32
    %153 = tpu.dynamic_rotate %152 by %c64_i32_51 dim 1 : vector<1x128xf32>, i32 -> vector<1x128xf32>
    %154 = arith.addf %152, %153 : vector<1x128xf32>
    %155 = vector.shape_cast %154 : vector<1x128xf32> to vector<1x128xf32>
    %156 = vector.broadcast %155 : vector<1x128xf32> to vector<16x128xf32>
    %157 = tpu.concatenate %143, %156 in 0 : vector<16x128xf32>, vector<16x128xf32> -> vector<32x128xf32>
    %cst_52 = arith.constant 3.906250e-03 : f32
    %158 = vector.broadcast %cst_52 : f32 to vector<32x128xf32>
    %159 = arith.mulf %157, %158 : vector<32x128xf32>
    %cst_53 = arith.constant 9.99999974E-6 : f32
    %160 = vector.broadcast %cst_53 : f32 to vector<32x128xf32>
    %161 = arith.addf %159, %160 : vector<32x128xf32>
    %162 = math.rsqrt %161 : vector<32x128xf32>
    %163 = arith.mulf %129, %162 : vector<32x128xf32>
    %cst_54 = arith.constant 0.000000e+00 : f32
    %164 = vector.broadcast %cst_54 : f32 to vector<32x128xf32>
    %165 = arith.maximumf %163, %164 : vector<32x128xf32>
    %cst_55 = arith.constant 0.000000e+00 : f32
    %166 = vector.broadcast %cst_55 : f32 to vector<1x128xf32>
    %167 = vector.extract_strided_slice %165 {offsets = [0, 0], sizes = [31, 128], strides = [1, 1]} : vector<32x128xf32> to vector<31x128xf32>
    %168 = tpu.concatenate %166, %167 in 0 : vector<1x128xf32>, vector<31x128xf32> -> vector<32x128xf32>
    %169 = vector.extract_strided_slice %165 {offsets = [1, 0], sizes = [31, 128], strides = [1, 1]} : vector<32x128xf32> to vector<31x128xf32>
    %170 = tpu.concatenate %169, %166 in 0 : vector<31x128xf32>, vector<1x128xf32> -> vector<32x128xf32>
    %171 = tpu.iota {dimensions = array<i32: 0>} : vector<32x128xi32>
    %c16_i32_56 = arith.constant 16 : i32
    %c0_i32_57 = arith.constant 0 : i32
    %172 = arith.cmpi eq, %c16_i32_56, %c0_i32_57 : i32
    %c1_i32_58 = arith.constant 1 : i32
    %173 = arith.select %172, %c1_i32_58, %c16_i32_56 : i32
    %174 = vector.broadcast %173 : i32 to vector<32x128xi32>
    %175 = arith.remsi %171, %174 : vector<32x128xi32>
    %c0_i32_59 = arith.constant 0 : i32
    %176 = vector.broadcast %c0_i32_59 : i32 to vector<32x128xi32>
    %177 = arith.cmpi ne, %175, %176 : vector<32x128xi32>
    %c0_i32_60 = arith.constant 0 : i32
    %178 = vector.broadcast %c0_i32_60 : i32 to vector<32x128xi32>
    %179 = arith.cmpi slt, %175, %178 : vector<32x128xi32>
    %c0_i32_61 = arith.constant 0 : i32
    %180 = arith.cmpi slt, %173, %c0_i32_61 : i32
    %181 = vector.broadcast %180 : i1 to vector<32x128xi1>
    %182 = vector.broadcast %181 : vector<32x128xi1> to vector<32x128xi1>
    %183 = arith.xori %179, %182 : vector<32x128xi1>
    %184 = arith.andi %183, %177 : vector<32x128xi1>
    %185 = vector.broadcast %173 : i32 to vector<32x128xi32>
    %186 = arith.addi %175, %185 : vector<32x128xi32>
    %187 = arith.select %184, %186, %175 : vector<32x128xi1>, vector<32x128xi32>
    %c0_i32_62 = arith.constant 0 : i32
    %188 = vector.broadcast %c0_i32_62 : i32 to vector<32x128xi32>
    %189 = arith.cmpi eq, %187, %188 : vector<32x128xi32>
    %cst_63 = arith.constant 0.000000e+00 : f32
    %190 = vector.broadcast %cst_63 : f32 to vector<32x128xf32>
    %191 = arith.select %189, %190, %168 : vector<32x128xi1>, vector<32x128xf32>
    %c15_i32_64 = arith.constant 15 : i32
    %192 = vector.broadcast %c15_i32_64 : i32 to vector<32x128xi32>
    %193 = arith.cmpi eq, %187, %192 : vector<32x128xi32>
    %cst_65 = arith.constant 0.000000e+00 : f32
    %194 = vector.broadcast %cst_65 : f32 to vector<32x128xf32>
    %195 = arith.select %193, %194, %170 : vector<32x128xi1>, vector<32x128xf32>
    %196 = tpu.concatenate %191, %165, %195 in 1 : vector<32x128xf32>, vector<32x128xf32>, vector<32x128xf32> -> vector<32x384xf32>
    %c0_66 = arith.constant 0 : index
    %c0_67 = arith.constant 0 : index
    %197 = vector.load %arg3[%c0_66, %c0_67] : memref<384x128xf32, #tpu.memory_space<vmem>>, vector<384x128xf32>
    %cst_68 = arith.constant dense<0.000000e+00> : vector<32x128xf32>
    %198 = tpu.matmul %196, %197, %cst_68 {dimension_numbers = #tpu.dot_dimension_numbers<[1], [0], [0], [1], [0, 0, 1, 1], [], []>, precision = #tpu.contract_precision<fp32>} : vector<32x384xf32>, vector<384x128xf32>, vector<32x128xf32> -> vector<32x128xf32>
    %199 = arith.addf %198, %0 : vector<32x128xf32>
    %c0_69 = arith.constant 0 : index
    %c0_70 = arith.constant 0 : index
    %200 = vector.load %arg4[%c0_69, %c0_70] : memref<32x128xf32, #tpu.memory_space<vmem>>, vector<32x128xf32>
    tpu.vector_store %arg4[%c0_69, %c0_70], %199 {strides = array<i32>} : memref<32x128xf32, #tpu.memory_space<vmem>>, vector<32x128xf32>,
    return
  }
  func.func @transform_0(%arg0: i32) -> (i32, i32) {
    %c0_i32 = arith.constant 0 : i32
    %c0_i32_0 = arith.constant 0 : i32
    return %arg0, %c0_i32 : i32, i32
  }
  func.func @transform_1(%arg0: i32) -> (i32, i32) {
    %c0_i32 = arith.constant 0 : i32
    %c0_i32_0 = arith.constant 0 : i32
    %c0_i32_1 = arith.constant 0 : i32
    return %c0_i32, %c0_i32_0 : i32, i32
  }
  func.func @transform_2(%arg0: i32) -> (i32, i32) {
    %c0_i32 = arith.constant 0 : i32
    %c0_i32_0 = arith.constant 0 : i32
    %c0_i32_1 = arith.constant 0 : i32
    return %c0_i32, %c0_i32_0 : i32, i32
  }
  func.func @transform_3(%arg0: i32) -> (i32, i32) {
    %c0_i32 = arith.constant 0 : i32
    %c0_i32_0 = arith.constant 0 : i32
    return %arg0, %c0_i32 : i32, i32
  }
}

</mosaic_0001>

<llo_original>
// kernel: tpu_custom_call.1
$region0: #{tpu_custom_call.1}
  #allocation0 [shape = 'u32[]', space=smem, size = 0x4, offset = 0x4, fixed_abs, tag = 'smem constant byte address 0x4 - core index']
  #allocation1 [shape = 'u32[72,128]{1,0:T(1,128)}', space=vmem, size = 0x9000, scoped, tag = 'internal scratch']
  %s0 = inlined_call_operand.hbm [shape: f32[32,128], index: 0, kind: input, shape index: {}]
  %s1 = inlined_call_operand.hbm [shape: f32[384,128], index: 1, kind: input, shape index: {}]
  %s2 = inlined_call_operand.hbm [shape: f32[384,128], index: 2, kind: input, shape index: {}]
  %s3 = inlined_call_operand.hbm [shape: f32[32,128], index: 3, kind: output, shape index: {}]
  %s4 = sld [smem:[#allocation0]]
  $region34: #{tpu_custom_call.1} parent=0
    _
  %s6 = ssub.s32 1, %s4
  %s7 = scalar_select 0, %s6, %s4
  $region1: #{tpu_custom_call.1} parent=0
    #allocation2 [shape = 'u8[16384]{0}', space=vmem, size = 0x4000, scoped, tag = 'input window, operand 0, single buffered']
    #allocation3 [shape = 's32[1]{0}', space=sflag, size = 0x4, scoped, tag = 'scoped memory for tpu_custom_call.1']
    #allocation4 [shape = 's32[1]{0}', space=sflag, size = 0x4, scoped, tag = 'scoped memory for tpu_custom_call.1']
    #allocation5 [shape = 'u8[196608]{0}', space=vmem, size = 0x30000, scoped, tag = 'input window, operand 1, single buffered']
    #allocation6 [shape = 's32[1]{0}', space=sflag, size = 0x4, scoped, tag = 'scoped memory for tpu_custom_call.1']
    #allocation7 [shape = 'u8[196608]{0}', space=vmem, size = 0x30000, scoped, tag = 'input window, operand 2, single buffered']
    #allocation8 [shape = 'u8[16384]{0}', space=vmem, size = 0x4000, scoped, tag = 'output window, operand 0, single buffered']
    %8 = vsyncpa [#allocation3], 0
    %9 = vsyncpa [#allocation6], 0
    %10 = vsyncpa [#allocation4], 0
    // Predicated region
    $region2: #{tpu_custom_call.1} parent=1 // pred_check
      _
    $region3: #{tpu_custom_call.1} parent=1 // pred_check_branch
      %12 = sbr.rel (0) target = $region5
    $region4: #{tpu_custom_call.1} parent=1 // pred_region
      %14 = vsyncadd [#allocation3], 0
      %s15 = sshll.u32 %s0, 4
      %s16 = int_to_ptr.hbm [resolvable:$true] %s15
      %s17 = sshll.u32 [#allocation2], 4
      %s18 = int_to_ptr.vmem [resolvable:$true] %s17
      %23 = dma.hbm_to_vmem [thread:$0]  %s16, 512, %s18, [#allocation3], 128, 128, 8
    $region5: #{tpu_custom_call.1} parent=1 // pred_fallthru
      _
    // Predicated region
    $region6: #{tpu_custom_call.1} parent=1 // pred_check
      _
    $region7: #{tpu_custom_call.1} parent=1 // pred_check_branch
      %25 = sbr.rel (0) target = $region9
    $region8: #{tpu_custom_call.1} parent=1 // pred_region
      %27 = vsyncadd [#allocation6], 0
      %s28 = sshll.u32 %s1, 4
      %s29 = int_to_ptr.hbm [resolvable:$true] %s28
      %s30 = sshll.u32 [#allocation5], 4
      %s31 = int_to_ptr.vmem [resolvable:$true] %s30
      %36 = dma.hbm_to_vmem [thread:$0]  %s29, 6144, %s31, [#allocation6], 128, 128, 8
    $region9: #{tpu_custom_call.1} parent=1 // pred_fallthru
      _
    // Predicated region
    $region10: #{tpu_custom_call.1} parent=1 // pred_check
      _
    $region11: #{tpu_custom_call.1} parent=1 // pred_check_branch
      %38 = sbr.rel (0) target = $region13
    $region12: #{tpu_custom_call.1} parent=1 // pred_region
      %40 = vsyncadd [#allocation6], 0
      %s41 = sshll.u32 %s2, 4
      %s42 = int_to_ptr.hbm [resolvable:$true] %s41
      %s43 = sshll.u32 [#allocation7], 4
      %s44 = int_to_ptr.vmem [resolvable:$true] %s43
      %49 = dma.hbm_to_vmem [thread:$0]  %s42, 6144, %s44, [#allocation6], 128, 128, 8
    $region13: #{tpu_custom_call.1} parent=1 // pred_fallthru
      _
    // Predicated region
    $region14: #{tpu_custom_call.1} parent=1 // pred_check
      _
    $region15: #{tpu_custom_call.1} parent=1 // pred_check_branch
      %51 = sbr.rel (0) target = $region17
    $region16: #{tpu_custom_call.1} parent=1 // pred_region
      %53 = dma.done [#allocation3], 512
    $region17: #{tpu_custom_call.1} parent=1 // pred_fallthru
      _
    // Predicated region
    $region18: #{tpu_custom_call.1} parent=1 // pred_check
      _
    $region19: #{tpu_custom_call.1} parent=1 // pred_check_branch
      %55 = sbr.rel (0) target = $region21
    $region20: #{tpu_custom_call.1} parent=1 // pred_region
      %57 = dma.done [#allocation6], 6144
    $region21: #{tpu_custom_call.1} parent=1 // pred_fallthru
      _
    // Predicated region
    $region22: #{tpu_custom_call.1} parent=1 // pred_check
      _
    $region23: #{tpu_custom_call.1} parent=1 // pred_check_branch
      %59 = sbr.rel (0) target = $region25
    $region24: #{tpu_custom_call.1} parent=1 // pred_region
      %61 = dma.done [#allocation6], 6144
    $region25: #{tpu_custom_call.1} parent=1 // pred_fallthru
      _
    %v62 = vld [vmem:[#allocation2] sm:$0xff]
    %v63 = vld [vmem:[#allocation2 + $0x8] sm:$0xff]
    %v64 = vld [vmem:[#allocation2 + $0x10] sm:$0xff]
    %v65 = vld [vmem:[#allocation2 + $0x18] sm:$0xff]
    %v66 = vadd.f32 %v62, %v63
    %v67 = vrot.slane %v66, 4
    %v68 = vadd.f32 %v66, %v67
    %v69 = vrot.slane %v68, 2
    %v70 = vadd.f32 %v68, %v69
    %v71 = vrot.slane %v70, 1
    %v72 = vadd.f32 %v70, %v71
    %73 = vrot.lane.b32.xlu0 %v72, 8
    %v74 = vpop.permute.xlu0 %73
    %v75 = vadd.f32 %v72, %v74
    %76 = vrot.lane.b32.xlu0 %v75, 16
    %v77 = vpop.permute.xlu0 %76
    %v78 = vadd.f32 %v75, %v77
    %79 = vrot.lane.b32.xlu0 %v78, 32
    %v80 = vpop.permute.xlu0 %79
    %v81 = vadd.f32 %v78, %v80
    %82 = vrot.lane.b32.xlu0 %v81, 64
    %v83 = vpop.permute.xlu0 %82
    %v84 = vadd.f32 %v81, %v83
    %v85 = vperm.slane %v84, 0
    %v86 = vadd.f32 %v64, %v65
    %v87 = vrot.slane %v86, 4
    %v88 = vadd.f32 %v86, %v87
    %v89 = vrot.slane %v88, 2
    %v90 = vadd.f32 %v88, %v89
    %v91 = vrot.slane %v90, 1
    %v92 = vadd.f32 %v90, %v91
    %93 = vrot.lane.b32.xlu0 %v92, 8
    %v94 = vpop.permute.xlu0 %93
    %v95 = vadd.f32 %v92, %v94
    %96 = vrot.lane.b32.xlu0 %v95, 16
    %v97 = vpop.permute.xlu0 %96
    %v98 = vadd.f32 %v95, %v97
    %99 = vrot.lane.b32.xlu0 %v98, 32
    %v100 = vpop.permute.xlu0 %99
    %v101 = vadd.f32 %v98, %v100
    %102 = vrot.lane.b32.xlu0 %v101, 64
    %v103 = vpop.permute.xlu0 %102
    %v104 = vadd.f32 %v101, %v103
    %v105 = vperm.slane %v104, 0
    %v106 = vmul.f32 %v85, 0.00390625
    %v107 = vmul.f32 %v105, 0.00390625
    %v108 = vsub.f32 %v62, %v106
    %v109 = vsub.f32 %v63, %v106
    %v110 = vsub.f32 %v64, %v107
    %v111 = vsub.f32 %v65, %v107
    %v112 = vmul.f32 %v108, %v108
    %v113 = vmul.f32 %v109, %v109
    %v114 = vmul.f32 %v110, %v110
    %v115 = vmul.f32 %v111, %v111
    %v116 = vadd.f32 %v112, %v113
    %v117 = vrot.slane %v116, 4
    %v118 = vadd.f32 %v116, %v117
    %v119 = vrot.slane %v118, 2
    %v120 = vadd.f32 %v118, %v119
    %v121 = vrot.slane %v120, 1
    %v122 = vadd.f32 %v120, %v121
    %123 = vrot.lane.b32.xlu0 %v122, 8
    %v124 = vpop.permute.xlu0 %123
    %v125 = vadd.f32 %v122, %v124
    %126 = vrot.lane.b32.xlu0 %v125, 16
    %v127 = vpop.permute.xlu0 %126
    %v128 = vadd.f32 %v125, %v127
    %129 = vrot.lane.b32.xlu0 %v128, 32
    %v130 = vpop.permute.xlu0 %129
    %v131 = vadd.f32 %v128, %v130
    %132 = vrot.lane.b32.xlu0 %v131, 64
    %v133 = vpop.permute.xlu0 %132
    %v134 = vadd.f32 %v131, %v133
    %v135 = vperm.slane %v134, 0
    %v136 = vadd.f32 %v114, %v115
    %v137 = vrot.slane %v136, 4
    %v138 = vadd.f32 %v136, %v137
    %v139 = vrot.slane %v138, 2
    %v140 = vadd.f32 %v138, %v139
    %v141 = vrot.slane %v140, 1
    %v142 = vadd.f32 %v140, %v141
    %143 = vrot.lane.b32.xlu0 %v142, 8
    %v144 = vpop.permute.xlu0 %143
    %v145 = vadd.f32 %v142, %v144
    %146 = vrot.lane.b32.xlu0 %v145, 16
    %v147 = vpop.permute.xlu0 %146
    %v148 = vadd.f32 %v145, %v147
    %149 = vrot.lane.b32.xlu0 %v148, 32
    %v150 = vpop.permute.xlu0 %149
    %v151 = vadd.f32 %v148, %v150
    %152 = vrot.lane.b32.xlu0 %v151, 64
    %v153 = vpop.permute.xlu0 %152
    %v154 = vadd.f32 %v151, %v153
    %v155 = vperm.slane %v154, 0
    %v156 = vmul.f32 %v135, 0.00390625
    %v157 = vmul.f32 %v155, 0.00390625
    %v158 = vadd.f32 %v156, 1e-05
    %v159 = vadd.f32 %v157, 1e-05
    %v160 = vrsqrt.pop %v158
    %v161 = vmul.f32 %v160, %v158
    %v162 = vmul.f32 %v161, %v160
    %v163 = vmul.f32 0.5, %v162
    %v164 = vsub.f32 1.5, %v163
    %v165 = vmul.f32 %v160, %v164
    %vm166 = vweird.f32 %v158
    %vm167 = vweird.f32 %v160
    %vm168 = vmor %vm166, %vm167
    %v169 = vsel %vm168, %v160, %v165
    %v170 = vrsqrt.pop %v159
    %v171 = vmul.f32 %v170, %v159
    %v172 = vmul.f32 %v171, %v170
    %v173 = vmul.f32 0.5, %v172
    %v174 = vsub.f32 1.5, %v173
    %v175 = vmul.f32 %v170, %v174
    %vm176 = vweird.f32 %v159
    %vm177 = vweird.f32 %v170
    %vm178 = vmor %vm176, %vm177
    %v179 = vsel %vm178, %v170, %v175
    %v180 = vmul.f32 %v108, %v169
    %v181 = vmul.f32 %v109, %v169
    %v182 = vmul.f32 %v110, %v179
    %v183 = vmul.f32 %v111, %v179
    %v184 = vmax.f32 %v180, 0.0
    %v185 = vmax.f32 %v181, 0.0
    %v186 = vmax.f32 %v182, 0.0
    %v187 = vmax.f32 %v183, 0.0
    %vm192 = vcmask 1040384
    %v193 = vrot.slane %v184, 7
    %v194 = vrot.slane %v185, 7
    %v195 = vsel %vm192, %v193, %v194
    %v196 = vrot.slane %v186, 7
    %v197 = vsel %vm192, %v194, %v196
    %v198 = vrot.slane %v187, 7
    %v199 = vsel %vm192, %v196, %v198
    %v204 = vsel %vm192, 0.0, %v193
    %vm205 = vcmask 1046528
    %v206 = vrot.slane %v184, 1
    %v207 = vrot.slane %v185, 1
    %v208 = vsel %vm205, %v206, %v207
    %v209 = vrot.slane %v186, 1
    %v210 = vsel %vm205, %v207, %v209
    %v211 = vrot.slane %v187, 1
    %v212 = vsel %vm205, %v209, %v211
    %v217 = vsel %vm205, %v211, 0.0
    %v218 = vlaneseq
    %v219 = vshrl.u32 %v218, 7
    %v220 = vadd.s32 %v219, 8
    %v221 = vadd.s32 %v219, 16
    %v222 = vadd.s32 %v219, 24
    %vm223 = vcmp.lt.s32.totalorder %v219, 0
    %v224 = vsub.s32 0, %v219
    %v225 = vsel %vm223, %v224, %v219
    %v226 = vshrl.u32 %v225, 4
    %v227 = vand.u32 %v225, 15
    %v228 = vsub.s32 0, %v227
    %v229 = vsel %vm223, %v228, %v227
    %vm230 = vcmp.lt.s32.totalorder %v220, 0
    %v231 = vsub.s32 0, %v220
    %v232 = vsel %vm230, %v231, %v220
    %v233 = vshrl.u32 %v232, 4
    %v234 = vand.u32 %v232, 15
    %v235 = vsub.s32 0, %v234
    %v236 = vsel %vm230, %v235, %v234
    %vm237 = vcmp.lt.s32.totalorder %v221, 0
    %v238 = vsub.s32 0, %v221
    %v239 = vsel %vm237, %v238, %v221
    %v240 = vshrl.u32 %v239, 4
    %v241 = vand.u32 %v239, 15
    %v242 = vsub.s32 0, %v241
    %v243 = vsel %vm237, %v242, %v241
    %vm244 = vcmp.lt.s32.totalorder %v222, 0
    %v245 = vsub.s32 0, %v222
    %v246 = vsel %vm244, %v245, %v222
    %v247 = vshrl.u32 %v246, 4
    %v248 = vand.u32 %v246, 15
    %v249 = vsub.s32 0, %v248
    %v250 = vsel %vm244, %v249, %v248
    %vm251 = vcmp.ne.s32.totalorder %v229, 0
    %vm252 = vcmp.ne.s32.totalorder %v236, 0
    %vm253 = vcmp.ne.s32.totalorder %v243, 0
    %vm254 = vcmp.ne.s32.totalorder %v250, 0
    %vm255 = vcmp.lt.s32.totalorder %v229, 0
    %vm256 = vcmp.lt.s32.totalorder %v236, 0
    %vm257 = vcmp.lt.s32.totalorder %v243, 0
    %vm258 = vcmp.lt.s32.totalorder %v250, 0
    %vm259 = vmand %vm255, %vm251
    %vm260 = vmand %vm256, %vm252
    %vm261 = vmand %vm257, %vm253
    %vm262 = vmand %vm258, %vm254
    %v263 = vadd.s32 %v229, 16
    %v264 = vadd.s32 %v236, 16
    %v265 = vadd.s32 %v243, 16
    %v266 = vadd.s32 %v250, 16
    %v267 = vsel %vm259, %v263, %v229
    %v268 = vsel %vm260, %v264, %v236
    %v269 = vsel %vm261, %v265, %v243
    %v270 = vsel %vm262, %v266, %v250
    %vm271 = vcmp.eq.s32.totalorder %v267, 0
    %vm272 = vcmp.eq.s32.totalorder %v268, 0
    %vm273 = vcmp.eq.s32.totalorder %v269, 0
    %vm274 = vcmp.eq.s32.totalorder %v270, 0
    %v275 = vsel %vm271, 0.0, %v204
    %v276 = vsel %vm272, 0.0, %v195
    %v277 = vsel %vm273, 0.0, %v197
    %v278 = vsel %vm274, 0.0, %v199
    %vm279 = vcmp.eq.s32.totalorder %v267, 15
    %vm280 = vcmp.eq.s32.totalorder %v268, 15
    %vm281 = vcmp.eq.s32.totalorder %v269, 15
    %vm282 = vcmp.eq.s32.totalorder %v270, 15
    %v283 = vsel %vm279, 0.0, %v208
    %v284 = vsel %vm280, 0.0, %v210
    %v285 = vsel %vm281, 0.0, %v212
    %v286 = vsel %vm282, 0.0, %v217
    %v287 = vld [vmem:[#allocation5] sm:$0xff]
    %v288 = vld [vmem:[#allocation5 + $0x8] sm:$0xff]
    %v289 = vld [vmem:[#allocation5 + $0x10] sm:$0xff]
    %v290 = vld [vmem:[#allocation5 + $0x18] sm:$0xff]
    %v291 = vld [vmem:[#allocation5 + $0x20] sm:$0xff]
    %v292 = vld [vmem:[#allocation5 + $0x28] sm:$0xff]
    %v293 = vld [vmem:[#allocation5 + $0x30] sm:$0xff]
    %v294 = vld [vmem:[#allocation5 + $0x38] sm:$0xff]
    %v295 = vld [vmem:[#allocation5 + $0x40] sm:$0xff]
    %v296 = vld [vmem:[#allocation5 + $0x48] sm:$0xff]
    %v297 = vld [vmem:[#allocation5 + $0x50] sm:$0xff]
    %v298 = vld [vmem:[#allocation5 + $0x58] sm:$0xff]
    %v299 = vld [vmem:[#allocation5 + $0x60] sm:$0xff]
    %v300 = vld [vmem:[#allocation5 + $0x68] sm:$0xff]
    %v301 = vld [vmem:[#allocation5 + $0x70] sm:$0xff]
    %v302 = vld [vmem:[#allocation5 + $0x78] sm:$0xff]
    %v303 = vld [vmem:[#allocation5 + $0x80] sm:$0xff]
    %v304 = vld [vmem:[#allocation5 + $0x88] sm:$0xff]
    %v305 = vld [vmem:[#allocation5 + $0x90] sm:$0xff]
    %v306 = vld [vmem:[#allocation5 + $0x98] sm:$0xff]
    %v307 = vld [vmem:[#allocation5 + $0xa0] sm:$0xff]
    %v308 = vld [vmem:[#allocation5 + $0xa8] sm:$0xff]
    %v309 = vld [vmem:[#allocation5 + $0xb0] sm:$0xff]
    %v310 = vld [vmem:[#allocation5 + $0xb8] sm:$0xff]
    %v311 = vld [vmem:[#allocation5 + $0xc0] sm:$0xff]
    %v312 = vld [vmem:[#allocation5 + $0xc8] sm:$0xff]
    %v313 = vld [vmem:[#allocation5 + $0xd0] sm:$0xff]
    %v314 = vld [vmem:[#allocation5 + $0xd8] sm:$0xff]
    %v315 = vld [vmem:[#allocation5 + $0xe0] sm:$0xff]
    %v316 = vld [vmem:[#allocation5 + $0xe8] sm:$0xff]
    %v317 = vld [vmem:[#allocation5 + $0xf0] sm:$0xff]
    %v318 = vld [vmem:[#allocation5 + $0xf8] sm:$0xff]
    %v319 = vld [vmem:[#allocation5 + $0x100] sm:$0xff]
    %v320 = vld [vmem:[#allocation5 + $0x108] sm:$0xff]
    %v321 = vld [vmem:[#allocation5 + $0x110] sm:$0xff]
    %v322 = vld [vmem:[#allocation5 + $0x118] sm:$0xff]
    %v323 = vld [vmem:[#allocation5 + $0x120] sm:$0xff]
    %v324 = vld [vmem:[#allocation5 + $0x128] sm:$0xff]
    %v325 = vld [vmem:[#allocation5 + $0x130] sm:$0xff]
    %v326 = vld [vmem:[#allocation5 + $0x138] sm:$0xff]
    %v327 = vld [vmem:[#allocation5 + $0x140] sm:$0xff]
    %v328 = vld [vmem:[#allocation5 + $0x148] sm:$0xff]
    %v329 = vld [vmem:[#allocation5 + $0x150] sm:$0xff]
    %v330 = vld [vmem:[#allocation5 + $0x158] sm:$0xff]
    %v331 = vld [vmem:[#allocation5 + $0x160] sm:$0xff]
    %v332 = vld [vmem:[#allocation5 + $0x168] sm:$0xff]
    %v333 = vld [vmem:[#allocation5 + $0x170] sm:$0xff]
    %v334 = vld [vmem:[#allocation5 + $0x178] sm:$0xff]
    %v335 = vand.u32 %v302, 4294901760
    %336 = vmatpush.msra.mxu0 %v335
    %v337 = vand.u32 %v301, 4294901760
    %338 = vmatpush.msra.mxu0 %v337
    %v339 = vand.u32 %v300, 4294901760
    %340 = vmatpush.msra.mxu0 %v339
    %v341 = vand.u32 %v299, 4294901760
    %342 = vmatpush.msra.mxu0 %v341
    %v343 = vand.u32 %v298, 4294901760
    %344 = vmatpush.msra.mxu0 %v343
    %v345 = vand.u32 %v297, 4294901760
    %346 = vmatpush.msra.mxu0 %v345
    %v347 = vand.u32 %v296, 4294901760
    %348 = vmatpush.msra.mxu0 %v347
    %v349 = vand.u32 %v295, 4294901760
    %350 = vmatpush.msra.mxu0 %v349
    %v351 = vand.u32 %v294, 4294901760
    %352 = vmatpush.msra.mxu0 %v351
    %v353 = vand.u32 %v293, 4294901760
    %354 = vmatpush.msra.mxu0 %v353
    %v355 = vand.u32 %v292, 4294901760
    %356 = vmatpush.msra.mxu0 %v355
    %v357 = vand.u32 %v291, 4294901760
    %358 = vmatpush.msra.mxu0 %v357
    %v359 = vand.u32 %v290, 4294901760
    %360 = vmatpush.msra.mxu0 %v359
    %v361 = vand.u32 %v289, 4294901760
    %362 = vmatpush.msra.mxu0 %v361
    %v363 = vand.u32 %v288, 4294901760
    %364 = vmatpush.msra.mxu0 %v363
    %v365 = vand.u32 %v287, 4294901760
    %366 = vmatpush.msra.mxu0 %v365
    %v367 = vand.u32 %v275, 4294901760
    %v368 = vsub.f32 %v275, %v367
    %v369 = vand.u32 %v368, 4294901760
    %v370 = vsub.f32 %v368, %v369
    %v371 = vand.u32 %v370, 4294901760
    %372 = vmatmul.f32.gmra.mxu0 %v371
    %v373 = vpop.f32.mrf.mxu0
    %v374 = vadd.f32 0.0, %v373
    %v375 = vand.u32 %v276, 4294901760
    %v376 = vsub.f32 %v276, %v375
    %v377 = vand.u32 %v376, 4294901760
    %v378 = vsub.f32 %v376, %v377
    %v379 = vand.u32 %v378, 4294901760
    %380 = vmatmul.f32.gmra.mxu0 %v379
    %v381 = vpop.f32.mrf.mxu0
    %v382 = vadd.f32 0.0, %v381
    %v383 = vand.u32 %v277, 4294901760
    %v384 = vsub.f32 %v277, %v383
    %v385 = vand.u32 %v384, 4294901760
    %v386 = vsub.f32 %v384, %v385
    %v387 = vand.u32 %v386, 4294901760
    %388 = vmatmul.f32.gmra.mxu0 %v387
    %v389 = vpop.f32.mrf.mxu0
    %v390 = vadd.f32 0.0, %v389
    %v391 = vand.u32 %v278, 4294901760
    %v392 = vsub.f32 %v278, %v391
    %v393 = vand.u32 %v392, 4294901760
    %v394 = vsub.f32 %v392, %v393
    %v395 = vand.u32 %v394, 4294901760
    %396 = vmatmul.f32.gmra.mxu0 %v395
    %v397 = vpop.f32.mrf.mxu0
    %v398 = vadd.f32 0.0, %v397
    %399 = vdwg.mxu0
    %v400 = vand.u32 %v302, 4294901760
    %v401 = vsub.f32 %v302, %v400
    %v402 = vand.u32 %v401, 4294901760
    %v403 = vsub.f32 %v401, %v402
    %v404 = vand.u32 %v403, 4294901760
    %405 = vmatpush.msra.mxu0 %v404
    %v406 = vand.u32 %v301, 4294901760
    %v407 = vsub.f32 %v301, %v406
    %v408 = vand.u32 %v407, 4294901760
    %v409 = vsub.f32 %v407, %v408
    %v410 = vand.u32 %v409, 4294901760
    %411 = vmatpush.msra.mxu0 %v410
    %v412 = vand.u32 %v300, 4294901760
    %v413 = vsub.f32 %v300, %v412
    %v414 = vand.u32 %v413, 4294901760
    %v415 = vsub.f32 %v413, %v414
    %v416 = vand.u32 %v415, 4294901760
    %417 = vmatpush.msra.mxu0 %v416
    %v418 = vand.u32 %v299, 4294901760
    %v419 = vsub.f32 %v299, %v418
    %v420 = vand.u32 %v419, 4294901760
    %v421 = vsub.f32 %v419, %v420
    %v422 = vand.u32 %v421, 4294901760
    %423 = vmatpush.msra.mxu0 %v422
    %v424 = vand.u32 %v298, 4294901760
    %v425 = vsub.f32 %v298, %v424
    %v426 = vand.u32 %v425, 4294901760
    %v427 = vsub.f32 %v425, %v426
    %v428 = vand.u32 %v427, 4294901760
    %429 = vmatpush.msra.mxu0 %v428
    %v430 = vand.u32 %v297, 4294901760
    %v431 = vsub.f32 %v297, %v430
    %v432 = vand.u32 %v431, 4294901760
    %v433 = vsub.f32 %v431, %v432
    %v434 = vand.u32 %v433, 4294901760
    %435 = vmatpush.msra.mxu0 %v434
    %v436 = vand.u32 %v296, 4294901760
    %v437 = vsub.f32 %v296, %v436
    %v438 = vand.u32 %v437, 4294901760
    %v439 = vsub.f32 %v437, %v438
    %v440 = vand.u32 %v439, 4294901760
    %441 = vmatpush.msra.mxu0 %v440
    %v442 = vand.u32 %v295, 4294901760
    %v443 = vsub.f32 %v295, %v442
    %v444 = vand.u32 %v443, 4294901760
    %v445 = vsub.f32 %v443, %v444
    %v446 = vand.u32 %v445, 4294901760
    %447 = vmatpush.msra.mxu0 %v446
    %v448 = vand.u32 %v294, 4294901760
    %v449 = vsub.f32 %v294, %v448
    %v450 = vand.u32 %v449, 4294901760
    %v451 = vsub.f32 %v449, %v450
    %v452 = vand.u32 %v451, 4294901760
    %453 = vmatpush.msra.mxu0 %v452
    %v454 = vand.u32 %v293, 4294901760
    %v455 = vsub.f32 %v293, %v454
    %v456 = vand.u32 %v455, 4294901760
    %v457 = vsub.f32 %v455, %v456
    %v458 = vand.u32 %v457, 4294901760
    %459 = vmatpush.msra.mxu0 %v458
    %v460 = vand.u32 %v292, 4294901760
    %v461 = vsub.f32 %v292, %v460
    %v462 = vand.u32 %v461, 4294901760
    %v463 = vsub.f32 %v461, %v462
    %v464 = vand.u32 %v463, 4294901760
    %465 = vmatpush.msra.mxu0 %v464
    %v466 = vand.u32 %v291, 4294901760
    %v467 = vsub.f32 %v291, %v466
    %v468 = vand.u32 %v467, 4294901760
    %v469 = vsub.f32 %v467, %v468
    %v470 = vand.u32 %v469, 4294901760
    %471 = vmatpush.msra.mxu0 %v470
    %v472 = vand.u32 %v290, 4294901760
    %v473 = vsub.f32 %v290, %v472
    %v474 = vand.u32 %v473, 4294901760
    %v475 = vsub.f32 %v473, %v474
    %v476 = vand.u32 %v475, 4294901760
    %477 = vmatpush.msra.mxu0 %v476
    %v478 = vand.u32 %v289, 4294901760
    %v479 = vsub.f32 %v289, %v478
    %v480 = vand.u32 %v479, 4294901760
    %v481 = vsub.f32 %v479, %v480
    %v482 = vand.u32 %v481, 4294901760
    %483 = vmatpush.msra.mxu0 %v482
    %v484 = vand.u32 %v288, 4294901760
    %v485 = vsub.f32 %v288, %v484
    %v486 = vand.u32 %v485, 4294901760
    %v487 = vsub.f32 %v485, %v486
    %v488 = vand.u32 %v487, 4294901760
    %489 = vmatpush.msra.mxu0 %v488
    %v490 = vand.u32 %v287, 4294901760
    %v491 = vsub.f32 %v287, %v490
    %v492 = vand.u32 %v491, 4294901760
    %v493 = vsub.f32 %v491, %v492
    %v494 = vand.u32 %v493, 4294901760
    %495 = vmatpush.msra.mxu0 %v494
    %v496 = vand.u32 %v275, 4294901760
    %497 = vmatmul.f32.gmra.mxu0 %v496
    %v498 = vpop.f32.mrf.mxu0
    %v499 = vadd.f32 %v374, %v498
    %v500 = vand.u32 %v276, 4294901760
    %501 = vmatmul.f32.gmra.mxu0 %v500
    %v502 = vpop.f32.mrf.mxu0
    %v503 = vadd.f32 %v382, %v502
    %v504 = vand.u32 %v277, 4294901760
    %505 = vmatmul.f32.gmra.mxu0 %v504
    %v506 = vpop.f32.mrf.mxu0
    %v507 = vadd.f32 %v390, %v506
    %v508 = vand.u32 %v278, 4294901760
    %509 = vmatmul.f32.gmra.mxu0 %v508
    %v510 = vpop.f32.mrf.mxu0
    %v511 = vadd.f32 %v398, %v510
    %512 = vdwg.mxu0
    %v513 = vand.u32 %v302, 4294901760
    %v514 = vsub.f32 %v302, %v513
    %515 = vmatpush.msra.mxu0 %v514
    %v516 = vand.u32 %v301, 4294901760
    %v517 = vsub.f32 %v301, %v516
    %518 = vmatpush.msra.mxu0 %v517
    %v519 = vand.u32 %v300, 4294901760
    %v520 = vsub.f32 %v300, %v519
    %521 = vmatpush.msra.mxu0 %v520
    %v522 = vand.u32 %v299, 4294901760
    %v523 = vsub.f32 %v299, %v522
    %524 = vmatpush.msra.mxu0 %v523
    %v525 = vand.u32 %v298, 4294901760
    %v526 = vsub.f32 %v298, %v525
    %527 = vmatpush.msra.mxu0 %v526
    %v528 = vand.u32 %v297, 4294901760
    %v529 = vsub.f32 %v297, %v528
    %530 = vmatpush.msra.mxu0 %v529
    %v531 = vand.u32 %v296, 4294901760
    %v532 = vsub.f32 %v296, %v531
    %533 = vmatpush.msra.mxu0 %v532
    %v534 = vand.u32 %v295, 4294901760
    %v535 = vsub.f32 %v295, %v534
    %536 = vmatpush.msra.mxu0 %v535
    %v537 = vand.u32 %v294, 4294901760
    %v538 = vsub.f32 %v294, %v537
    %539 = vmatpush.msra.mxu0 %v538
    %v540 = vand.u32 %v293, 4294901760
    %v541 = vsub.f32 %v293, %v540
    %542 = vmatpush.msra.mxu0 %v541
    %v543 = vand.u32 %v292, 4294901760
    %v544 = vsub.f32 %v292, %v543
    %545 = vmatpush.msra.mxu0 %v544
    %v546 = vand.u32 %v291, 4294901760
    %v547 = vsub.f32 %v291, %v546
    %548 = vmatpush.msra.mxu0 %v547
    %v549 = vand.u32 %v290, 4294901760
    %v550 = vsub.f32 %v290, %v549
    %551 = vmatpush.msra.mxu0 %v550
    %v552 = vand.u32 %v289, 4294901760
    %v553 = vsub.f32 %v289, %v552
    %554 = vmatpush.msra.mxu0 %v553
    %v555 = vand.u32 %v288, 4294901760
    %v556 = vsub.f32 %v288, %v555
    %557 = vmatpush.msra.mxu0 %v556
    %v558 = vand.u32 %v287, 4294901760
    %v559 = vsub.f32 %v287, %v558
    %560 = vmatpush.msra.mxu0 %v559
    %v561 = vand.u32 %v275, 4294901760
    %v562 = vsub.f32 %v275, %v561
    %563 = vmatmul.f32.gmra.mxu0 %v562
    %v564 = vpop.f32.mrf.mxu0
    %v565 = vadd.f32 %v499, %v564
    %v566 = vand.u32 %v276, 4294901760
    %v567 = vsub.f32 %v276, %v566
    %568 = vmatmul.f32.gmra.mxu0 %v567
    %v569 = vpop.f32.mrf.mxu0
    %v570 = vadd.f32 %v503, %v569
    %v571 = vand.u32 %v277, 4294901760
    %v572 = vsub.f32 %v277, %v571
    %573 = vmatmul.f32.gmra.mxu0 %v572
    %v574 = vpop.f32.mrf.mxu0
    %v575 = vadd.f32 %v507, %v574
    %v576 = vand.u32 %v278, 4294901760
    %v577 = vsub.f32 %v278, %v576
    %578 = vmatmul.f32.gmra.mxu0 %v577
    %v579 = vpop.f32.mrf.mxu0
    %v580 = vadd.f32 %v511, %v579
    %581 = vdwg.mxu0
    %v582 = vand.u32 %v302, 4294901760
    %583 = vmatpush.msra.mxu0 %v582
    %v584 = vand.u32 %v301, 4294901760
    %585 = vmatpush.msra.mxu0 %v584
    %v586 = vand.u32 %v300, 4294901760
    %587 = vmatpush.msra.mxu0 %v586
    %v588 = vand.u32 %v299, 4294901760
    %589 = vmatpush.msra.mxu0 %v588
    %v590 = vand.u32 %v298, 4294901760
    %591 = vmatpush.msra.mxu0 %v590
    %v592 = vand.u32 %v297, 4294901760
    %593 = vmatpush.msra.mxu0 %v592
    %v594 = vand.u32 %v296, 4294901760
    %595 = vmatpush.msra.mxu0 %v594
    %v596 = vand.u32 %v295, 4294901760
    %597 = vmatpush.msra.mxu0 %v596
    %v598 = vand.u32 %v294, 4294901760
    %599 = vmatpush.msra.mxu0 %v598
    %v600 = vand.u32 %v293, 4294901760
    %601 = vmatpush.msra.mxu0 %v600
    %v602 = vand.u32 %v292, 4294901760
    %603 = vmatpush.msra.mxu0 %v602
    %v604 = vand.u32 %v291, 4294901760
    %605 = vmatpush.msra.mxu0 %v604
    %v606 = vand.u32 %v290, 4294901760
    %607 = vmatpush.msra.mxu0 %v606
    %v608 = vand.u32 %v289, 4294901760
    %609 = vmatpush.msra.mxu0 %v608
    %v610 = vand.u32 %v288, 4294901760
    %611 = vmatpush.msra.mxu0 %v610
    %v612 = vand.u32 %v287, 4294901760
    %613 = vmatpush.msra.mxu0 %v612
    %v614 = vand.u32 %v275, 4294901760
    %v615 = vsub.f32 %v275, %v614
    %v616 = vand.u32 %v615, 4294901760
    %617 = vmatmul.f32.gmra.mxu0 %v616
    %v618 = vpop.f32.mrf.mxu0
    %v619 = vadd.f32 %v565, %v618
    %v620 = vand.u32 %v276, 4294901760
    %v621 = vsub.f32 %v276, %v620
    %v622 = vand.u32 %v621, 4294901760
    %623 = vmatmul.f32.gmra.mxu0 %v622
    %v624 = vpop.f32.mrf.mxu0
    %v625 = vadd.f32 %v570, %v624
    %v626 = vand.u32 %v277, 4294901760
    %v627 = vsub.f32 %v277, %v626
    %v628 = vand.u32 %v627, 4294901760
    %629 = vmatmul.f32.gmra.mxu0 %v628
    %v630 = vpop.f32.mrf.mxu0
    %v631 = vadd.f32 %v575, %v630
    %v632 = vand.u32 %v278, 4294901760
    %v633 = vsub.f32 %v278, %v632
    %v634 = vand.u32 %v633, 4294901760
    %635 = vmatmul.f32.gmra.mxu0 %v634
    %v636 = vpop.f32.mrf.mxu0
    %v637 = vadd.f32 %v580, %v636
    %638 = vdwg.mxu0
    %v639 = vand.u32 %v302, 4294901760
    %v640 = vsub.f32 %v302, %v639
    %v641 = vand.u32 %v640, 4294901760
    %642 = vmatpush.msra.mxu0 %v641
    %v643 = vand.u32 %v301, 4294901760
    %v644 = vsub.f32 %v301, %v643
    %v645 = vand.u32 %v644, 4294901760
    %646 = vmatpush.msra.mxu0 %v645
    %v647 = vand.u32 %v300, 4294901760
    %v648 = vsub.f32 %v300, %v647
    %v649 = vand.u32 %v648, 4294901760
    %650 = vmatpush.msra.mxu0 %v649
    %v651 = vand.u32 %v299, 4294901760
    %v652 = vsub.f32 %v299, %v651
    %v653 = vand.u32 %v652, 4294901760
    %654 = vmatpush.msra.mxu0 %v653
    %v655 = vand.u32 %v298, 4294901760
    %v656 = vsub.f32 %v298, %v655
    %v657 = vand.u32 %v656, 4294901760
    %658 = vmatpush.msra.mxu0 %v657
    %v659 = vand.u32 %v297, 4294901760
    %v660 = vsub.f32 %v297, %v659
    %v661 = vand.u32 %v660, 4294901760
    %662 = vmatpush.msra.mxu0 %v661
    %v663 = vand.u32 %v296, 4294901760
    %v664 = vsub.f32 %v296, %v663
    %v665 = vand.u32 %v664, 4294901760
    %666 = vmatpush.msra.mxu0 %v665
    %v667 = vand.u32 %v295, 4294901760
    %v668 = vsub.f32 %v295, %v667
    %v669 = vand.u32 %v668, 4294901760
    %670 = vmatpush.msra.mxu0 %v669
    %v671 = vand.u32 %v294, 4294901760
    %v672 = vsub.f32 %v294, %v671
    %v673 = vand.u32 %v672, 4294901760
    %674 = vmatpush.msra.mxu0 %v673
    %v675 = vand.u32 %v293, 4294901760
    %v676 = vsub.f32 %v293, %v675
    %v677 = vand.u32 %v676, 4294901760
    %678 = vmatpush.msra.mxu0 %v677
    %v679 = vand.u32 %v292, 4294901760
    %v680 = vsub.f32 %v292, %v679
    %v681 = vand.u32 %v680, 4294901760
    %682 = vmatpush.msra.mxu0 %v681
    %v683 = vand.u32 %v291, 4294901760
    %v684 = vsub.f32 %v291, %v683
    %v685 = vand.u32 %v684, 4294901760
    %686 = vmatpush.msra.mxu0 %v685
    %v687 = vand.u32 %v290, 4294901760
    %v688 = vsub.f32 %v290, %v687
    %v689 = vand.u32 %v688, 4294901760
    %690 = vmatpush.msra.mxu0 %v689
    %v691 = vand.u32 %v289, 4294901760
    %v692 = vsub.f32 %v289, %v691
    %v693 = vand.u32 %v692, 4294901760
    %694 = vmatpush.msra.mxu0 %v693
    %v695 = vand.u32 %v288, 4294901760
    %v696 = vsub.f32 %v288, %v695
    %v697 = vand.u32 %v696, 4294901760
    %698 = vmatpush.msra.mxu0 %v697
    %v699 = vand.u32 %v287, 4294901760
    %v700 = vsub.f32 %v287, %v699
    %v701 = vand.u32 %v700, 4294901760
    %702 = vmatpush.msra.mxu0 %v701
    %v703 = vand.u32 %v275, 4294901760
    %704 = vmatmul.f32.gmra.mxu0 %v703
    %v705 = vpop.f32.mrf.mxu0
    %v706 = vadd.f32 %v619, %v705
    %v707 = vand.u32 %v276, 4294901760
    %708 = vmatmul.f32.gmra.mxu0 %v707
    %v709 = vpop.f32.mrf.mxu0
    %v710 = vadd.f32 %v625, %v709
    %v711 = vand.u32 %v277, 4294901760
    %712 = vmatmul.f32.gmra.mxu0 %v711
    %v713 = vpop.f32.mrf.mxu0
    %v714 = vadd.f32 %v631, %v713
    %v715 = vand.u32 %v278, 4294901760
    %716 = vmatmul.f32.gmra.mxu0 %v715
    %v717 = vpop.f32.mrf.mxu0
    %v718 = vadd.f32 %v637, %v717
    %719 = vdwg.mxu0
    %v720 = vand.u32 %v302, 4294901760
    %721 = vmatpush.msra.mxu0 %v720
    %v722 = vand.u32 %v301, 4294901760
    %723 = vmatpush.msra.mxu0 %v722
    %v724 = vand.u32 %v300, 4294901760
    %725 = vmatpush.msra.mxu0 %v724
    %v726 = vand.u32 %v299, 4294901760
    %727 = vmatpush.msra.mxu0 %v726
    %v728 = vand.u32 %v298, 4294901760
    %729 = vmatpush.msra.mxu0 %v728
    %v730 = vand.u32 %v297, 4294901760
    %731 = vmatpush.msra.mxu0 %v730
    %v732 = vand.u32 %v296, 4294901760
    %733 = vmatpush.msra.mxu0 %v732
    %v734 = vand.u32 %v295, 4294901760
    %735 = vmatpush.msra.mxu0 %v734
    %v736 = vand.u32 %v294, 4294901760
    %737 = vmatpush.msra.mxu0 %v736
    %v738 = vand.u32 %v293, 4294901760
    %739 = vmatpush.msra.mxu0 %v738
    %v740 = vand.u32 %v292, 4294901760
    %741 = vmatpush.msra.mxu0 %v740
    %v742 = vand.u32 %v291, 4294901760
    %743 = vmatpush.msra.mxu0 %v742
    %v744 = vand.u32 %v290, 4294901760
    %745 = vmatpush.msra.mxu0 %v744
    %v746 = vand.u32 %v289, 4294901760
    %747 = vmatpush.msra.mxu0 %v746
    %v748 = vand.u32 %v288, 4294901760
    %749 = vmatpush.msra.mxu0 %v748
    %v750 = vand.u32 %v287, 4294901760
    %751 = vmatpush.msra.mxu0 %v750
    %v752 = vand.u32 %v275, 4294901760
    %753 = vmatmul.f32.gmra.mxu0 %v752
    %v754 = vpop.f32.mrf.mxu0
    %v755 = vadd.f32 %v706, %v754
    %v756 = vand.u32 %v276, 4294901760
    %757 = vmatmul.f32.gmra.mxu0 %v756
    %v758 = vpop.f32.mrf.mxu0
    %v759 = vadd.f32 %v710, %v758
    %v760 = vand.u32 %v277, 4294901760
    %761 = vmatmul.f32.gmra.mxu0 %v760
    %v762 = vpop.f32.mrf.mxu0
    %v763 = vadd.f32 %v714, %v762
    %v764 = vand.u32 %v278, 4294901760
    %765 = vmatmul.f32.gmra.mxu0 %v764
    %v766 = vpop.f32.mrf.mxu0
    %v767 = vadd.f32 %v718, %v766
    %768 = vdwg.mxu0
    %v769 = vand.u32 %v318, 4294901760
    %770 = vmatpush.msra.mxu0 %v769
    %v771 = vand.u32 %v317, 4294901760
    %772 = vmatpush.msra.mxu0 %v771
    %v773 = vand.u32 %v316, 4294901760
    %774 = vmatpush.msra.mxu0 %v773
    %v775 = vand.u32 %v315, 4294901760
    %776 = vmatpush.msra.mxu0 %v775
    %v777 = vand.u32 %v314, 4294901760
    %778 = vmatpush.msra.mxu0 %v777
    %v779 = vand.u32 %v313, 4294901760
    %780 = vmatpush.msra.mxu0 %v779
    %v781 = vand.u32 %v312, 4294901760
    %782 = vmatpush.msra.mxu0 %v781
    %v783 = vand.u32 %v311, 4294901760
    %784 = vmatpush.msra.mxu0 %v783
    %v785 = vand.u32 %v310, 4294901760
    %786 = vmatpush.msra.mxu0 %v785
    %v787 = vand.u32 %v309, 4294901760
    %788 = vmatpush.msra.mxu0 %v787
    %v789 = vand.u32 %v308, 4294901760
    %790 = vmatpush.msra.mxu0 %v789
    %v791 = vand.u32 %v307, 4294901760
    %792 = vmatpush.msra.mxu0 %v791
    %v793 = vand.u32 %v306, 4294901760
    %794 = vmatpush.msra.mxu0 %v793
    %v795 = vand.u32 %v305, 4294901760
    %796 = vmatpush.msra.mxu0 %v795
    %v797 = vand.u32 %v304, 4294901760
    %798 = vmatpush.msra.mxu0 %v797
    %v799 = vand.u32 %v303, 4294901760
    %800 = vmatpush.msra.mxu0 %v799
    %v801 = vand.u32 %v184, 4294901760
    %v802 = vsub.f32 %v184, %v801
    %v803 = vand.u32 %v802, 4294901760
    %v804 = vsub.f32 %v802, %v803
    %v805 = vand.u32 %v804, 4294901760
    %806 = vmatmul.f32.gmra.mxu0 %v805
    %v807 = vpop.f32.mrf.mxu0
    %v808 = vadd.f32 %v755, %v807
    %v809 = vand.u32 %v185, 4294901760
    %v810 = vsub.f32 %v185, %v809
    %v811 = vand.u32 %v810, 4294901760
    %v812 = vsub.f32 %v810, %v811
    %v813 = vand.u32 %v812, 4294901760
    %814 = vmatmul.f32.gmra.mxu0 %v813
    %v815 = vpop.f32.mrf.mxu0
    %v816 = vadd.f32 %v759, %v815
    %v817 = vand.u32 %v186, 4294901760
    %v818 = vsub.f32 %v186, %v817
    %v819 = vand.u32 %v818, 4294901760
    %v820 = vsub.f32 %v818, %v819
    %v821 = vand.u32 %v820, 4294901760
    %822 = vmatmul.f32.gmra.mxu0 %v821
    %v823 = vpop.f32.mrf.mxu0
    %v824 = vadd.f32 %v763, %v823
    %v825 = vand.u32 %v187, 4294901760
    %v826 = vsub.f32 %v187, %v825
    %v827 = vand.u32 %v826, 4294901760
    %v828 = vsub.f32 %v826, %v827
    %v829 = vand.u32 %v828, 4294901760
    %830 = vmatmul.f32.gmra.mxu0 %v829
    %v831 = vpop.f32.mrf.mxu0
    %v832 = vadd.f32 %v767, %v831
    %833 = vdwg.mxu0
    %v834 = vand.u32 %v318, 4294901760
    %v835 = vsub.f32 %v318, %v834
    %v836 = vand.u32 %v835, 4294901760
    %v837 = vsub.f32 %v835, %v836
    %v838 = vand.u32 %v837, 4294901760
    %839 = vmatpush.msra.mxu0 %v838
    %v840 = vand.u32 %v317, 4294901760
    %v841 = vsub.f32 %v317, %v840
    %v842 = vand.u32 %v841, 4294901760
    %v843 = vsub.f32 %v841, %v842
    %v844 = vand.u32 %v843, 4294901760
    %845 = vmatpush.msra.mxu0 %v844
    %v846 = vand.u32 %v316, 4294901760
    %v847 = vsub.f32 %v316, %v846
    %v848 = vand.u32 %v847, 4294901760
    %v849 = vsub.f32 %v847, %v848
    %v850 = vand.u32 %v849, 4294901760
    %851 = vmatpush.msra.mxu0 %v850
    %v852 = vand.u32 %v315, 4294901760
    %v853 = vsub.f32 %v315, %v852
    %v854 = vand.u32 %v853, 4294901760
    %v855 = vsub.f32 %v853, %v854
    %v856 = vand.u32 %v855, 4294901760
    %857 = vmatpush.msra.mxu0 %v856
    %v858 = vand.u32 %v314, 4294901760
    %v859 = vsub.f32 %v314, %v858
    %v860 = vand.u32 %v859, 4294901760
    %v861 = vsub.f32 %v859, %v860
    %v862 = vand.u32 %v861, 4294901760
    %863 = vmatpush.msra.mxu0 %v862
    %v864 = vand.u32 %v313, 4294901760
    %v865 = vsub.f32 %v313, %v864
    %v866 = vand.u32 %v865, 4294901760
    %v867 = vsub.f32 %v865, %v866
    %v868 = vand.u32 %v867, 4294901760
    %869 = vmatpush.msra.mxu0 %v868
    %v870 = vand.u32 %v312, 4294901760
    %v871 = vsub.f32 %v312, %v870
    %v872 = vand.u32 %v871, 4294901760
    %v873 = vsub.f32 %v871, %v872
    %v874 = vand.u32 %v873, 4294901760
    %875 = vmatpush.msra.mxu0 %v874
    %v876 = vand.u32 %v311, 4294901760
    %v877 = vsub.f32 %v311, %v876
    %v878 = vand.u32 %v877, 4294901760
    %v879 = vsub.f32 %v877, %v878
    %v880 = vand.u32 %v879, 4294901760
    %881 = vmatpush.msra.mxu0 %v880
    %v882 = vand.u32 %v310, 4294901760
    %v883 = vsub.f32 %v310, %v882
    %v884 = vand.u32 %v883, 4294901760
    %v885 = vsub.f32 %v883, %v884
    %v886 = vand.u32 %v885, 4294901760
    %887 = vmatpush.msra.mxu0 %v886
    %v888 = vand.u32 %v309, 4294901760
    %v889 = vsub.f32 %v309, %v888
    %v890 = vand.u32 %v889, 4294901760
    %v891 = vsub.f32 %v889, %v890
    %v892 = vand.u32 %v891, 4294901760
    %893 = vmatpush.msra.mxu0 %v892
    %v894 = vand.u32 %v308, 4294901760
    %v895 = vsub.f32 %v308, %v894
    %v896 = vand.u32 %v895, 4294901760
    %v897 = vsub.f32 %v895, %v896
    %v898 = vand.u32 %v897, 4294901760
    %899 = vmatpush.msra.mxu0 %v898
    %v900 = vand.u32 %v307, 4294901760
    %v901 = vsub.f32 %v307, %v900
    %v902 = vand.u32 %v901, 4294901760
    %v903 = vsub.f32 %v901, %v902
    %v904 = vand.u32 %v903, 4294901760
    %905 = vmatpush.msra.mxu0 %v904
    %v906 = vand.u32 %v306, 4294901760
    %v907 = vsub.f32 %v306, %v906
    %v908 = vand.u32 %v907, 4294901760
    %v909 = vsub.f32 %v907, %v908
    %v910 = vand.u32 %v909, 4294901760
    %911 = vmatpush.msra.mxu0 %v910
    %v912 = vand.u32 %v305, 4294901760
    %v913 = vsub.f32 %v305, %v912
    %v914 = vand.u32 %v913, 4294901760
    %v915 = vsub.f32 %v913, %v914
    %v916 = vand.u32 %v915, 4294901760
    %917 = vmatpush.msra.mxu0 %v916
    %v918 = vand.u32 %v304, 4294901760
    %v919 = vsub.f32 %v304, %v918
    %v920 = vand.u32 %v919, 4294901760
    %v921 = vsub.f32 %v919, %v920
    %v922 = vand.u32 %v921, 4294901760
    %923 = vmatpush.msra.mxu0 %v922
    %v924 = vand.u32 %v303, 4294901760
    %v925 = vsub.f32 %v303, %v924
    %v926 = vand.u32 %v925, 4294901760
    %v927 = vsub.f32 %v925, %v926
    %v928 = vand.u32 %v927, 4294901760
    %929 = vmatpush.msra.mxu0 %v928
    %v930 = vand.u32 %v184, 4294901760
    %931 = vmatmul.f32.gmra.mxu0 %v930
    %v932 = vpop.f32.mrf.mxu0
    %v933 = vadd.f32 %v808, %v932
    %v934 = vand.u32 %v185, 4294901760
    %935 = vmatmul.f32.gmra.mxu0 %v934
    %v936 = vpop.f32.mrf.mxu0
    %v937 = vadd.f32 %v816, %v936
    %v938 = vand.u32 %v186, 4294901760
    %939 = vmatmul.f32.gmra.mxu0 %v938
    %v940 = vpop.f32.mrf.mxu0
    %v941 = vadd.f32 %v824, %v940
    %v942 = vand.u32 %v187, 4294901760
    %943 = vmatmul.f32.gmra.mxu0 %v942
    %v944 = vpop.f32.mrf.mxu0
    %v945 = vadd.f32 %v832, %v944
    %946 = vdwg.mxu0
    %v947 = vand.u32 %v318, 4294901760
    %v948 = vsub.f32 %v318, %v947
    %949 = vmatpush.msra.mxu0 %v948
    %v950 = vand.u32 %v317, 4294901760
    %v951 = vsub.f32 %v317, %v950
    %952 = vmatpush.msra.mxu0 %v951
    %v953 = vand.u32 %v316, 4294901760
    %v954 = vsub.f32 %v316, %v953
    %955 = vmatpush.msra.mxu0 %v954
    %v956 = vand.u32 %v315, 4294901760
    %v957 = vsub.f32 %v315, %v956
    %958 = vmatpush.msra.mxu0 %v957
    %v959 = vand.u32 %v314, 4294901760
    %v960 = vsub.f32 %v314, %v959
    %961 = vmatpush.msra.mxu0 %v960
    %v962 = vand.u32 %v313, 4294901760
    %v963 = vsub.f32 %v313, %v962
    %964 = vmatpush.msra.mxu0 %v963
    %v965 = vand.u32 %v312, 4294901760
    %v966 = vsub.f32 %v312, %v965
    %967 = vmatpush.msra.mxu0 %v966
    %v968 = vand.u32 %v311, 4294901760
    %v969 = vsub.f32 %v311, %v968
    %970 = vmatpush.msra.mxu0 %v969
    %v971 = vand.u32 %v310, 4294901760
    %v972 = vsub.f32 %v310, %v971
    %973 = vmatpush.msra.mxu0 %v972
    %v974 = vand.u32 %v309, 4294901760
    %v975 = vsub.f32 %v309, %v974
    %976 = vmatpush.msra.mxu0 %v975
    %v977 = vand.u32 %v308, 4294901760
    %v978 = vsub.f32 %v308, %v977
    %979 = vmatpush.msra.mxu0 %v978
    %v980 = vand.u32 %v307, 4294901760
    %v981 = vsub.f32 %v307, %v980
    %982 = vmatpush.msra.mxu0 %v981
    %v983 = vand.u32 %v306, 4294901760
    %v984 = vsub.f32 %v306, %v983
    %985 = vmatpush.msra.mxu0 %v984
    %v986 = vand.u32 %v305, 4294901760
    %v987 = vsub.f32 %v305, %v986
    %988 = vmatpush.msra.mxu0 %v987
    %v989 = vand.u32 %v304, 4294901760
    %v990 = vsub.f32 %v304, %v989
    %991 = vmatpush.msra.mxu0 %v990
    %v992 = vand.u32 %v303, 4294901760
    %v993 = vsub.f32 %v303, %v992
    %994 = vmatpush.msra.mxu0 %v993
    %v995 = vand.u32 %v184, 4294901760
    %v996 = vsub.f32 %v184, %v995
    %997 = vmatmul.f32.gmra.mxu0 %v996
    %v998 = vpop.f32.mrf.mxu0
    %v999 = vadd.f32 %v933, %v998
    %v1000 = vand.u32 %v185, 4294901760
    %v1001 = vsub.f32 %v185, %v1000
    %1002 = vmatmul.f32.gmra.mxu0 %v1001
    %v1003 = vpop.f32.mrf.mxu0
    %v1004 = vadd.f32 %v937, %v1003
    %v1005 = vand.u32 %v186, 4294901760
    %v1006 = vsub.f32 %v186, %v1005
    %1007 = vmatmul.f32.gmra.mxu0 %v1006
    %v1008 = vpop.f32.mrf.mxu0
    %v1009 = vadd.f32 %v941, %v1008
    %v1010 = vand.u32 %v187, 4294901760
    %v1011 = vsub.f32 %v187, %v1010
    %1012 = vmatmul.f32.gmra.mxu0 %v1011
    %v1013 = vpop.f32.mrf.mxu0
    %v1014 = vadd.f32 %v945, %v1013
    %1015 = vdwg.mxu0
    %v1016 = vand.u32 %v318, 4294901760
    %1017 = vmatpush.msra.mxu0 %v1016
    %v1018 = vand.u32 %v317, 4294901760
    %1019 = vmatpush.msra.mxu0 %v1018
    %v1020 = vand.u32 %v316, 4294901760
    %1021 = vmatpush.msra.mxu0 %v1020
    %v1022 = vand.u32 %v315, 4294901760
    %1023 = vmatpush.msra.mxu0 %v1022
    %v1024 = vand.u32 %v314, 4294901760
    %1025 = vmatpush.msra.mxu0 %v1024
    %v1026 = vand.u32 %v313, 4294901760
    %1027 = vmatpush.msra.mxu0 %v1026
    %v1028 = vand.u32 %v312, 4294901760
    %1029 = vmatpush.msra.mxu0 %v1028
    %v1030 = vand.u32 %v311, 4294901760
    %1031 = vmatpush.msra.mxu0 %v1030
    %v1032 = vand.u32 %v310, 4294901760
    %1033 = vmatpush.msra.mxu0 %v1032
    %v1034 = vand.u32 %v309, 4294901760
    %1035 = vmatpush.msra.mxu0 %v1034
    %v1036 = vand.u32 %v308, 4294901760
    %1037 = vmatpush.msra.mxu0 %v1036
    %v1038 = vand.u32 %v307, 4294901760
    %1039 = vmatpush.msra.mxu0 %v1038
    %v1040 = vand.u32 %v306, 4294901760
    %1041 = vmatpush.msra.mxu0 %v1040
    %v1042 = vand.u32 %v305, 4294901760
    %1043 = vmatpush.msra.mxu0 %v1042
    %v1044 = vand.u32 %v304, 4294901760
    %1045 = vmatpush.msra.mxu0 %v1044
    %v1046 = vand.u32 %v303, 4294901760
    %1047 = vmatpush.msra.mxu0 %v1046
    %v1048 = vand.u32 %v184, 4294901760
    %v1049 = vsub.f32 %v184, %v1048
    %v1050 = vand.u32 %v1049, 4294901760
    %1051 = vmatmul.f32.gmra.mxu0 %v1050
    %v1052 = vpop.f32.mrf.mxu0
    %v1053 = vadd.f32 %v999, %v1052
    %v1054 = vand.u32 %v185, 4294901760
    %v1055 = vsub.f32 %v185, %v1054
    %v1056 = vand.u32 %v1055, 4294901760
    %1057 = vmatmul.f32.gmra.mxu0 %v1056
    %v1058 = vpop.f32.mrf.mxu0
    %v1059 = vadd.f32 %v1004, %v1058
    %v1060 = vand.u32 %v186, 4294901760
    %v1061 = vsub.f32 %v186, %v1060
    %v1062 = vand.u32 %v1061, 4294901760
    %1063 = vmatmul.f32.gmra.mxu0 %v1062
    %v1064 = vpop.f32.mrf.mxu0
    %v1065 = vadd.f32 %v1009, %v1064
    %v1066 = vand.u32 %v187, 4294901760
    %v1067 = vsub.f32 %v187, %v1066
    %v1068 = vand.u32 %v1067, 4294901760
    %1069 = vmatmul.f32.gmra.mxu0 %v1068
    %v1070 = vpop.f32.mrf.mxu0
    %v1071 = vadd.f32 %v1014, %v1070
    %1072 = vdwg.mxu0
    %v1073 = vand.u32 %v318, 4294901760
    %v1074 = vsub.f32 %v318, %v1073
    %v1075 = vand.u32 %v1074, 4294901760
    %1076 = vmatpush.msra.mxu0 %v1075
    %v1077 = vand.u32 %v317, 4294901760
    %v1078 = vsub.f32 %v317, %v1077
    %v1079 = vand.u32 %v1078, 4294901760
    %1080 = vmatpush.msra.mxu0 %v1079
    %v1081 = vand.u32 %v316, 4294901760
    %v1082 = vsub.f32 %v316, %v1081
    %v1083 = vand.u32 %v1082, 4294901760
    %1084 = vmatpush.msra.mxu0 %v1083
    %v1085 = vand.u32 %v315, 4294901760
    %v1086 = vsub.f32 %v315, %v1085
    %v1087 = vand.u32 %v1086, 4294901760
    %1088 = vmatpush.msra.mxu0 %v1087
    %v1089 = vand.u32 %v314, 4294901760
    %v1090 = vsub.f32 %v314, %v1089
    %v1091 = vand.u32 %v1090, 4294901760
    %1092 = vmatpush.msra.mxu0 %v1091
    %v1093 = vand.u32 %v313, 4294901760
    %v1094 = vsub.f32 %v313, %v1093
    %v1095 = vand.u32 %v1094, 4294901760
    %1096 = vmatpush.msra.mxu0 %v1095
    %v1097 = vand.u32 %v312, 4294901760
    %v1098 = vsub.f32 %v312, %v1097
    %v1099 = vand.u32 %v1098, 4294901760
    %1100 = vmatpush.msra.mxu0 %v1099
    %v1101 = vand.u32 %v311, 4294901760
    %v1102 = vsub.f32 %v311, %v1101
    %v1103 = vand.u32 %v1102, 4294901760
    %1104 = vmatpush.msra.mxu0 %v1103
    %v1105 = vand.u32 %v310, 4294901760
    %v1106 = vsub.f32 %v310, %v1105
    %v1107 = vand.u32 %v1106, 4294901760
    %1108 = vmatpush.msra.mxu0 %v1107
    %v1109 = vand.u32 %v309, 4294901760
    %v1110 = vsub.f32 %v309, %v1109
    %v1111 = vand.u32 %v1110, 4294901760
    %1112 = vmatpush.msra.mxu0 %v1111
    %v1113 = vand.u32 %v308, 4294901760
    %v1114 = vsub.f32 %v308, %v1113
    %v1115 = vand.u32 %v1114, 4294901760
    %1116 = vmatpush.msra.mxu0 %v1115
    %v1117 = vand.u32 %v307, 4294901760
    %v1118 = vsub.f32 %v307, %v1117
    %v1119 = vand.u32 %v1118, 4294901760
    %1120 = vmatpush.msra.mxu0 %v1119
    %v1121 = vand.u32 %v306, 4294901760
    %v1122 = vsub.f32 %v306, %v1121
    %v1123 = vand.u32 %v1122, 4294901760
    %1124 = vmatpush.msra.mxu0 %v1123
    %v1125 = vand.u32 %v305, 4294901760
    %v1126 = vsub.f32 %v305, %v1125
    %v1127 = vand.u32 %v1126, 4294901760
    %1128 = vmatpush.msra.mxu0 %v1127
    %v1129 = vand.u32 %v304, 4294901760
    %v1130 = vsub.f32 %v304, %v1129
    %v1131 = vand.u32 %v1130, 4294901760
    %1132 = vmatpush.msra.mxu0 %v1131
    %v1133 = vand.u32 %v303, 4294901760
    %v1134 = vsub.f32 %v303, %v1133
    %v1135 = vand.u32 %v1134, 4294901760
    %1136 = vmatpush.msra.mxu0 %v1135
    %v1137 = vand.u32 %v184, 4294901760
    %1138 = vmatmul.f32.gmra.mxu0 %v1137
    %v1139 = vpop.f32.mrf.mxu0
    %v1140 = vadd.f32 %v1053, %v1139
    %v1141 = vand.u32 %v185, 4294901760
    %1142 = vmatmul.f32.gmra.mxu0 %v1141
    %v1143 = vpop.f32.mrf.mxu0
    %v1144 = vadd.f32 %v1059, %v1143
    %v1145 = vand.u32 %v186, 4294901760
    %1146 = vmatmul.f32.gmra.mxu0 %v1145
    %v1147 = vpop.f32.mrf.mxu0
    %v1148 = vadd.f32 %v1065, %v1147
    %v1149 = vand.u32 %v187, 4294901760
    %1150 = vmatmul.f32.gmra.mxu0 %v1149
    %v1151 = vpop.f32.mrf.mxu0
    %v1152 = vadd.f32 %v1071, %v1151
    %1153 = vdwg.mxu0
    %v1154 = vand.u32 %v318, 4294901760
    %1155 = vmatpush.msra.mxu0 %v1154
    %v1156 = vand.u32 %v317, 4294901760
    %1157 = vmatpush.msra.mxu0 %v1156
    %v1158 = vand.u32 %v316, 4294901760
    %1159 = vmatpush.msra.mxu0 %v1158
    %v1160 = vand.u32 %v315, 4294901760
    %1161 = vmatpush.msra.mxu0 %v1160
    %v1162 = vand.u32 %v314, 4294901760
    %1163 = vmatpush.msra.mxu0 %v1162
    %v1164 = vand.u32 %v313, 4294901760
    %1165 = vmatpush.msra.mxu0 %v1164
    %v1166 = vand.u32 %v312, 4294901760
    %1167 = vmatpush.msra.mxu0 %v1166
    %v1168 = vand.u32 %v311, 4294901760
    %1169 = vmatpush.msra.mxu0 %v1168
    %v1170 = vand.u32 %v310, 4294901760
    %1171 = vmatpush.msra.mxu0 %v1170
    %v1172 = vand.u32 %v309, 4294901760
    %1173 = vmatpush.msra.mxu0 %v1172
    %v1174 = vand.u32 %v308, 4294901760
    %1175 = vmatpush.msra.mxu0 %v1174
    %v1176 = vand.u32 %v307, 4294901760
    %1177 = vmatpush.msra.mxu0 %v1176
    %v1178 = vand.u32 %v306, 4294901760
    %1179 = vmatpush.msra.mxu0 %v1178
    %v1180 = vand.u32 %v305, 4294901760
    %1181 = vmatpush.msra.mxu0 %v1180
    %v1182 = vand.u32 %v304, 4294901760
    %1183 = vmatpush.msra.mxu0 %v1182
    %v1184 = vand.u32 %v303, 4294901760
    %1185 = vmatpush.msra.mxu0 %v1184
    %v1186 = vand.u32 %v184, 4294901760
    %1187 = vmatmul.f32.gmra.mxu0 %v1186
    %v1188 = vpop.f32.mrf.mxu0
    %v1189 = vadd.f32 %v1140, %v1188
    %v1190 = vand.u32 %v185, 4294901760
    %1191 = vmatmul.f32.gmra.mxu0 %v1190
    %v1192 = vpop.f32.mrf.mxu0
    %v1193 = vadd.f32 %v1144, %v1192
    %v1194 = vand.u32 %v186, 4294901760
    %1195 = vmatmul.f32.gmra.mxu0 %v1194
    %v1196 = vpop.f32.mrf.mxu0
    %v1197 = vadd.f32 %v1148, %v1196
    %v1198 = vand.u32 %v187, 4294901760
    %1199 = vmatmul.f32.gmra.mxu0 %v1198
    %v1200 = vpop.f32.mrf.mxu0
    %v1201 = vadd.f32 %v1152, %v1200
    %1202 = vdwg.mxu0
    %v1203 = vand.u32 %v334, 4294901760
    %1204 = vmatpush.msra.mxu0 %v1203
    %v1205 = vand.u32 %v333, 4294901760
    %1206 = vmatpush.msra.mxu0 %v1205
    %v1207 = vand.u32 %v332, 4294901760
    %1208 = vmatpush.msra.mxu0 %v1207
    %v1209 = vand.u32 %v331, 4294901760
    %1210 = vmatpush.msra.mxu0 %v1209
    %v1211 = vand.u32 %v330, 4294901760
    %1212 = vmatpush.msra.mxu0 %v1211
    %v1213 = vand.u32 %v329, 4294901760
    %1214 = vmatpush.msra.mxu0 %v1213
    %v1215 = vand.u32 %v328, 4294901760
    %1216 = vmatpush.msra.mxu0 %v1215
    %v1217 = vand.u32 %v327, 4294901760
    %1218 = vmatpush.msra.mxu0 %v1217
    %v1219 = vand.u32 %v326, 4294901760
    %1220 = vmatpush.msra.mxu0 %v1219
    %v1221 = vand.u32 %v325, 4294901760
    %1222 = vmatpush.msra.mxu0 %v1221
    %v1223 = vand.u32 %v324, 4294901760
    %1224 = vmatpush.msra.mxu0 %v1223
    %v1225 = vand.u32 %v323, 4294901760
    %1226 = vmatpush.msra.mxu0 %v1225
    %v1227 = vand.u32 %v322, 4294901760
    %1228 = vmatpush.msra.mxu0 %v1227
    %v1229 = vand.u32 %v321, 4294901760
    %1230 = vmatpush.msra.mxu0 %v1229
    %v1231 = vand.u32 %v320, 4294901760
    %1232 = vmatpush.msra.mxu0 %v1231
    %v1233 = vand.u32 %v319, 4294901760
    %1234 = vmatpush.msra.mxu0 %v1233
    %v1235 = vand.u32 %v283, 4294901760
    %v1236 = vsub.f32 %v283, %v1235
    %v1237 = vand.u32 %v1236, 4294901760
    %v1238 = vsub.f32 %v1236, %v1237
    %v1239 = vand.u32 %v1238, 4294901760
    %1240 = vmatmul.f32.gmra.mxu0 %v1239
    %v1241 = vpop.f32.mrf.mxu0
    %v1242 = vadd.f32 %v1189, %v1241
    %v1243 = vand.u32 %v284, 4294901760
    %v1244 = vsub.f32 %v284, %v1243
    %v1245 = vand.u32 %v1244, 4294901760
    %v1246 = vsub.f32 %v1244, %v1245
    %v1247 = vand.u32 %v1246, 4294901760
    %1248 = vmatmul.f32.gmra.mxu0 %v1247
    %v1249 = vpop.f32.mrf.mxu0
    %v1250 = vadd.f32 %v1193, %v1249
    %v1251 = vand.u32 %v285, 4294901760
    %v1252 = vsub.f32 %v285, %v1251
    %v1253 = vand.u32 %v1252, 4294901760
    %v1254 = vsub.f32 %v1252, %v1253
    %v1255 = vand.u32 %v1254, 4294901760
    %1256 = vmatmul.f32.gmra.mxu0 %v1255
    %v1257 = vpop.f32.mrf.mxu0
    %v1258 = vadd.f32 %v1197, %v1257
    %v1259 = vand.u32 %v286, 4294901760
    %v1260 = vsub.f32 %v286, %v1259
    %v1261 = vand.u32 %v1260, 4294901760
    %v1262 = vsub.f32 %v1260, %v1261
    %v1263 = vand.u32 %v1262, 4294901760
    %1264 = vmatmul.f32.gmra.mxu0 %v1263
    %v1265 = vpop.f32.mrf.mxu0
    %v1266 = vadd.f32 %v1201, %v1265
    %1267 = vdwg.mxu0
    %v1268 = vand.u32 %v334, 4294901760
    %v1269 = vsub.f32 %v334, %v1268
    %v1270 = vand.u32 %v1269, 4294901760
    %v1271 = vsub.f32 %v1269, %v1270
    %v1272 = vand.u32 %v1271, 4294901760
    %1273 = vmatpush.msra.mxu0 %v1272
    %v1274 = vand.u32 %v333, 4294901760
    %v1275 = vsub.f32 %v333, %v1274
    %v1276 = vand.u32 %v1275, 4294901760
    %v1277 = vsub.f32 %v1275, %v1276
    %v1278 = vand.u32 %v1277, 4294901760
    %1279 = vmatpush.msra.mxu0 %v1278
    %v1280 = vand.u32 %v332, 4294901760
    %v1281 = vsub.f32 %v332, %v1280
    %v1282 = vand.u32 %v1281, 4294901760
    %v1283 = vsub.f32 %v1281, %v1282
    %v1284 = vand.u32 %v1283, 4294901760
    %1285 = vmatpush.msra.mxu0 %v1284
    %v1286 = vand.u32 %v331, 4294901760
    %v1287 = vsub.f32 %v331, %v1286
    %v1288 = vand.u32 %v1287, 4294901760
    %v1289 = vsub.f32 %v1287, %v1288
    %v1290 = vand.u32 %v1289, 4294901760
    %1291 = vmatpush.msra.mxu0 %v1290
    %v1292 = vand.u32 %v330, 4294901760
    %v1293 = vsub.f32 %v330, %v1292
    %v1294 = vand.u32 %v1293, 4294901760
    %v1295 = vsub.f32 %v1293, %v1294
    %v1296 = vand.u32 %v1295, 4294901760
    %1297 = vmatpush.msra.mxu0 %v1296
    %v1298 = vand.u32 %v329, 4294901760
    %v1299 = vsub.f32 %v329, %v1298
    %v1300 = vand.u32 %v1299, 4294901760
    %v1301 = vsub.f32 %v1299, %v1300
    %v1302 = vand.u32 %v1301, 4294901760
    %1303 = vmatpush.msra.mxu0 %v1302
    %v1304 = vand.u32 %v328, 4294901760
    %v1305 = vsub.f32 %v328, %v1304
    %v1306 = vand.u32 %v1305, 4294901760
    %v1307 = vsub.f32 %v1305, %v1306
    %v1308 = vand.u32 %v1307, 4294901760
    %1309 = vmatpush.msra.mxu0 %v1308
    %v1310 = vand.u32 %v327, 4294901760
    %v1311 = vsub.f32 %v327, %v1310
    %v1312 = vand.u32 %v1311, 4294901760
    %v1313 = vsub.f32 %v1311, %v1312
    %v1314 = vand.u32 %v1313, 4294901760
    %1315 = vmatpush.msra.mxu0 %v1314
    %v1316 = vand.u32 %v326, 4294901760
    %v1317 = vsub.f32 %v326, %v1316
    %v1318 = vand.u32 %v1317, 4294901760
    %v1319 = vsub.f32 %v1317, %v1318
    %v1320 = vand.u32 %v1319, 4294901760
    %1321 = vmatpush.msra.mxu0 %v1320
    %v1322 = vand.u32 %v325, 4294901760
    %v1323 = vsub.f32 %v325, %v1322
    %v1324 = vand.u32 %v1323, 4294901760
    %v1325 = vsub.f32 %v1323, %v1324
    %v1326 = vand.u32 %v1325, 4294901760
    %1327 = vmatpush.msra.mxu0 %v1326
    %v1328 = vand.u32 %v324, 4294901760
    %v1329 = vsub.f32 %v324, %v1328
    %v1330 = vand.u32 %v1329, 4294901760
    %v1331 = vsub.f32 %v1329, %v1330
    %v1332 = vand.u32 %v1331, 4294901760
    %1333 = vmatpush.msra.mxu0 %v1332
    %v1334 = vand.u32 %v323, 4294901760
    %v1335 = vsub.f32 %v323, %v1334
    %v1336 = vand.u32 %v1335, 4294901760
    %v1337 = vsub.f32 %v1335, %v1336
    %v1338 = vand.u32 %v1337, 4294901760
    %1339 = vmatpush.msra.mxu0 %v1338
    %v1340 = vand.u32 %v322, 4294901760
    %v1341 = vsub.f32 %v322, %v1340
    %v1342 = vand.u32 %v1341, 4294901760
    %v1343 = vsub.f32 %v1341, %v1342
    %v1344 = vand.u32 %v1343, 4294901760
    %1345 = vmatpush.msra.mxu0 %v1344
    %v1346 = vand.u32 %v321, 4294901760
    %v1347 = vsub.f32 %v321, %v1346
    %v1348 = vand.u32 %v1347, 4294901760
    %v1349 = vsub.f32 %v1347, %v1348
    %v1350 = vand.u32 %v1349, 4294901760
    %1351 = vmatpush.msra.mxu0 %v1350
    %v1352 = vand.u32 %v320, 4294901760
    %v1353 = vsub.f32 %v320, %v1352
    %v1354 = vand.u32 %v1353, 4294901760
    %v1355 = vsub.f32 %v1353, %v1354
    %v1356 = vand.u32 %v1355, 4294901760
    %1357 = vmatpush.msra.mxu0 %v1356
    %v1358 = vand.u32 %v319, 4294901760
    %v1359 = vsub.f32 %v319, %v1358
    %v1360 = vand.u32 %v1359, 4294901760
    %v1361 = vsub.f32 %v1359, %v1360
    %v1362 = vand.u32 %v1361, 4294901760
    %1363 = vmatpush.msra.mxu0 %v1362
    %v1364 = vand.u32 %v283, 4294901760
    %1365 = vmatmul.f32.gmra.mxu0 %v1364
    %v1366 = vpop.f32.mrf.mxu0
    %v1367 = vadd.f32 %v1242, %v1366
    %v1368 = vand.u32 %v284, 4294901760
    %1369 = vmatmul.f32.gmra.mxu0 %v1368
    %v1370 = vpop.f32.mrf.mxu0
    %v1371 = vadd.f32 %v1250, %v1370
    %v1372 = vand.u32 %v285, 4294901760
    %1373 = vmatmul.f32.gmra.mxu0 %v1372
    %v1374 = vpop.f32.mrf.mxu0
    %v1375 = vadd.f32 %v1258, %v1374
    %v1376 = vand.u32 %v286, 4294901760
    %1377 = vmatmul.f32.gmra.mxu0 %v1376
    %v1378 = vpop.f32.mrf.mxu0
    %v1379 = vadd.f32 %v1266, %v1378
    %1380 = vdwg.mxu0
    %v1381 = vand.u32 %v334, 4294901760
    %v1382 = vsub.f32 %v334, %v1381
    %1383 = vmatpush.msra.mxu0 %v1382
    %v1384 = vand.u32 %v333, 4294901760
    %v1385 = vsub.f32 %v333, %v1384
    %1386 = vmatpush.msra.mxu0 %v1385
    %v1387 = vand.u32 %v332, 4294901760
    %v1388 = vsub.f32 %v332, %v1387
    %1389 = vmatpush.msra.mxu0 %v1388
    %v1390 = vand.u32 %v331, 4294901760
    %v1391 = vsub.f32 %v331, %v1390
    %1392 = vmatpush.msra.mxu0 %v1391
    %v1393 = vand.u32 %v330, 4294901760
    %v1394 = vsub.f32 %v330, %v1393
    %1395 = vmatpush.msra.mxu0 %v1394
    %v1396 = vand.u32 %v329, 4294901760
    %v1397 = vsub.f32 %v329, %v1396
    %1398 = vmatpush.msra.mxu0 %v1397
    %v1399 = vand.u32 %v328, 4294901760
    %v1400 = vsub.f32 %v328, %v1399
    %1401 = vmatpush.msra.mxu0 %v1400
    %v1402 = vand.u32 %v327, 4294901760
    %v1403 = vsub.f32 %v327, %v1402
    %1404 = vmatpush.msra.mxu0 %v1403
    %v1405 = vand.u32 %v326, 4294901760
    %v1406 = vsub.f32 %v326, %v1405
    %1407 = vmatpush.msra.mxu0 %v1406
    %v1408 = vand.u32 %v325, 4294901760
    %v1409 = vsub.f32 %v325, %v1408
    %1410 = vmatpush.msra.mxu0 %v1409
    %v1411 = vand.u32 %v324, 4294901760
    %v1412 = vsub.f32 %v324, %v1411
    %1413 = vmatpush.msra.mxu0 %v1412
    %v1414 = vand.u32 %v323, 4294901760
    %v1415 = vsub.f32 %v323, %v1414
    %1416 = vmatpush.msra.mxu0 %v1415
    %v1417 = vand.u32 %v322, 4294901760
    %v1418 = vsub.f32 %v322, %v1417
    %1419 = vmatpush.msra.mxu0 %v1418
    %v1420 = vand.u32 %v321, 4294901760
    %v1421 = vsub.f32 %v321, %v1420
    %1422 = vmatpush.msra.mxu0 %v1421
    %v1423 = vand.u32 %v320, 4294901760
    %v1424 = vsub.f32 %v320, %v1423
    %1425 = vmatpush.msra.mxu0 %v1424
    %v1426 = vand.u32 %v319, 4294901760
    %v1427 = vsub.f32 %v319, %v1426
    %1428 = vmatpush.msra.mxu0 %v1427
    %v1429 = vand.u32 %v283, 4294901760
    %v1430 = vsub.f32 %v283, %v1429
    %1431 = vmatmul.f32.gmra.mxu0 %v1430
    %v1432 = vpop.f32.mrf.mxu0
    %v1433 = vadd.f32 %v1367, %v1432
    %v1434 = vand.u32 %v284, 4294901760
    %v1435 = vsub.f32 %v284, %v1434
    %1436 = vmatmul.f32.gmra.mxu0 %v1435
    %v1437 = vpop.f32.mrf.mxu0
    %v1438 = vadd.f32 %v1371, %v1437
    %v1439 = vand.u32 %v285, 4294901760
    %v1440 = vsub.f32 %v285, %v1439
    %1441 = vmatmul.f32.gmra.mxu0 %v1440
    %v1442 = vpop.f32.mrf.mxu0
    %v1443 = vadd.f32 %v1375, %v1442
    %v1444 = vand.u32 %v286, 4294901760
    %v1445 = vsub.f32 %v286, %v1444
    %1446 = vmatmul.f32.gmra.mxu0 %v1445
    %v1447 = vpop.f32.mrf.mxu0
    %v1448 = vadd.f32 %v1379, %v1447
    %1449 = vdwg.mxu0
    %v1450 = vand.u32 %v334, 4294901760
    %1451 = vmatpush.msra.mxu0 %v1450
    %v1452 = vand.u32 %v333, 4294901760
    %1453 = vmatpush.msra.mxu0 %v1452
    %v1454 = vand.u32 %v332, 4294901760
    %1455 = vmatpush.msra.mxu0 %v1454
    %v1456 = vand.u32 %v331, 4294901760
    %1457 = vmatpush.msra.mxu0 %v1456
    %v1458 = vand.u32 %v330, 4294901760
    %1459 = vmatpush.msra.mxu0 %v1458
    %v1460 = vand.u32 %v329, 4294901760
    %1461 = vmatpush.msra.mxu0 %v1460
    %v1462 = vand.u32 %v328, 4294901760
    %1463 = vmatpush.msra.mxu0 %v1462
    %v1464 = vand.u32 %v327, 4294901760
    %1465 = vmatpush.msra.mxu0 %v1464
    %v1466 = vand.u32 %v326, 4294901760
    %1467 = vmatpush.msra.mxu0 %v1466
    %v1468 = vand.u32 %v325, 4294901760
    %1469 = vmatpush.msra.mxu0 %v1468
    %v1470 = vand.u32 %v324, 4294901760
    %1471 = vmatpush.msra.mxu0 %v1470
    %v1472 = vand.u32 %v323, 4294901760
    %1473 = vmatpush.msra.mxu0 %v1472
    %v1474 = vand.u32 %v322, 4294901760
    %1475 = vmatpush.msra.mxu0 %v1474
    %v1476 = vand.u32 %v321, 4294901760
    %1477 = vmatpush.msra.mxu0 %v1476
    %v1478 = vand.u32 %v320, 4294901760
    %1479 = vmatpush.msra.mxu0 %v1478
    %v1480 = vand.u32 %v319, 4294901760
    %1481 = vmatpush.msra.mxu0 %v1480
    %v1482 = vand.u32 %v283, 4294901760
    %v1483 = vsub.f32 %v283, %v1482
    %v1484 = vand.u32 %v1483, 4294901760
    %1485 = vmatmul.f32.gmra.mxu0 %v1484
    %v1486 = vpop.f32.mrf.mxu0
    %v1487 = vadd.f32 %v1433, %v1486
    %v1488 = vand.u32 %v284, 4294901760
    %v1489 = vsub.f32 %v284, %v1488
    %v1490 = vand.u32 %v1489, 4294901760
    %1491 = vmatmul.f32.gmra.mxu0 %v1490
    %v1492 = vpop.f32.mrf.mxu0
    %v1493 = vadd.f32 %v1438, %v1492
    %v1494 = vand.u32 %v285, 4294901760
    %v1495 = vsub.f32 %v285, %v1494
    %v1496 = vand.u32 %v1495, 4294901760
    %1497 = vmatmul.f32.gmra.mxu0 %v1496
    %v1498 = vpop.f32.mrf.mxu0
    %v1499 = vadd.f32 %v1443, %v1498
    %v1500 = vand.u32 %v286, 4294901760
    %v1501 = vsub.f32 %v286, %v1500
    %v1502 = vand.u32 %v1501, 4294901760
    %1503 = vmatmul.f32.gmra.mxu0 %v1502
    %v1504 = vpop.f32.mrf.mxu0
    %v1505 = vadd.f32 %v1448, %v1504
    %1506 = vdwg.mxu0
    %v1507 = vand.u32 %v334, 4294901760
    %v1508 = vsub.f32 %v334, %v1507
    %v1509 = vand.u32 %v1508, 4294901760
    %1510 = vmatpush.msra.mxu0 %v1509
    %v1511 = vand.u32 %v333, 4294901760
    %v1512 = vsub.f32 %v333, %v1511
    %v1513 = vand.u32 %v1512, 4294901760
    %1514 = vmatpush.msra.mxu0 %v1513
    %v1515 = vand.u32 %v332, 4294901760
    %v1516 = vsub.f32 %v332, %v1515
    %v1517 = vand.u32 %v1516, 4294901760
    %1518 = vmatpush.msra.mxu0 %v1517
    %v1519 = vand.u32 %v331, 4294901760
    %v1520 = vsub.f32 %v331, %v1519
    %v1521 = vand.u32 %v1520, 4294901760
    %1522 = vmatpush.msra.mxu0 %v1521
    %v1523 = vand.u32 %v330, 4294901760
    %v1524 = vsub.f32 %v330, %v1523
    %v1525 = vand.u32 %v1524, 4294901760
    %1526 = vmatpush.msra.mxu0 %v1525
    %v1527 = vand.u32 %v329, 4294901760
    %v1528 = vsub.f32 %v329, %v1527
    %v1529 = vand.u32 %v1528, 4294901760
    %1530 = vmatpush.msra.mxu0 %v1529
    %v1531 = vand.u32 %v328, 4294901760
    %v1532 = vsub.f32 %v328, %v1531
    %v1533 = vand.u32 %v1532, 4294901760
    %1534 = vmatpush.msra.mxu0 %v1533
    %v1535 = vand.u32 %v327, 4294901760
    %v1536 = vsub.f32 %v327, %v1535
    %v1537 = vand.u32 %v1536, 4294901760
    %1538 = vmatpush.msra.mxu0 %v1537
    %v1539 = vand.u32 %v326, 4294901760
    %v1540 = vsub.f32 %v326, %v1539
    %v1541 = vand.u32 %v1540, 4294901760
    %1542 = vmatpush.msra.mxu0 %v1541
    %v1543 = vand.u32 %v325, 4294901760
    %v1544 = vsub.f32 %v325, %v1543
    %v1545 = vand.u32 %v1544, 4294901760
    %1546 = vmatpush.msra.mxu0 %v1545
    %v1547 = vand.u32 %v324, 4294901760
    %v1548 = vsub.f32 %v324, %v1547
    %v1549 = vand.u32 %v1548, 4294901760
    %1550 = vmatpush.msra.mxu0 %v1549
    %v1551 = vand.u32 %v323, 4294901760
    %v1552 = vsub.f32 %v323, %v1551
    %v1553 = vand.u32 %v1552, 4294901760
    %1554 = vmatpush.msra.mxu0 %v1553
    %v1555 = vand.u32 %v322, 4294901760
    %v1556 = vsub.f32 %v322, %v1555
    %v1557 = vand.u32 %v1556, 4294901760
    %1558 = vmatpush.msra.mxu0 %v1557
    %v1559 = vand.u32 %v321, 4294901760
    %v1560 = vsub.f32 %v321, %v1559
    %v1561 = vand.u32 %v1560, 4294901760
    %1562 = vmatpush.msra.mxu0 %v1561
    %v1563 = vand.u32 %v320, 4294901760
    %v1564 = vsub.f32 %v320, %v1563
    %v1565 = vand.u32 %v1564, 4294901760
    %1566 = vmatpush.msra.mxu0 %v1565
    %v1567 = vand.u32 %v319, 4294901760
    %v1568 = vsub.f32 %v319, %v1567
    %v1569 = vand.u32 %v1568, 4294901760
    %1570 = vmatpush.msra.mxu0 %v1569
    %v1571 = vand.u32 %v283, 4294901760
    %1572 = vmatmul.f32.gmra.mxu0 %v1571
    %v1573 = vpop.f32.mrf.mxu0
    %v1574 = vadd.f32 %v1487, %v1573
    %v1575 = vand.u32 %v284, 4294901760
    %1576 = vmatmul.f32.gmra.mxu0 %v1575
    %v1577 = vpop.f32.mrf.mxu0
    %v1578 = vadd.f32 %v1493, %v1577
    %v1579 = vand.u32 %v285, 4294901760
    %1580 = vmatmul.f32.gmra.mxu0 %v1579
    %v1581 = vpop.f32.mrf.mxu0
    %v1582 = vadd.f32 %v1499, %v1581
    %v1583 = vand.u32 %v286, 4294901760
    %1584 = vmatmul.f32.gmra.mxu0 %v1583
    %v1585 = vpop.f32.mrf.mxu0
    %v1586 = vadd.f32 %v1505, %v1585
    %1587 = vdwg.mxu0
    %v1588 = vand.u32 %v334, 4294901760
    %1589 = vmatpush.msra.mxu0 %v1588
    %v1590 = vand.u32 %v333, 4294901760
    %1591 = vmatpush.msra.mxu0 %v1590
    %v1592 = vand.u32 %v332, 4294901760
    %1593 = vmatpush.msra.mxu0 %v1592
    %v1594 = vand.u32 %v331, 4294901760
    %1595 = vmatpush.msra.mxu0 %v1594
    %v1596 = vand.u32 %v330, 4294901760
    %1597 = vmatpush.msra.mxu0 %v1596
    %v1598 = vand.u32 %v329, 4294901760
    %1599 = vmatpush.msra.mxu0 %v1598
    %v1600 = vand.u32 %v328, 4294901760
    %1601 = vmatpush.msra.mxu0 %v1600
    %v1602 = vand.u32 %v327, 4294901760
    %1603 = vmatpush.msra.mxu0 %v1602
    %v1604 = vand.u32 %v326, 4294901760
    %1605 = vmatpush.msra.mxu0 %v1604
    %v1606 = vand.u32 %v325, 4294901760
    %1607 = vmatpush.msra.mxu0 %v1606
    %v1608 = vand.u32 %v324, 4294901760
    %1609 = vmatpush.msra.mxu0 %v1608
    %v1610 = vand.u32 %v323, 4294901760
    %1611 = vmatpush.msra.mxu0 %v1610
    %v1612 = vand.u32 %v322, 4294901760
    %1613 = vmatpush.msra.mxu0 %v1612
    %v1614 = vand.u32 %v321, 4294901760
    %1615 = vmatpush.msra.mxu0 %v1614
    %v1616 = vand.u32 %v320, 4294901760
    %1617 = vmatpush.msra.mxu0 %v1616
    %v1618 = vand.u32 %v319, 4294901760
    %1619 = vmatpush.msra.mxu0 %v1618
    %v1620 = vand.u32 %v283, 4294901760
    %1621 = vmatmul.f32.gmra.mxu0 %v1620
    %v1622 = vpop.f32.mrf.mxu0
    %v1623 = vadd.f32 %v1574, %v1622
    %v1624 = vand.u32 %v284, 4294901760
    %1625 = vmatmul.f32.gmra.mxu0 %v1624
    %v1626 = vpop.f32.mrf.mxu0
    %v1627 = vadd.f32 %v1578, %v1626
    %v1628 = vand.u32 %v285, 4294901760
    %1629 = vmatmul.f32.gmra.mxu0 %v1628
    %v1630 = vpop.f32.mrf.mxu0
    %v1631 = vadd.f32 %v1582, %v1630
    %v1632 = vand.u32 %v286, 4294901760
    %1633 = vmatmul.f32.gmra.mxu0 %v1632
    %v1634 = vpop.f32.mrf.mxu0
    %v1635 = vadd.f32 %v1586, %v1634
    %1636 = vdwg.mxu0
    %v1637 = vadd.f32 %v1623, %v1627
    %v1638 = vrot.slane %v1637, 4
    %v1639 = vadd.f32 %v1637, %v1638
    %v1640 = vrot.slane %v1639, 2
    %v1641 = vadd.f32 %v1639, %v1640
    %v1642 = vrot.slane %v1641, 1
    %v1643 = vadd.f32 %v1641, %v1642
    %1644 = vrot.lane.b32.xlu0 %v1643, 8
    %v1645 = vpop.permute.xlu0 %1644
    %v1646 = vadd.f32 %v1643, %v1645
    %1647 = vrot.lane.b32.xlu0 %v1646, 16
    %v1648 = vpop.permute.xlu0 %1647
    %v1649 = vadd.f32 %v1646, %v1648
    %1650 = vrot.lane.b32.xlu0 %v1649, 32
    %v1651 = vpop.permute.xlu0 %1650
    %v1652 = vadd.f32 %v1649, %v1651
    %1653 = vrot.lane.b32.xlu0 %v1652, 64
    %v1654 = vpop.permute.xlu0 %1653
    %v1655 = vadd.f32 %v1652, %v1654
    %v1656 = vperm.slane %v1655, 0
    %v1657 = vadd.f32 %v1631, %v1635
    %v1658 = vrot.slane %v1657, 4
    %v1659 = vadd.f32 %v1657, %v1658
    %v1660 = vrot.slane %v1659, 2
    %v1661 = vadd.f32 %v1659, %v1660
    %v1662 = vrot.slane %v1661, 1
    %v1663 = vadd.f32 %v1661, %v1662
    %1664 = vrot.lane.b32.xlu0 %v1663, 8
    %v1665 = vpop.permute.xlu0 %1664
    %v1666 = vadd.f32 %v1663, %v1665
    %1667 = vrot.lane.b32.xlu0 %v1666, 16
    %v1668 = vpop.permute.xlu0 %1667
    %v1669 = vadd.f32 %v1666, %v1668
    %1670 = vrot.lane.b32.xlu0 %v1669, 32
    %v1671 = vpop.permute.xlu0 %1670
    %v1672 = vadd.f32 %v1669, %v1671
    %1673 = vrot.lane.b32.xlu0 %v1672, 64
    %v1674 = vpop.permute.xlu0 %1673
    %v1675 = vadd.f32 %v1672, %v1674
    %v1676 = vperm.slane %v1675, 0
    %v1677 = vmul.f32 %v1656, 0.00390625
    %v1678 = vmul.f32 %v1676, 0.00390625
    %v1679 = vsub.f32 %v1623, %v1677
    %v1680 = vsub.f32 %v1627, %v1677
    %v1681 = vsub.f32 %v1631, %v1678
    %v1682 = vsub.f32 %v1635, %v1678
    %v1683 = vmul.f32 %v1679, %v1679
    %v1684 = vmul.f32 %v1680, %v1680
    %v1685 = vmul.f32 %v1681, %v1681
    %v1686 = vmul.f32 %v1682, %v1682
    %v1687 = vadd.f32 %v1683, %v1684
    %v1688 = vrot.slane %v1687, 4
    %v1689 = vadd.f32 %v1687, %v1688
    %v1690 = vrot.slane %v1689, 2
    %v1691 = vadd.f32 %v1689, %v1690
    %v1692 = vrot.slane %v1691, 1
    %v1693 = vadd.f32 %v1691, %v1692
    %1694 = vrot.lane.b32.xlu0 %v1693, 8
    %v1695 = vpop.permute.xlu0 %1694
    %v1696 = vadd.f32 %v1693, %v1695
    %1697 = vrot.lane.b32.xlu0 %v1696, 16
    %v1698 = vpop.permute.xlu0 %1697
    %v1699 = vadd.f32 %v1696, %v1698
    %1700 = vrot.lane.b32.xlu0 %v1699, 32
    %v1701 = vpop.permute.xlu0 %1700
    %v1702 = vadd.f32 %v1699, %v1701
    %1703 = vrot.lane.b32.xlu0 %v1702, 64
    %v1704 = vpop.permute.xlu0 %1703
    %v1705 = vadd.f32 %v1702, %v1704
    %v1706 = vperm.slane %v1705, 0
    %v1707 = vadd.f32 %v1685, %v1686
    %v1708 = vrot.slane %v1707, 4
    %v1709 = vadd.f32 %v1707, %v1708
    %v1710 = vrot.slane %v1709, 2
    %v1711 = vadd.f32 %v1709, %v1710
    %v1712 = vrot.slane %v1711, 1
    %v1713 = vadd.f32 %v1711, %v1712
    %1714 = vrot.lane.b32.xlu0 %v1713, 8
    %v1715 = vpop.permute.xlu0 %1714
    %v1716 = vadd.f32 %v1713, %v1715
    %1717 = vrot.lane.b32.xlu0 %v1716, 16
    %v1718 = vpop.permute.xlu0 %1717
    %v1719 = vadd.f32 %v1716, %v1718
    %1720 = vrot.lane.b32.xlu0 %v1719, 32
    %v1721 = vpop.permute.xlu0 %1720
    %v1722 = vadd.f32 %v1719, %v1721
    %1723 = vrot.lane.b32.xlu0 %v1722, 64
    %v1724 = vpop.permute.xlu0 %1723
    %v1725 = vadd.f32 %v1722, %v1724
    %v1726 = vperm.slane %v1725, 0
    %v1727 = vmul.f32 %v1706, 0.00390625
    %v1728 = vmul.f32 %v1726, 0.00390625
    %v1729 = vadd.f32 %v1727, 1e-05
    %v1730 = vadd.f32 %v1728, 1e-05
    %v1731 = vrsqrt.pop %v1729
    %v1732 = vmul.f32 %v1731, %v1729
    %v1733 = vmul.f32 %v1732, %v1731
    %v1734 = vmul.f32 0.5, %v1733
    %v1735 = vsub.f32 1.5, %v1734
    %v1736 = vmul.f32 %v1731, %v1735
    %vm1737 = vweird.f32 %v1729
    %vm1738 = vweird.f32 %v1731
    %vm1739 = vmor %vm1737, %vm1738
    %v1740 = vsel %vm1739, %v1731, %v1736
    %v1741 = vrsqrt.pop %v1730
    %v1742 = vmul.f32 %v1741, %v1730
    %v1743 = vmul.f32 %v1742, %v1741
    %v1744 = vmul.f32 0.5, %v1743
    %v1745 = vsub.f32 1.5, %v1744
    %v1746 = vmul.f32 %v1741, %v1745
    %vm1747 = vweird.f32 %v1730
    %vm1748 = vweird.f32 %v1741
    %vm1749 = vmor %vm1747, %vm1748
    %v1750 = vsel %vm1749, %v1741, %v1746
    %v1751 = vmul.f32 %v1679, %v1740
    %v1752 = vmul.f32 %v1680, %v1740
    %v1753 = vmul.f32 %v1681, %v1750
    %v1754 = vmul.f32 %v1682, %v1750
    %v1755 = vmax.f32 %v1751, 0.0
    %v1756 = vmax.f32 %v1752, 0.0
    %v1757 = vmax.f32 %v1753, 0.0
    %v1758 = vmax.f32 %v1754, 0.0
    %v1763 = vrot.slane %v1755, 7
    %v1764 = vrot.slane %v1756, 7
    %v1765 = vsel %vm192, %v1763, %v1764
    %v1766 = vrot.slane %v1757, 7
    %v1767 = vsel %vm192, %v1764, %v1766
    %v1768 = vrot.slane %v1758, 7
    %v1769 = vsel %vm192, %v1766, %v1768
    %v1774 = vsel %vm192, 0.0, %v1763
    %v1775 = vrot.slane %v1755, 1
    %v1776 = vrot.slane %v1756, 1
    %v1777 = vsel %vm205, %v1775, %v1776
    %v1778 = vrot.slane %v1757, 1
    %v1779 = vsel %vm205, %v1776, %v1778
    %v1780 = vrot.slane %v1758, 1
    %v1781 = vsel %vm205, %v1778, %v1780
    %v1786 = vsel %vm205, %v1780, 0.0
    %v1787 = vsel %vm271, 0.0, %v1774
    %v1788 = vsel %vm272, 0.0, %v1765
    %v1789 = vsel %vm273, 0.0, %v1767
    %v1790 = vsel %vm274, 0.0, %v1769
    %v1791 = vsel %vm279, 0.0, %v1777
    %v1792 = vsel %vm280, 0.0, %v1779
    %v1793 = vsel %vm281, 0.0, %v1781
    %v1794 = vsel %vm282, 0.0, %v1786
    %v1795 = vld [vmem:[#allocation7] sm:$0xff]
    %v1796 = vld [vmem:[#allocation7 + $0x8] sm:$0xff]
    %v1797 = vld [vmem:[#allocation7 + $0x10] sm:$0xff]
    %v1798 = vld [vmem:[#allocation7 + $0x18] sm:$0xff]
    %v1799 = vld [vmem:[#allocation7 + $0x20] sm:$0xff]
    %v1800 = vld [vmem:[#allocation7 + $0x28] sm:$0xff]
    %v1801 = vld [vmem:[#allocation7 + $0x30] sm:$0xff]
    %v1802 = vld [vmem:[#allocation7 + $0x38] sm:$0xff]
    %v1803 = vld [vmem:[#allocation7 + $0x40] sm:$0xff]
    %v1804 = vld [vmem:[#allocation7 + $0x48] sm:$0xff]
    %v1805 = vld [vmem:[#allocation7 + $0x50] sm:$0xff]
    %v1806 = vld [vmem:[#allocation7 + $0x58] sm:$0xff]
    %v1807 = vld [vmem:[#allocation7 + $0x60] sm:$0xff]
    %v1808 = vld [vmem:[#allocation7 + $0x68] sm:$0xff]
    %v1809 = vld [vmem:[#allocation7 + $0x70] sm:$0xff]
    %v1810 = vld [vmem:[#allocation7 + $0x78] sm:$0xff]
    %v1811 = vld [vmem:[#allocation7 + $0x80] sm:$0xff]
    %v1812 = vld [vmem:[#allocation7 + $0x88] sm:$0xff]
    %v1813 = vld [vmem:[#allocation7 + $0x90] sm:$0xff]
    %v1814 = vld [vmem:[#allocation7 + $0x98] sm:$0xff]
    %v1815 = vld [vmem:[#allocation7 + $0xa0] sm:$0xff]
    %v1816 = vld [vmem:[#allocation7 + $0xa8] sm:$0xff]
    %v1817 = vld [vmem:[#allocation7 + $0xb0] sm:$0xff]
    %v1818 = vld [vmem:[#allocation7 + $0xb8] sm:$0xff]
    %v1819 = vld [vmem:[#allocation7 + $0xc0] sm:$0xff]
    %v1820 = vld [vmem:[#allocation7 + $0xc8] sm:$0xff]
    %v1821 = vld [vmem:[#allocation7 + $0xd0] sm:$0xff]
    %v1822 = vld [vmem:[#allocation7 + $0xd8] sm:$0xff]
    %v1823 = vld [vmem:[#allocation7 + $0xe0] sm:$0xff]
    %v1824 = vld [vmem:[#allocation7 + $0xe8] sm:$0xff]
    %v1825 = vld [vmem:[#allocation7 + $0xf0] sm:$0xff]
    %v1826 = vld [vmem:[#allocation7 + $0xf8] sm:$0xff]
    %v1827 = vld [vmem:[#allocation7 + $0x100] sm:$0xff]
    %v1828 = vld [vmem:[#allocation7 + $0x108] sm:$0xff]
    %v1829 = vld [vmem:[#allocation7 + $0x110] sm:$0xff]
    %v1830 = vld [vmem:[#allocation7 + $0x118] sm:$0xff]
    %v1831 = vld [vmem:[#allocation7 + $0x120] sm:$0xff]
    %v1832 = vld [vmem:[#allocation7 + $0x128] sm:$0xff]
    %v1833 = vld [vmem:[#allocation7 + $0x130] sm:$0xff]
    %v1834 = vld [vmem:[#allocation7 + $0x138] sm:$0xff]
    %v1835 = vld [vmem:[#allocation7 + $0x140] sm:$0xff]
    %v1836 = vld [vmem:[#allocation7 + $0x148] sm:$0xff]
    %v1837 = vld [vmem:[#allocation7 + $0x150] sm:$0xff]
    %v1838 = vld [vmem:[#allocation7 + $0x158] sm:$0xff]
    %v1839 = vld [vmem:[#allocation7 + $0x160] sm:$0xff]
    %v1840 = vld [vmem:[#allocation7 + $0x168] sm:$0xff]
    %v1841 = vld [vmem:[#allocation7 + $0x170] sm:$0xff]
    %v1842 = vld [vmem:[#allocation7 + $0x178] sm:$0xff]
    %v1843 = vand.u32 %v1810, 4294901760
    %1844 = vmatpush.msra.mxu0 %v1843
    %v1845 = vand.u32 %v1809, 4294901760
    %1846 = vmatpush.msra.mxu0 %v1845
    %v1847 = vand.u32 %v1808, 4294901760
    %1848 = vmatpush.msra.mxu0 %v1847
    %v1849 = vand.u32 %v1807, 4294901760
    %1850 = vmatpush.msra.mxu0 %v1849
    %v1851 = vand.u32 %v1806, 4294901760
    %1852 = vmatpush.msra.mxu0 %v1851
    %v1853 = vand.u32 %v1805, 4294901760
    %1854 = vmatpush.msra.mxu0 %v1853
    %v1855 = vand.u32 %v1804, 4294901760
    %1856 = vmatpush.msra.mxu0 %v1855
    %v1857 = vand.u32 %v1803, 4294901760
    %1858 = vmatpush.msra.mxu0 %v1857
    %v1859 = vand.u32 %v1802, 4294901760
    %1860 = vmatpush.msra.mxu0 %v1859
    %v1861 = vand.u32 %v1801, 4294901760
    %1862 = vmatpush.msra.mxu0 %v1861
    %v1863 = vand.u32 %v1800, 4294901760
    %1864 = vmatpush.msra.mxu0 %v1863
    %v1865 = vand.u32 %v1799, 4294901760
    %1866 = vmatpush.msra.mxu0 %v1865
    %v1867 = vand.u32 %v1798, 4294901760
    %1868 = vmatpush.msra.mxu0 %v1867
    %v1869 = vand.u32 %v1797, 4294901760
    %1870 = vmatpush.msra.mxu0 %v1869
    %v1871 = vand.u32 %v1796, 4294901760
    %1872 = vmatpush.msra.mxu0 %v1871
    %v1873 = vand.u32 %v1795, 4294901760
    %1874 = vmatpush.msra.mxu0 %v1873
    %v1875 = vand.u32 %v1787, 4294901760
    %v1876 = vsub.f32 %v1787, %v1875
    %v1877 = vand.u32 %v1876, 4294901760
    %v1878 = vsub.f32 %v1876, %v1877
    %v1879 = vand.u32 %v1878, 4294901760
    %1880 = vmatmul.f32.gmra.mxu0 %v1879
    %v1881 = vpop.f32.mrf.mxu0
    %v1882 = vadd.f32 %v62, %v1881
    %v1883 = vand.u32 %v1788, 4294901760
    %v1884 = vsub.f32 %v1788, %v1883
    %v1885 = vand.u32 %v1884, 4294901760
    %v1886 = vsub.f32 %v1884, %v1885
    %v1887 = vand.u32 %v1886, 4294901760
    %1888 = vmatmul.f32.gmra.mxu0 %v1887
    %v1889 = vpop.f32.mrf.mxu0
    %v1890 = vadd.f32 %v63, %v1889
    %v1891 = vand.u32 %v1789, 4294901760
    %v1892 = vsub.f32 %v1789, %v1891
    %v1893 = vand.u32 %v1892, 4294901760
    %v1894 = vsub.f32 %v1892, %v1893
    %v1895 = vand.u32 %v1894, 4294901760
    %1896 = vmatmul.f32.gmra.mxu0 %v1895
    %v1897 = vpop.f32.mrf.mxu0
    %v1898 = vadd.f32 %v64, %v1897
    %v1899 = vand.u32 %v1790, 4294901760
    %v1900 = vsub.f32 %v1790, %v1899
    %v1901 = vand.u32 %v1900, 4294901760
    %v1902 = vsub.f32 %v1900, %v1901
    %v1903 = vand.u32 %v1902, 4294901760
    %1904 = vmatmul.f32.gmra.mxu0 %v1903
    %v1905 = vpop.f32.mrf.mxu0
    %v1906 = vadd.f32 %v65, %v1905
    %1907 = vdwg.mxu0
    %v1908 = vand.u32 %v1810, 4294901760
    %v1909 = vsub.f32 %v1810, %v1908
    %v1910 = vand.u32 %v1909, 4294901760
    %v1911 = vsub.f32 %v1909, %v1910
    %v1912 = vand.u32 %v1911, 4294901760
    %1913 = vmatpush.msra.mxu0 %v1912
    %v1914 = vand.u32 %v1809, 4294901760
    %v1915 = vsub.f32 %v1809, %v1914
    %v1916 = vand.u32 %v1915, 4294901760
    %v1917 = vsub.f32 %v1915, %v1916
    %v1918 = vand.u32 %v1917, 4294901760
    %1919 = vmatpush.msra.mxu0 %v1918
    %v1920 = vand.u32 %v1808, 4294901760
    %v1921 = vsub.f32 %v1808, %v1920
    %v1922 = vand.u32 %v1921, 4294901760
    %v1923 = vsub.f32 %v1921, %v1922
    %v1924 = vand.u32 %v1923, 4294901760
    %1925 = vmatpush.msra.mxu0 %v1924
    %v1926 = vand.u32 %v1807, 4294901760
    %v1927 = vsub.f32 %v1807, %v1926
    %v1928 = vand.u32 %v1927, 4294901760
    %v1929 = vsub.f32 %v1927, %v1928
    %v1930 = vand.u32 %v1929, 4294901760
    %1931 = vmatpush.msra.mxu0 %v1930
    %v1932 = vand.u32 %v1806, 4294901760
    %v1933 = vsub.f32 %v1806, %v1932
    %v1934 = vand.u32 %v1933, 4294901760
    %v1935 = vsub.f32 %v1933, %v1934
    %v1936 = vand.u32 %v1935, 4294901760
    %1937 = vmatpush.msra.mxu0 %v1936
    %v1938 = vand.u32 %v1805, 4294901760
    %v1939 = vsub.f32 %v1805, %v1938
    %v1940 = vand.u32 %v1939, 4294901760
    %v1941 = vsub.f32 %v1939, %v1940
    %v1942 = vand.u32 %v1941, 4294901760
    %1943 = vmatpush.msra.mxu0 %v1942
    %v1944 = vand.u32 %v1804, 4294901760
    %v1945 = vsub.f32 %v1804, %v1944
    %v1946 = vand.u32 %v1945, 4294901760
    %v1947 = vsub.f32 %v1945, %v1946
    %v1948 = vand.u32 %v1947, 4294901760
    %1949 = vmatpush.msra.mxu0 %v1948
    %v1950 = vand.u32 %v1803, 4294901760
    %v1951 = vsub.f32 %v1803, %v1950
    %v1952 = vand.u32 %v1951, 4294901760
    %v1953 = vsub.f32 %v1951, %v1952
    %v1954 = vand.u32 %v1953, 4294901760
    %1955 = vmatpush.msra.mxu0 %v1954
    %v1956 = vand.u32 %v1802, 4294901760
    %v1957 = vsub.f32 %v1802, %v1956
    %v1958 = vand.u32 %v1957, 4294901760
    %v1959 = vsub.f32 %v1957, %v1958
    %v1960 = vand.u32 %v1959, 4294901760
    %1961 = vmatpush.msra.mxu0 %v1960
    %v1962 = vand.u32 %v1801, 4294901760
    %v1963 = vsub.f32 %v1801, %v1962
    %v1964 = vand.u32 %v1963, 4294901760
    %v1965 = vsub.f32 %v1963, %v1964
    %v1966 = vand.u32 %v1965, 4294901760
    %1967 = vmatpush.msra.mxu0 %v1966
    %v1968 = vand.u32 %v1800, 4294901760
    %v1969 = vsub.f32 %v1800, %v1968
    %v1970 = vand.u32 %v1969, 4294901760
    %v1971 = vsub.f32 %v1969, %v1970
    %v1972 = vand.u32 %v1971, 4294901760
    %1973 = vmatpush.msra.mxu0 %v1972
    %v1974 = vand.u32 %v1799, 4294901760
    %v1975 = vsub.f32 %v1799, %v1974
    %v1976 = vand.u32 %v1975, 4294901760
    %v1977 = vsub.f32 %v1975, %v1976
    %v1978 = vand.u32 %v1977, 4294901760
    %1979 = vmatpush.msra.mxu0 %v1978
    %v1980 = vand.u32 %v1798, 4294901760
    %v1981 = vsub.f32 %v1798, %v1980
    %v1982 = vand.u32 %v1981, 4294901760
    %v1983 = vsub.f32 %v1981, %v1982
    %v1984 = vand.u32 %v1983, 4294901760
    %1985 = vmatpush.msra.mxu0 %v1984
    %v1986 = vand.u32 %v1797, 4294901760
    %v1987 = vsub.f32 %v1797, %v1986
    %v1988 = vand.u32 %v1987, 4294901760
    %v1989 = vsub.f32 %v1987, %v1988
    %v1990 = vand.u32 %v1989, 4294901760
    %1991 = vmatpush.msra.mxu0 %v1990
    %v1992 = vand.u32 %v1796, 4294901760
    %v1993 = vsub.f32 %v1796, %v1992
    %v1994 = vand.u32 %v1993, 4294901760
    %v1995 = vsub.f32 %v1993, %v1994
    %v1996 = vand.u32 %v1995, 4294901760
    %1997 = vmatpush.msra.mxu0 %v1996
    %v1998 = vand.u32 %v1795, 4294901760
    %v1999 = vsub.f32 %v1795, %v1998
    %v2000 = vand.u32 %v1999, 4294901760
    %v2001 = vsub.f32 %v1999, %v2000
    %v2002 = vand.u32 %v2001, 4294901760
    %2003 = vmatpush.msra.mxu0 %v2002
    %v2004 = vand.u32 %v1787, 4294901760
    %2005 = vmatmul.f32.gmra.mxu0 %v2004
    %v2006 = vpop.f32.mrf.mxu0
    %v2007 = vadd.f32 %v1882, %v2006
    %v2008 = vand.u32 %v1788, 4294901760
    %2009 = vmatmul.f32.gmra.mxu0 %v2008
    %v2010 = vpop.f32.mrf.mxu0
    %v2011 = vadd.f32 %v1890, %v2010
    %v2012 = vand.u32 %v1789, 4294901760
    %2013 = vmatmul.f32.gmra.mxu0 %v2012
    %v2014 = vpop.f32.mrf.mxu0
    %v2015 = vadd.f32 %v1898, %v2014
    %v2016 = vand.u32 %v1790, 4294901760
    %2017 = vmatmul.f32.gmra.mxu0 %v2016
    %v2018 = vpop.f32.mrf.mxu0
    %v2019 = vadd.f32 %v1906, %v2018
    %2020 = vdwg.mxu0
    %v2021 = vand.u32 %v1810, 4294901760
    %v2022 = vsub.f32 %v1810, %v2021
    %2023 = vmatpush.msra.mxu0 %v2022
    %v2024 = vand.u32 %v1809, 4294901760
    %v2025 = vsub.f32 %v1809, %v2024
    %2026 = vmatpush.msra.mxu0 %v2025
    %v2027 = vand.u32 %v1808, 4294901760
    %v2028 = vsub.f32 %v1808, %v2027
    %2029 = vmatpush.msra.mxu0 %v2028
    %v2030 = vand.u32 %v1807, 4294901760
    %v2031 = vsub.f32 %v1807, %v2030
    %2032 = vmatpush.msra.mxu0 %v2031
    %v2033 = vand.u32 %v1806, 4294901760
    %v2034 = vsub.f32 %v1806, %v2033
    %2035 = vmatpush.msra.mxu0 %v2034
    %v2036 = vand.u32 %v1805, 4294901760
    %v2037 = vsub.f32 %v1805, %v2036
    %2038 = vmatpush.msra.mxu0 %v2037
    %v2039 = vand.u32 %v1804, 4294901760
    %v2040 = vsub.f32 %v1804, %v2039
    %2041 = vmatpush.msra.mxu0 %v2040
    %v2042 = vand.u32 %v1803, 4294901760
    %v2043 = vsub.f32 %v1803, %v2042
    %2044 = vmatpush.msra.mxu0 %v2043
    %v2045 = vand.u32 %v1802, 4294901760
    %v2046 = vsub.f32 %v1802, %v2045
    %2047 = vmatpush.msra.mxu0 %v2046
    %v2048 = vand.u32 %v1801, 4294901760
    %v2049 = vsub.f32 %v1801, %v2048
    %2050 = vmatpush.msra.mxu0 %v2049
    %v2051 = vand.u32 %v1800, 4294901760
    %v2052 = vsub.f32 %v1800, %v2051
    %2053 = vmatpush.msra.mxu0 %v2052
    %v2054 = vand.u32 %v1799, 4294901760
    %v2055 = vsub.f32 %v1799, %v2054
    %2056 = vmatpush.msra.mxu0 %v2055
    %v2057 = vand.u32 %v1798, 4294901760
    %v2058 = vsub.f32 %v1798, %v2057
    %2059 = vmatpush.msra.mxu0 %v2058
    %v2060 = vand.u32 %v1797, 4294901760
    %v2061 = vsub.f32 %v1797, %v2060
    %2062 = vmatpush.msra.mxu0 %v2061
    %v2063 = vand.u32 %v1796, 4294901760
    %v2064 = vsub.f32 %v1796, %v2063
    %2065 = vmatpush.msra.mxu0 %v2064
    %v2066 = vand.u32 %v1795, 4294901760
    %v2067 = vsub.f32 %v1795, %v2066
    %2068 = vmatpush.msra.mxu0 %v2067
    %v2069 = vand.u32 %v1787, 4294901760
    %v2070 = vsub.f32 %v1787, %v2069
    %2071 = vmatmul.f32.gmra.mxu0 %v2070
    %v2072 = vpop.f32.mrf.mxu0
    %v2073 = vadd.f32 %v2007, %v2072
    %v2074 = vand.u32 %v1788, 4294901760
    %v2075 = vsub.f32 %v1788, %v2074
    %2076 = vmatmul.f32.gmra.mxu0 %v2075
    %v2077 = vpop.f32.mrf.mxu0
    %v2078 = vadd.f32 %v2011, %v2077
    %v2079 = vand.u32 %v1789, 4294901760
    %v2080 = vsub.f32 %v1789, %v2079
    %2081 = vmatmul.f32.gmra.mxu0 %v2080
    %v2082 = vpop.f32.mrf.mxu0
    %v2083 = vadd.f32 %v2015, %v2082
    %v2084 = vand.u32 %v1790, 4294901760
    %v2085 = vsub.f32 %v1790, %v2084
    %2086 = vmatmul.f32.gmra.mxu0 %v2085
    %v2087 = vpop.f32.mrf.mxu0
    %v2088 = vadd.f32 %v2019, %v2087
    %2089 = vdwg.mxu0
    %v2090 = vand.u32 %v1810, 4294901760
    %2091 = vmatpush.msra.mxu0 %v2090
    %v2092 = vand.u32 %v1809, 4294901760
    %2093 = vmatpush.msra.mxu0 %v2092
    %v2094 = vand.u32 %v1808, 4294901760
    %2095 = vmatpush.msra.mxu0 %v2094
    %v2096 = vand.u32 %v1807, 4294901760
    %2097 = vmatpush.msra.mxu0 %v2096
    %v2098 = vand.u32 %v1806, 4294901760
    %2099 = vmatpush.msra.mxu0 %v2098
    %v2100 = vand.u32 %v1805, 4294901760
    %2101 = vmatpush.msra.mxu0 %v2100
    %v2102 = vand.u32 %v1804, 4294901760
    %2103 = vmatpush.msra.mxu0 %v2102
    %v2104 = vand.u32 %v1803, 4294901760
    %2105 = vmatpush.msra.mxu0 %v2104
    %v2106 = vand.u32 %v1802, 4294901760
    %2107 = vmatpush.msra.mxu0 %v2106
    %v2108 = vand.u32 %v1801, 4294901760
    %2109 = vmatpush.msra.mxu0 %v2108
    %v2110 = vand.u32 %v1800, 4294901760
    %2111 = vmatpush.msra.mxu0 %v2110
    %v2112 = vand.u32 %v1799, 4294901760
    %2113 = vmatpush.msra.mxu0 %v2112
    %v2114 = vand.u32 %v1798, 4294901760
    %2115 = vmatpush.msra.mxu0 %v2114
    %v2116 = vand.u32 %v1797, 4294901760
    %2117 = vmatpush.msra.mxu0 %v2116
    %v2118 = vand.u32 %v1796, 4294901760
    %2119 = vmatpush.msra.mxu0 %v2118
    %v2120 = vand.u32 %v1795, 4294901760
    %2121 = vmatpush.msra.mxu0 %v2120
    %v2122 = vand.u32 %v1787, 4294901760
    %v2123 = vsub.f32 %v1787, %v2122
    %v2124 = vand.u32 %v2123, 4294901760
    %2125 = vmatmul.f32.gmra.mxu0 %v2124
    %v2126 = vpop.f32.mrf.mxu0
    %v2127 = vadd.f32 %v2073, %v2126
    %v2128 = vand.u32 %v1788, 4294901760
    %v2129 = vsub.f32 %v1788, %v2128
    %v2130 = vand.u32 %v2129, 4294901760
    %2131 = vmatmul.f32.gmra.mxu0 %v2130
    %v2132 = vpop.f32.mrf.mxu0
    %v2133 = vadd.f32 %v2078, %v2132
    %v2134 = vand.u32 %v1789, 4294901760
    %v2135 = vsub.f32 %v1789, %v2134
    %v2136 = vand.u32 %v2135, 4294901760
    %2137 = vmatmul.f32.gmra.mxu0 %v2136
    %v2138 = vpop.f32.mrf.mxu0
    %v2139 = vadd.f32 %v2083, %v2138
    %v2140 = vand.u32 %v1790, 4294901760
    %v2141 = vsub.f32 %v1790, %v2140
    %v2142 = vand.u32 %v2141, 4294901760
    %2143 = vmatmul.f32.gmra.mxu0 %v2142
    %v2144 = vpop.f32.mrf.mxu0
    %v2145 = vadd.f32 %v2088, %v2144
    %2146 = vdwg.mxu0
    %v2147 = vand.u32 %v1810, 4294901760
    %v2148 = vsub.f32 %v1810, %v2147
    %v2149 = vand.u32 %v2148, 4294901760
    %2150 = vmatpush.msra.mxu0 %v2149
    %v2151 = vand.u32 %v1809, 4294901760
    %v2152 = vsub.f32 %v1809, %v2151
    %v2153 = vand.u32 %v2152, 4294901760
    %2154 = vmatpush.msra.mxu0 %v2153
    %v2155 = vand.u32 %v1808, 4294901760
    %v2156 = vsub.f32 %v1808, %v2155
    %v2157 = vand.u32 %v2156, 4294901760
    %2158 = vmatpush.msra.mxu0 %v2157
    %v2159 = vand.u32 %v1807, 4294901760
    %v2160 = vsub.f32 %v1807, %v2159
    %v2161 = vand.u32 %v2160, 4294901760
    %2162 = vmatpush.msra.mxu0 %v2161
    %v2163 = vand.u32 %v1806, 4294901760
    %v2164 = vsub.f32 %v1806, %v2163
    %v2165 = vand.u32 %v2164, 4294901760
    %2166 = vmatpush.msra.mxu0 %v2165
    %v2167 = vand.u32 %v1805, 4294901760
    %v2168 = vsub.f32 %v1805, %v2167
    %v2169 = vand.u32 %v2168, 4294901760
    %2170 = vmatpush.msra.mxu0 %v2169
    %v2171 = vand.u32 %v1804, 4294901760
    %v2172 = vsub.f32 %v1804, %v2171
    %v2173 = vand.u32 %v2172, 4294901760
    %2174 = vmatpush.msra.mxu0 %v2173
    %v2175 = vand.u32 %v1803, 4294901760
    %v2176 = vsub.f32 %v1803, %v2175
    %v2177 = vand.u32 %v2176, 4294901760
    %2178 = vmatpush.msra.mxu0 %v2177
    %v2179 = vand.u32 %v1802, 4294901760
    %v2180 = vsub.f32 %v1802, %v2179
    %v2181 = vand.u32 %v2180, 4294901760
    %2182 = vmatpush.msra.mxu0 %v2181
    %v2183 = vand.u32 %v1801, 4294901760
    %v2184 = vsub.f32 %v1801, %v2183
    %v2185 = vand.u32 %v2184, 4294901760
    %2186 = vmatpush.msra.mxu0 %v2185
    %v2187 = vand.u32 %v1800, 4294901760
    %v2188 = vsub.f32 %v1800, %v2187
    %v2189 = vand.u32 %v2188, 4294901760
    %2190 = vmatpush.msra.mxu0 %v2189
    %v2191 = vand.u32 %v1799, 4294901760
    %v2192 = vsub.f32 %v1799, %v2191
    %v2193 = vand.u32 %v2192, 4294901760
    %2194 = vmatpush.msra.mxu0 %v2193
    %v2195 = vand.u32 %v1798, 4294901760
    %v2196 = vsub.f32 %v1798, %v2195
    %v2197 = vand.u32 %v2196, 4294901760
    %2198 = vmatpush.msra.mxu0 %v2197
    %v2199 = vand.u32 %v1797, 4294901760
    %v2200 = vsub.f32 %v1797, %v2199
    %v2201 = vand.u32 %v2200, 4294901760
    %2202 = vmatpush.msra.mxu0 %v2201
    %v2203 = vand.u32 %v1796, 4294901760
    %v2204 = vsub.f32 %v1796, %v2203
    %v2205 = vand.u32 %v2204, 4294901760
    %2206 = vmatpush.msra.mxu0 %v2205
    %v2207 = vand.u32 %v1795, 4294901760
    %v2208 = vsub.f32 %v1795, %v2207
    %v2209 = vand.u32 %v2208, 4294901760
    %2210 = vmatpush.msra.mxu0 %v2209
    %v2211 = vand.u32 %v1787, 4294901760
    %2212 = vmatmul.f32.gmra.mxu0 %v2211
    %v2213 = vpop.f32.mrf.mxu0
    %v2214 = vadd.f32 %v2127, %v2213
    %v2215 = vand.u32 %v1788, 4294901760
    %2216 = vmatmul.f32.gmra.mxu0 %v2215
    %v2217 = vpop.f32.mrf.mxu0
    %v2218 = vadd.f32 %v2133, %v2217
    %v2219 = vand.u32 %v1789, 4294901760
    %2220 = vmatmul.f32.gmra.mxu0 %v2219
    %v2221 = vpop.f32.mrf.mxu0
    %v2222 = vadd.f32 %v2139, %v2221
    %v2223 = vand.u32 %v1790, 4294901760
    %2224 = vmatmul.f32.gmra.mxu0 %v2223
    %v2225 = vpop.f32.mrf.mxu0
    %v2226 = vadd.f32 %v2145, %v2225
    %2227 = vdwg.mxu0
    %v2228 = vand.u32 %v1810, 4294901760
    %2229 = vmatpush.msra.mxu0 %v2228
    %v2230 = vand.u32 %v1809, 4294901760
    %2231 = vmatpush.msra.mxu0 %v2230
    %v2232 = vand.u32 %v1808, 4294901760
    %2233 = vmatpush.msra.mxu0 %v2232
    %v2234 = vand.u32 %v1807, 4294901760
    %2235 = vmatpush.msra.mxu0 %v2234
    %v2236 = vand.u32 %v1806, 4294901760
    %2237 = vmatpush.msra.mxu0 %v2236
    %v2238 = vand.u32 %v1805, 4294901760
    %2239 = vmatpush.msra.mxu0 %v2238
    %v2240 = vand.u32 %v1804, 4294901760
    %2241 = vmatpush.msra.mxu0 %v2240
    %v2242 = vand.u32 %v1803, 4294901760
    %2243 = vmatpush.msra.mxu0 %v2242
    %v2244 = vand.u32 %v1802, 4294901760
    %2245 = vmatpush.msra.mxu0 %v2244
    %v2246 = vand.u32 %v1801, 4294901760
    %2247 = vmatpush.msra.mxu0 %v2246
    %v2248 = vand.u32 %v1800, 4294901760
    %2249 = vmatpush.msra.mxu0 %v2248
    %v2250 = vand.u32 %v1799, 4294901760
    %2251 = vmatpush.msra.mxu0 %v2250
    %v2252 = vand.u32 %v1798, 4294901760
    %2253 = vmatpush.msra.mxu0 %v2252
    %v2254 = vand.u32 %v1797, 4294901760
    %2255 = vmatpush.msra.mxu0 %v2254
    %v2256 = vand.u32 %v1796, 4294901760
    %2257 = vmatpush.msra.mxu0 %v2256
    %v2258 = vand.u32 %v1795, 4294901760
    %2259 = vmatpush.msra.mxu0 %v2258
    %v2260 = vand.u32 %v1787, 4294901760
    %2261 = vmatmul.f32.gmra.mxu0 %v2260
    %v2262 = vpop.f32.mrf.mxu0
    %v2263 = vadd.f32 %v2214, %v2262
    %v2264 = vand.u32 %v1788, 4294901760
    %2265 = vmatmul.f32.gmra.mxu0 %v2264
    %v2266 = vpop.f32.mrf.mxu0
    %v2267 = vadd.f32 %v2218, %v2266
    %v2268 = vand.u32 %v1789, 4294901760
    %2269 = vmatmul.f32.gmra.mxu0 %v2268
    %v2270 = vpop.f32.mrf.mxu0
    %v2271 = vadd.f32 %v2222, %v2270
    %v2272 = vand.u32 %v1790, 4294901760
    %2273 = vmatmul.f32.gmra.mxu0 %v2272
    %v2274 = vpop.f32.mrf.mxu0
    %v2275 = vadd.f32 %v2226, %v2274
    %2276 = vdwg.mxu0
    %v2277 = vand.u32 %v1826, 4294901760
    %2278 = vmatpush.msra.mxu0 %v2277
    %v2279 = vand.u32 %v1825, 4294901760
    %2280 = vmatpush.msra.mxu0 %v2279
    %v2281 = vand.u32 %v1824, 4294901760
    %2282 = vmatpush.msra.mxu0 %v2281
    %v2283 = vand.u32 %v1823, 4294901760
    %2284 = vmatpush.msra.mxu0 %v2283
    %v2285 = vand.u32 %v1822, 4294901760
    %2286 = vmatpush.msra.mxu0 %v2285
    %v2287 = vand.u32 %v1821, 4294901760
    %2288 = vmatpush.msra.mxu0 %v2287
    %v2289 = vand.u32 %v1820, 4294901760
    %2290 = vmatpush.msra.mxu0 %v2289
    %v2291 = vand.u32 %v1819, 4294901760
    %2292 = vmatpush.msra.mxu0 %v2291
    %v2293 = vand.u32 %v1818, 4294901760
    %2294 = vmatpush.msra.mxu0 %v2293
    %v2295 = vand.u32 %v1817, 4294901760
    %2296 = vmatpush.msra.mxu0 %v2295
    %v2297 = vand.u32 %v1816, 4294901760
    %2298 = vmatpush.msra.mxu0 %v2297
    %v2299 = vand.u32 %v1815, 4294901760
    %2300 = vmatpush.msra.mxu0 %v2299
    %v2301 = vand.u32 %v1814, 4294901760
    %2302 = vmatpush.msra.mxu0 %v2301
    %v2303 = vand.u32 %v1813, 4294901760
    %2304 = vmatpush.msra.mxu0 %v2303
    %v2305 = vand.u32 %v1812, 4294901760
    %2306 = vmatpush.msra.mxu0 %v2305
    %v2307 = vand.u32 %v1811, 4294901760
    %2308 = vmatpush.msra.mxu0 %v2307
    %v2309 = vand.u32 %v1755, 4294901760
    %v2310 = vsub.f32 %v1755, %v2309
    %v2311 = vand.u32 %v2310, 4294901760
    %v2312 = vsub.f32 %v2310, %v2311
    %v2313 = vand.u32 %v2312, 4294901760
    %2314 = vmatmul.f32.gmra.mxu0 %v2313
    %v2315 = vpop.f32.mrf.mxu0
    %v2316 = vadd.f32 %v2263, %v2315
    %v2317 = vand.u32 %v1756, 4294901760
    %v2318 = vsub.f32 %v1756, %v2317
    %v2319 = vand.u32 %v2318, 4294901760
    %v2320 = vsub.f32 %v2318, %v2319
    %v2321 = vand.u32 %v2320, 4294901760
    %2322 = vmatmul.f32.gmra.mxu0 %v2321
    %v2323 = vpop.f32.mrf.mxu0
    %v2324 = vadd.f32 %v2267, %v2323
    %v2325 = vand.u32 %v1757, 4294901760
    %v2326 = vsub.f32 %v1757, %v2325
    %v2327 = vand.u32 %v2326, 4294901760
    %v2328 = vsub.f32 %v2326, %v2327
    %v2329 = vand.u32 %v2328, 4294901760
    %2330 = vmatmul.f32.gmra.mxu0 %v2329
    %v2331 = vpop.f32.mrf.mxu0
    %v2332 = vadd.f32 %v2271, %v2331
    %v2333 = vand.u32 %v1758, 4294901760
    %v2334 = vsub.f32 %v1758, %v2333
    %v2335 = vand.u32 %v2334, 4294901760
    %v2336 = vsub.f32 %v2334, %v2335
    %v2337 = vand.u32 %v2336, 4294901760
    %2338 = vmatmul.f32.gmra.mxu0 %v2337
    %v2339 = vpop.f32.mrf.mxu0
    %v2340 = vadd.f32 %v2275, %v2339
    %2341 = vdwg.mxu0
    %v2342 = vand.u32 %v1826, 4294901760
    %v2343 = vsub.f32 %v1826, %v2342
    %v2344 = vand.u32 %v2343, 4294901760
    %v2345 = vsub.f32 %v2343, %v2344
    %v2346 = vand.u32 %v2345, 4294901760
    %2347 = vmatpush.msra.mxu0 %v2346
    %v2348 = vand.u32 %v1825, 4294901760
    %v2349 = vsub.f32 %v1825, %v2348
    %v2350 = vand.u32 %v2349, 4294901760
    %v2351 = vsub.f32 %v2349, %v2350
    %v2352 = vand.u32 %v2351, 4294901760
    %2353 = vmatpush.msra.mxu0 %v2352
    %v2354 = vand.u32 %v1824, 4294901760
    %v2355 = vsub.f32 %v1824, %v2354
    %v2356 = vand.u32 %v2355, 4294901760
    %v2357 = vsub.f32 %v2355, %v2356
    %v2358 = vand.u32 %v2357, 4294901760
    %2359 = vmatpush.msra.mxu0 %v2358
    %v2360 = vand.u32 %v1823, 4294901760
    %v2361 = vsub.f32 %v1823, %v2360
    %v2362 = vand.u32 %v2361, 4294901760
    %v2363 = vsub.f32 %v2361, %v2362
    %v2364 = vand.u32 %v2363, 4294901760
    %2365 = vmatpush.msra.mxu0 %v2364
    %v2366 = vand.u32 %v1822, 4294901760
    %v2367 = vsub.f32 %v1822, %v2366
    %v2368 = vand.u32 %v2367, 4294901760
    %v2369 = vsub.f32 %v2367, %v2368
    %v2370 = vand.u32 %v2369, 4294901760
    %2371 = vmatpush.msra.mxu0 %v2370
    %v2372 = vand.u32 %v1821, 4294901760
    %v2373 = vsub.f32 %v1821, %v2372
    %v2374 = vand.u32 %v2373, 4294901760
    %v2375 = vsub.f32 %v2373, %v2374
    %v2376 = vand.u32 %v2375, 4294901760
    %2377 = vmatpush.msra.mxu0 %v2376
    %v2378 = vand.u32 %v1820, 4294901760
    %v2379 = vsub.f32 %v1820, %v2378
    %v2380 = vand.u32 %v2379, 4294901760
    %v2381 = vsub.f32 %v2379, %v2380
    %v2382 = vand.u32 %v2381, 4294901760
    %2383 = vmatpush.msra.mxu0 %v2382
    %v2384 = vand.u32 %v1819, 4294901760
    %v2385 = vsub.f32 %v1819, %v2384
    %v2386 = vand.u32 %v2385, 4294901760
    %v2387 = vsub.f32 %v2385, %v2386
    %v2388 = vand.u32 %v2387, 4294901760
    %2389 = vmatpush.msra.mxu0 %v2388
    %v2390 = vand.u32 %v1818, 4294901760
    %v2391 = vsub.f32 %v1818, %v2390
    %v2392 = vand.u32 %v2391, 4294901760
    %v2393 = vsub.f32 %v2391, %v2392
    %v2394 = vand.u32 %v2393, 4294901760
    %2395 = vmatpush.msra.mxu0 %v2394
    %v2396 = vand.u32 %v1817, 4294901760
    %v2397 = vsub.f32 %v1817, %v2396
    %v2398 = vand.u32 %v2397, 4294901760
    %v2399 = vsub.f32 %v2397, %v2398
    %v2400 = vand.u32 %v2399, 4294901760
    %2401 = vmatpush.msra.mxu0 %v2400
    %v2402 = vand.u32 %v1816, 4294901760
    %v2403 = vsub.f32 %v1816, %v2402
    %v2404 = vand.u32 %v2403, 4294901760
    %v2405 = vsub.f32 %v2403, %v2404
    %v2406 = vand.u32 %v2405, 4294901760
    %2407 = vmatpush.msra.mxu0 %v2406
    %v2408 = vand.u32 %v1815, 4294901760
    %v2409 = vsub.f32 %v1815, %v2408
    %v2410 = vand.u32 %v2409, 4294901760
    %v2411 = vsub.f32 %v2409, %v2410
    %v2412 = vand.u32 %v2411, 4294901760
    %2413 = vmatpush.msra.mxu0 %v2412
    %v2414 = vand.u32 %v1814, 4294901760
    %v2415 = vsub.f32 %v1814, %v2414
    %v2416 = vand.u32 %v2415, 4294901760
    %v2417 = vsub.f32 %v2415, %v2416
    %v2418 = vand.u32 %v2417, 4294901760
    %2419 = vmatpush.msra.mxu0 %v2418
    %v2420 = vand.u32 %v1813, 4294901760
    %v2421 = vsub.f32 %v1813, %v2420
    %v2422 = vand.u32 %v2421, 4294901760
    %v2423 = vsub.f32 %v2421, %v2422
    %v2424 = vand.u32 %v2423, 4294901760
    %2425 = vmatpush.msra.mxu0 %v2424
    %v2426 = vand.u32 %v1812, 4294901760
    %v2427 = vsub.f32 %v1812, %v2426
    %v2428 = vand.u32 %v2427, 4294901760
    %v2429 = vsub.f32 %v2427, %v2428
    %v2430 = vand.u32 %v2429, 4294901760
    %2431 = vmatpush.msra.mxu0 %v2430
    %v2432 = vand.u32 %v1811, 4294901760
    %v2433 = vsub.f32 %v1811, %v2432
    %v2434 = vand.u32 %v2433, 4294901760
    %v2435 = vsub.f32 %v2433, %v2434
    %v2436 = vand.u32 %v2435, 4294901760
    %2437 = vmatpush.msra.mxu0 %v2436
    %v2438 = vand.u32 %v1755, 4294901760
    %2439 = vmatmul.f32.gmra.mxu0 %v2438
    %v2440 = vpop.f32.mrf.mxu0
    %v2441 = vadd.f32 %v2316, %v2440
    %v2442 = vand.u32 %v1756, 4294901760
    %2443 = vmatmul.f32.gmra.mxu0 %v2442
    %v2444 = vpop.f32.mrf.mxu0
    %v2445 = vadd.f32 %v2324, %v2444
    %v2446 = vand.u32 %v1757, 4294901760
    %2447 = vmatmul.f32.gmra.mxu0 %v2446
    %v2448 = vpop.f32.mrf.mxu0
    %v2449 = vadd.f32 %v2332, %v2448
    %v2450 = vand.u32 %v1758, 4294901760
    %2451 = vmatmul.f32.gmra.mxu0 %v2450
    %v2452 = vpop.f32.mrf.mxu0
    %v2453 = vadd.f32 %v2340, %v2452
    %2454 = vdwg.mxu0
    %v2455 = vand.u32 %v1826, 4294901760
    %v2456 = vsub.f32 %v1826, %v2455
    %2457 = vmatpush.msra.mxu0 %v2456
    %v2458 = vand.u32 %v1825, 4294901760
    %v2459 = vsub.f32 %v1825, %v2458
    %2460 = vmatpush.msra.mxu0 %v2459
    %v2461 = vand.u32 %v1824, 4294901760
    %v2462 = vsub.f32 %v1824, %v2461
    %2463 = vmatpush.msra.mxu0 %v2462
    %v2464 = vand.u32 %v1823, 4294901760
    %v2465 = vsub.f32 %v1823, %v2464
    %2466 = vmatpush.msra.mxu0 %v2465
    %v2467 = vand.u32 %v1822, 4294901760
    %v2468 = vsub.f32 %v1822, %v2467
    %2469 = vmatpush.msra.mxu0 %v2468
    %v2470 = vand.u32 %v1821, 4294901760
    %v2471 = vsub.f32 %v1821, %v2470
    %2472 = vmatpush.msra.mxu0 %v2471
    %v2473 = vand.u32 %v1820, 4294901760
    %v2474 = vsub.f32 %v1820, %v2473
    %2475 = vmatpush.msra.mxu0 %v2474
    %v2476 = vand.u32 %v1819, 4294901760
    %v2477 = vsub.f32 %v1819, %v2476
    %2478 = vmatpush.msra.mxu0 %v2477
    %v2479 = vand.u32 %v1818, 4294901760
    %v2480 = vsub.f32 %v1818, %v2479
    %2481 = vmatpush.msra.mxu0 %v2480
    %v2482 = vand.u32 %v1817, 4294901760
    %v2483 = vsub.f32 %v1817, %v2482
    %2484 = vmatpush.msra.mxu0 %v2483
    %v2485 = vand.u32 %v1816, 4294901760
    %v2486 = vsub.f32 %v1816, %v2485
    %2487 = vmatpush.msra.mxu0 %v2486
    %v2488 = vand.u32 %v1815, 4294901760
    %v2489 = vsub.f32 %v1815, %v2488
    %2490 = vmatpush.msra.mxu0 %v2489
    %v2491 = vand.u32 %v1814, 4294901760
    %v2492 = vsub.f32 %v1814, %v2491
    %2493 = vmatpush.msra.mxu0 %v2492
    %v2494 = vand.u32 %v1813, 4294901760
    %v2495 = vsub.f32 %v1813, %v2494
    %2496 = vmatpush.msra.mxu0 %v2495
    %v2497 = vand.u32 %v1812, 4294901760
    %v2498 = vsub.f32 %v1812, %v2497
    %2499 = vmatpush.msra.mxu0 %v2498
    %v2500 = vand.u32 %v1811, 4294901760
    %v2501 = vsub.f32 %v1811, %v2500
    %2502 = vmatpush.msra.mxu0 %v2501
    %v2503 = vand.u32 %v1755, 4294901760
    %v2504 = vsub.f32 %v1755, %v2503
    %2505 = vmatmul.f32.gmra.mxu0 %v2504
    %v2506 = vpop.f32.mrf.mxu0
    %v2507 = vadd.f32 %v2441, %v2506
    %v2508 = vand.u32 %v1756, 4294901760
    %v2509 = vsub.f32 %v1756, %v2508
    %2510 = vmatmul.f32.gmra.mxu0 %v2509
    %v2511 = vpop.f32.mrf.mxu0
    %v2512 = vadd.f32 %v2445, %v2511
    %v2513 = vand.u32 %v1757, 4294901760
    %v2514 = vsub.f32 %v1757, %v2513
    %2515 = vmatmul.f32.gmra.mxu0 %v2514
    %v2516 = vpop.f32.mrf.mxu0
    %v2517 = vadd.f32 %v2449, %v2516
    %v2518 = vand.u32 %v1758, 4294901760
    %v2519 = vsub.f32 %v1758, %v2518
    %2520 = vmatmul.f32.gmra.mxu0 %v2519
    %v2521 = vpop.f32.mrf.mxu0
    %v2522 = vadd.f32 %v2453, %v2521
    %2523 = vdwg.mxu0
    %v2524 = vand.u32 %v1826, 4294901760
    %2525 = vmatpush.msra.mxu0 %v2524
    %v2526 = vand.u32 %v1825, 4294901760
    %2527 = vmatpush.msra.mxu0 %v2526
    %v2528 = vand.u32 %v1824, 4294901760
    %2529 = vmatpush.msra.mxu0 %v2528
    %v2530 = vand.u32 %v1823, 4294901760
    %2531 = vmatpush.msra.mxu0 %v2530
    %v2532 = vand.u32 %v1822, 4294901760
    %2533 = vmatpush.msra.mxu0 %v2532
    %v2534 = vand.u32 %v1821, 4294901760
    %2535 = vmatpush.msra.mxu0 %v2534
    %v2536 = vand.u32 %v1820, 4294901760
    %2537 = vmatpush.msra.mxu0 %v2536
    %v2538 = vand.u32 %v1819, 4294901760
    %2539 = vmatpush.msra.mxu0 %v2538
    %v2540 = vand.u32 %v1818, 4294901760
    %2541 = vmatpush.msra.mxu0 %v2540
    %v2542 = vand.u32 %v1817, 4294901760
    %2543 = vmatpush.msra.mxu0 %v2542
    %v2544 = vand.u32 %v1816, 4294901760
    %2545 = vmatpush.msra.mxu0 %v2544
    %v2546 = vand.u32 %v1815, 4294901760
    %2547 = vmatpush.msra.mxu0 %v2546
    %v2548 = vand.u32 %v1814, 4294901760
    %2549 = vmatpush.msra.mxu0 %v2548
    %v2550 = vand.u32 %v1813, 4294901760
    %2551 = vmatpush.msra.mxu0 %v2550
    %v2552 = vand.u32 %v1812, 4294901760
    %2553 = vmatpush.msra.mxu0 %v2552
    %v2554 = vand.u32 %v1811, 4294901760
    %2555 = vmatpush.msra.mxu0 %v2554
    %v2556 = vand.u32 %v1755, 4294901760
    %v2557 = vsub.f32 %v1755, %v2556
    %v2558 = vand.u32 %v2557, 4294901760
    %2559 = vmatmul.f32.gmra.mxu0 %v2558
    %v2560 = vpop.f32.mrf.mxu0
    %v2561 = vadd.f32 %v2507, %v2560
    %v2562 = vand.u32 %v1756, 4294901760
    %v2563 = vsub.f32 %v1756, %v2562
    %v2564 = vand.u32 %v2563, 4294901760
    %2565 = vmatmul.f32.gmra.mxu0 %v2564
    %v2566 = vpop.f32.mrf.mxu0
    %v2567 = vadd.f32 %v2512, %v2566
    %v2568 = vand.u32 %v1757, 4294901760
    %v2569 = vsub.f32 %v1757, %v2568
    %v2570 = vand.u32 %v2569, 4294901760
    %2571 = vmatmul.f32.gmra.mxu0 %v2570
    %v2572 = vpop.f32.mrf.mxu0
    %v2573 = vadd.f32 %v2517, %v2572
    %v2574 = vand.u32 %v1758, 4294901760
    %v2575 = vsub.f32 %v1758, %v2574
    %v2576 = vand.u32 %v2575, 4294901760
    %2577 = vmatmul.f32.gmra.mxu0 %v2576
    %v2578 = vpop.f32.mrf.mxu0
    %v2579 = vadd.f32 %v2522, %v2578
    %2580 = vdwg.mxu0
    %v2581 = vand.u32 %v1826, 4294901760
    %v2582 = vsub.f32 %v1826, %v2581
    %v2583 = vand.u32 %v2582, 4294901760
    %2584 = vmatpush.msra.mxu0 %v2583
    %v2585 = vand.u32 %v1825, 4294901760
    %v2586 = vsub.f32 %v1825, %v2585
    %v2587 = vand.u32 %v2586, 4294901760
    %2588 = vmatpush.msra.mxu0 %v2587
    %v2589 = vand.u32 %v1824, 4294901760
    %v2590 = vsub.f32 %v1824, %v2589
    %v2591 = vand.u32 %v2590, 4294901760
    %2592 = vmatpush.msra.mxu0 %v2591
    %v2593 = vand.u32 %v1823, 4294901760
    %v2594 = vsub.f32 %v1823, %v2593
    %v2595 = vand.u32 %v2594, 4294901760
    %2596 = vmatpush.msra.mxu0 %v2595
    %v2597 = vand.u32 %v1822, 4294901760
    %v2598 = vsub.f32 %v1822, %v2597
    %v2599 = vand.u32 %v2598, 4294901760
    %2600 = vmatpush.msra.mxu0 %v2599
    %v2601 = vand.u32 %v1821, 4294901760
    %v2602 = vsub.f32 %v1821, %v2601
    %v2603 = vand.u32 %v2602, 4294901760
    %2604 = vmatpush.msra.mxu0 %v2603
    %v2605 = vand.u32 %v1820, 4294901760
    %v2606 = vsub.f32 %v1820, %v2605
    %v2607 = vand.u32 %v2606, 4294901760
    %2608 = vmatpush.msra.mxu0 %v2607
    %v2609 = vand.u32 %v1819, 4294901760
    %v2610 = vsub.f32 %v1819, %v2609
    %v2611 = vand.u32 %v2610, 4294901760
    %2612 = vmatpush.msra.mxu0 %v2611
    %v2613 = vand.u32 %v1818, 4294901760
    %v2614 = vsub.f32 %v1818, %v2613
    %v2615 = vand.u32 %v2614, 4294901760
    %2616 = vmatpush.msra.mxu0 %v2615
    %v2617 = vand.u32 %v1817, 4294901760
    %v2618 = vsub.f32 %v1817, %v2617
    %v2619 = vand.u32 %v2618, 4294901760
    %2620 = vmatpush.msra.mxu0 %v2619
    %v2621 = vand.u32 %v1816, 4294901760
    %v2622 = vsub.f32 %v1816, %v2621
    %v2623 = vand.u32 %v2622, 4294901760
    %2624 = vmatpush.msra.mxu0 %v2623
    %v2625 = vand.u32 %v1815, 4294901760
    %v2626 = vsub.f32 %v1815, %v2625
    %v2627 = vand.u32 %v2626, 4294901760
    %2628 = vmatpush.msra.mxu0 %v2627
    %v2629 = vand.u32 %v1814, 4294901760
    %v2630 = vsub.f32 %v1814, %v2629
    %v2631 = vand.u32 %v2630, 4294901760
    %2632 = vmatpush.msra.mxu0 %v2631
    %v2633 = vand.u32 %v1813, 4294901760
    %v2634 = vsub.f32 %v1813, %v2633
    %v2635 = vand.u32 %v2634, 4294901760
    %2636 = vmatpush.msra.mxu0 %v2635
    %v2637 = vand.u32 %v1812, 4294901760
    %v2638 = vsub.f32 %v1812, %v2637
    %v2639 = vand.u32 %v2638, 4294901760
    %2640 = vmatpush.msra.mxu0 %v2639
    %v2641 = vand.u32 %v1811, 4294901760
    %v2642 = vsub.f32 %v1811, %v2641
    %v2643 = vand.u32 %v2642, 4294901760
    %2644 = vmatpush.msra.mxu0 %v2643
    %v2645 = vand.u32 %v1755, 4294901760
    %2646 = vmatmul.f32.gmra.mxu0 %v2645
    %v2647 = vpop.f32.mrf.mxu0
    %v2648 = vadd.f32 %v2561, %v2647
    %v2649 = vand.u32 %v1756, 4294901760
    %2650 = vmatmul.f32.gmra.mxu0 %v2649
    %v2651 = vpop.f32.mrf.mxu0
    %v2652 = vadd.f32 %v2567, %v2651
    %v2653 = vand.u32 %v1757, 4294901760
    %2654 = vmatmul.f32.gmra.mxu0 %v2653
    %v2655 = vpop.f32.mrf.mxu0
    %v2656 = vadd.f32 %v2573, %v2655
    %v2657 = vand.u32 %v1758, 4294901760
    %2658 = vmatmul.f32.gmra.mxu0 %v2657
    %v2659 = vpop.f32.mrf.mxu0
    %v2660 = vadd.f32 %v2579, %v2659
    %2661 = vdwg.mxu0
    %v2662 = vand.u32 %v1826, 4294901760
    %2663 = vmatpush.msra.mxu0 %v2662
    %v2664 = vand.u32 %v1825, 4294901760
    %2665 = vmatpush.msra.mxu0 %v2664
    %v2666 = vand.u32 %v1824, 4294901760
    %2667 = vmatpush.msra.mxu0 %v2666
    %v2668 = vand.u32 %v1823, 4294901760
    %2669 = vmatpush.msra.mxu0 %v2668
    %v2670 = vand.u32 %v1822, 4294901760
    %2671 = vmatpush.msra.mxu0 %v2670
    %v2672 = vand.u32 %v1821, 4294901760
    %2673 = vmatpush.msra.mxu0 %v2672
    %v2674 = vand.u32 %v1820, 4294901760
    %2675 = vmatpush.msra.mxu0 %v2674
    %v2676 = vand.u32 %v1819, 4294901760
    %2677 = vmatpush.msra.mxu0 %v2676
    %v2678 = vand.u32 %v1818, 4294901760
    %2679 = vmatpush.msra.mxu0 %v2678
    %v2680 = vand.u32 %v1817, 4294901760
    %2681 = vmatpush.msra.mxu0 %v2680
    %v2682 = vand.u32 %v1816, 4294901760
    %2683 = vmatpush.msra.mxu0 %v2682
    %v2684 = vand.u32 %v1815, 4294901760
    %2685 = vmatpush.msra.mxu0 %v2684
    %v2686 = vand.u32 %v1814, 4294901760
    %2687 = vmatpush.msra.mxu0 %v2686
    %v2688 = vand.u32 %v1813, 4294901760
    %2689 = vmatpush.msra.mxu0 %v2688
    %v2690 = vand.u32 %v1812, 4294901760
    %2691 = vmatpush.msra.mxu0 %v2690
    %v2692 = vand.u32 %v1811, 4294901760
    %2693 = vmatpush.msra.mxu0 %v2692
    %v2694 = vand.u32 %v1755, 4294901760
    %2695 = vmatmul.f32.gmra.mxu0 %v2694
    %v2696 = vpop.f32.mrf.mxu0
    %v2697 = vadd.f32 %v2648, %v2696
    %v2698 = vand.u32 %v1756, 4294901760
    %2699 = vmatmul.f32.gmra.mxu0 %v2698
    %v2700 = vpop.f32.mrf.mxu0
    %v2701 = vadd.f32 %v2652, %v2700
    %v2702 = vand.u32 %v1757, 4294901760
    %2703 = vmatmul.f32.gmra.mxu0 %v2702
    %v2704 = vpop.f32.mrf.mxu0
    %v2705 = vadd.f32 %v2656, %v2704
    %v2706 = vand.u32 %v1758, 4294901760
    %2707 = vmatmul.f32.gmra.mxu0 %v2706
    %v2708 = vpop.f32.mrf.mxu0
    %v2709 = vadd.f32 %v2660, %v2708
    %2710 = vdwg.mxu0
    %v2711 = vand.u32 %v1842, 4294901760
    %2712 = vmatpush.msra.mxu0 %v2711
    %v2713 = vand.u32 %v1841, 4294901760
    %2714 = vmatpush.msra.mxu0 %v2713
    %v2715 = vand.u32 %v1840, 4294901760
    %2716 = vmatpush.msra.mxu0 %v2715
    %v2717 = vand.u32 %v1839, 4294901760
    %2718 = vmatpush.msra.mxu0 %v2717
    %v2719 = vand.u32 %v1838, 4294901760
    %2720 = vmatpush.msra.mxu0 %v2719
    %v2721 = vand.u32 %v1837, 4294901760
    %2722 = vmatpush.msra.mxu0 %v2721
    %v2723 = vand.u32 %v1836, 4294901760
    %2724 = vmatpush.msra.mxu0 %v2723
    %v2725 = vand.u32 %v1835, 4294901760
    %2726 = vmatpush.msra.mxu0 %v2725
    %v2727 = vand.u32 %v1834, 4294901760
    %2728 = vmatpush.msra.mxu0 %v2727
    %v2729 = vand.u32 %v1833, 4294901760
    %2730 = vmatpush.msra.mxu0 %v2729
    %v2731 = vand.u32 %v1832, 4294901760
    %2732 = vmatpush.msra.mxu0 %v2731
    %v2733 = vand.u32 %v1831, 4294901760
    %2734 = vmatpush.msra.mxu0 %v2733
    %v2735 = vand.u32 %v1830, 4294901760
    %2736 = vmatpush.msra.mxu0 %v2735
    %v2737 = vand.u32 %v1829, 4294901760
    %2738 = vmatpush.msra.mxu0 %v2737
    %v2739 = vand.u32 %v1828, 4294901760
    %2740 = vmatpush.msra.mxu0 %v2739
    %v2741 = vand.u32 %v1827, 4294901760
    %2742 = vmatpush.msra.mxu0 %v2741
    %v2743 = vand.u32 %v1791, 4294901760
    %v2744 = vsub.f32 %v1791, %v2743
    %v2745 = vand.u32 %v2744, 4294901760
    %v2746 = vsub.f32 %v2744, %v2745
    %v2747 = vand.u32 %v2746, 4294901760
    %2748 = vmatmul.f32.gmra.mxu0 %v2747
    %v2749 = vpop.f32.mrf.mxu0
    %v2750 = vadd.f32 %v2697, %v2749
    %v2751 = vand.u32 %v1792, 4294901760
    %v2752 = vsub.f32 %v1792, %v2751
    %v2753 = vand.u32 %v2752, 4294901760
    %v2754 = vsub.f32 %v2752, %v2753
    %v2755 = vand.u32 %v2754, 4294901760
    %2756 = vmatmul.f32.gmra.mxu0 %v2755
    %v2757 = vpop.f32.mrf.mxu0
    %v2758 = vadd.f32 %v2701, %v2757
    %v2759 = vand.u32 %v1793, 4294901760
    %v2760 = vsub.f32 %v1793, %v2759
    %v2761 = vand.u32 %v2760, 4294901760
    %v2762 = vsub.f32 %v2760, %v2761
    %v2763 = vand.u32 %v2762, 4294901760
    %2764 = vmatmul.f32.gmra.mxu0 %v2763
    %v2765 = vpop.f32.mrf.mxu0
    %v2766 = vadd.f32 %v2705, %v2765
    %v2767 = vand.u32 %v1794, 4294901760
    %v2768 = vsub.f32 %v1794, %v2767
    %v2769 = vand.u32 %v2768, 4294901760
    %v2770 = vsub.f32 %v2768, %v2769
    %v2771 = vand.u32 %v2770, 4294901760
    %2772 = vmatmul.f32.gmra.mxu0 %v2771
    %v2773 = vpop.f32.mrf.mxu0
    %v2774 = vadd.f32 %v2709, %v2773
    %2775 = vdwg.mxu0
    %v2776 = vand.u32 %v1842, 4294901760
    %v2777 = vsub.f32 %v1842, %v2776
    %v2778 = vand.u32 %v2777, 4294901760
    %v2779 = vsub.f32 %v2777, %v2778
    %v2780 = vand.u32 %v2779, 4294901760
    %2781 = vmatpush.msra.mxu0 %v2780
    %v2782 = vand.u32 %v1841, 4294901760
    %v2783 = vsub.f32 %v1841, %v2782
    %v2784 = vand.u32 %v2783, 4294901760
    %v2785 = vsub.f32 %v2783, %v2784
    %v2786 = vand.u32 %v2785, 4294901760
    %2787 = vmatpush.msra.mxu0 %v2786
    %v2788 = vand.u32 %v1840, 4294901760
    %v2789 = vsub.f32 %v1840, %v2788
    %v2790 = vand.u32 %v2789, 4294901760
    %v2791 = vsub.f32 %v2789, %v2790
    %v2792 = vand.u32 %v2791, 4294901760
    %2793 = vmatpush.msra.mxu0 %v2792
    %v2794 = vand.u32 %v1839, 4294901760
    %v2795 = vsub.f32 %v1839, %v2794
    %v2796 = vand.u32 %v2795, 4294901760
    %v2797 = vsub.f32 %v2795, %v2796
    %v2798 = vand.u32 %v2797, 4294901760
    %2799 = vmatpush.msra.mxu0 %v2798
    %v2800 = vand.u32 %v1838, 4294901760
    %v2801 = vsub.f32 %v1838, %v2800
    %v2802 = vand.u32 %v2801, 4294901760
    %v2803 = vsub.f32 %v2801, %v2802
    %v2804 = vand.u32 %v2803, 4294901760
    %2805 = vmatpush.msra.mxu0 %v2804
    %v2806 = vand.u32 %v1837, 4294901760
    %v2807 = vsub.f32 %v1837, %v2806
    %v2808 = vand.u32 %v2807, 4294901760
    %v2809 = vsub.f32 %v2807, %v2808
    %v2810 = vand.u32 %v2809, 4294901760
    %2811 = vmatpush.msra.mxu0 %v2810
    %v2812 = vand.u32 %v1836, 4294901760
    %v2813 = vsub.f32 %v1836, %v2812
    %v2814 = vand.u32 %v2813, 4294901760
    %v2815 = vsub.f32 %v2813, %v2814
    %v2816 = vand.u32 %v2815, 4294901760
    %2817 = vmatpush.msra.mxu0 %v2816
    %v2818 = vand.u32 %v1835, 4294901760
    %v2819 = vsub.f32 %v1835, %v2818
    %v2820 = vand.u32 %v2819, 4294901760
    %v2821 = vsub.f32 %v2819, %v2820
    %v2822 = vand.u32 %v2821, 4294901760
    %2823 = vmatpush.msra.mxu0 %v2822
    %v2824 = vand.u32 %v1834, 4294901760
    %v2825 = vsub.f32 %v1834, %v2824
    %v2826 = vand.u32 %v2825, 4294901760
    %v2827 = vsub.f32 %v2825, %v2826
    %v2828 = vand.u32 %v2827, 4294901760
    %2829 = vmatpush.msra.mxu0 %v2828
    %v2830 = vand.u32 %v1833, 4294901760
    %v2831 = vsub.f32 %v1833, %v2830
    %v2832 = vand.u32 %v2831, 4294901760
    %v2833 = vsub.f32 %v2831, %v2832
    %v2834 = vand.u32 %v2833, 4294901760
    %2835 = vmatpush.msra.mxu0 %v2834
    %v2836 = vand.u32 %v1832, 4294901760
    %v2837 = vsub.f32 %v1832, %v2836
    %v2838 = vand.u32 %v2837, 4294901760
    %v2839 = vsub.f32 %v2837, %v2838
    %v2840 = vand.u32 %v2839, 4294901760
    %2841 = vmatpush.msra.mxu0 %v2840
    %v2842 = vand.u32 %v1831, 4294901760
    %v2843 = vsub.f32 %v1831, %v2842
    %v2844 = vand.u32 %v2843, 4294901760
    %v2845 = vsub.f32 %v2843, %v2844
    %v2846 = vand.u32 %v2845, 4294901760
    %2847 = vmatpush.msra.mxu0 %v2846
    %v2848 = vand.u32 %v1830, 4294901760
    %v2849 = vsub.f32 %v1830, %v2848
    %v2850 = vand.u32 %v2849, 4294901760
    %v2851 = vsub.f32 %v2849, %v2850
    %v2852 = vand.u32 %v2851, 4294901760
    %2853 = vmatpush.msra.mxu0 %v2852
    %v2854 = vand.u32 %v1829, 4294901760
    %v2855 = vsub.f32 %v1829, %v2854
    %v2856 = vand.u32 %v2855, 4294901760
    %v2857 = vsub.f32 %v2855, %v2856
    %v2858 = vand.u32 %v2857, 4294901760
    %2859 = vmatpush.msra.mxu0 %v2858
    %v2860 = vand.u32 %v1828, 4294901760
    %v2861 = vsub.f32 %v1828, %v2860
    %v2862 = vand.u32 %v2861, 4294901760
    %v2863 = vsub.f32 %v2861, %v2862
    %v2864 = vand.u32 %v2863, 4294901760
    %2865 = vmatpush.msra.mxu0 %v2864
    %v2866 = vand.u32 %v1827, 4294901760
    %v2867 = vsub.f32 %v1827, %v2866
    %v2868 = vand.u32 %v2867, 4294901760
    %v2869 = vsub.f32 %v2867, %v2868
    %v2870 = vand.u32 %v2869, 4294901760
    %2871 = vmatpush.msra.mxu0 %v2870
    %v2872 = vand.u32 %v1791, 4294901760
    %2873 = vmatmul.f32.gmra.mxu0 %v2872
    %v2874 = vpop.f32.mrf.mxu0
    %v2875 = vadd.f32 %v2750, %v2874
    %v2876 = vand.u32 %v1792, 4294901760
    %2877 = vmatmul.f32.gmra.mxu0 %v2876
    %v2878 = vpop.f32.mrf.mxu0
    %v2879 = vadd.f32 %v2758, %v2878
    %v2880 = vand.u32 %v1793, 4294901760
    %2881 = vmatmul.f32.gmra.mxu0 %v2880
    %v2882 = vpop.f32.mrf.mxu0
    %v2883 = vadd.f32 %v2766, %v2882
    %v2884 = vand.u32 %v1794, 4294901760
    %2885 = vmatmul.f32.gmra.mxu0 %v2884
    %v2886 = vpop.f32.mrf.mxu0
    %v2887 = vadd.f32 %v2774, %v2886
    %2888 = vdwg.mxu0
    %v2889 = vand.u32 %v1842, 4294901760
    %v2890 = vsub.f32 %v1842, %v2889
    %2891 = vmatpush.msra.mxu0 %v2890
    %v2892 = vand.u32 %v1841, 4294901760
    %v2893 = vsub.f32 %v1841, %v2892
    %2894 = vmatpush.msra.mxu0 %v2893
    %v2895 = vand.u32 %v1840, 4294901760
    %v2896 = vsub.f32 %v1840, %v2895
    %2897 = vmatpush.msra.mxu0 %v2896
    %v2898 = vand.u32 %v1839, 4294901760
    %v2899 = vsub.f32 %v1839, %v2898
    %2900 = vmatpush.msra.mxu0 %v2899
    %v2901 = vand.u32 %v1838, 4294901760
    %v2902 = vsub.f32 %v1838, %v2901
    %2903 = vmatpush.msra.mxu0 %v2902
    %v2904 = vand.u32 %v1837, 4294901760
    %v2905 = vsub.f32 %v1837, %v2904
    %2906 = vmatpush.msra.mxu0 %v2905
    %v2907 = vand.u32 %v1836, 4294901760
    %v2908 = vsub.f32 %v1836, %v2907
    %2909 = vmatpush.msra.mxu0 %v2908
    %v2910 = vand.u32 %v1835, 4294901760
    %v2911 = vsub.f32 %v1835, %v2910
    %2912 = vmatpush.msra.mxu0 %v2911
    %v2913 = vand.u32 %v1834, 4294901760
    %v2914 = vsub.f32 %v1834, %v2913
    %2915 = vmatpush.msra.mxu0 %v2914
    %v2916 = vand.u32 %v1833, 4294901760
    %v2917 = vsub.f32 %v1833, %v2916
    %2918 = vmatpush.msra.mxu0 %v2917
    %v2919 = vand.u32 %v1832, 4294901760
    %v2920 = vsub.f32 %v1832, %v2919
    %2921 = vmatpush.msra.mxu0 %v2920
    %v2922 = vand.u32 %v1831, 4294901760
    %v2923 = vsub.f32 %v1831, %v2922
    %2924 = vmatpush.msra.mxu0 %v2923
    %v2925 = vand.u32 %v1830, 4294901760
    %v2926 = vsub.f32 %v1830, %v2925
    %2927 = vmatpush.msra.mxu0 %v2926
    %v2928 = vand.u32 %v1829, 4294901760
    %v2929 = vsub.f32 %v1829, %v2928
    %2930 = vmatpush.msra.mxu0 %v2929
    %v2931 = vand.u32 %v1828, 4294901760
    %v2932 = vsub.f32 %v1828, %v2931
    %2933 = vmatpush.msra.mxu0 %v2932
    %v2934 = vand.u32 %v1827, 4294901760
    %v2935 = vsub.f32 %v1827, %v2934
    %2936 = vmatpush.msra.mxu0 %v2935
    %v2937 = vand.u32 %v1791, 4294901760
    %v2938 = vsub.f32 %v1791, %v2937
    %2939 = vmatmul.f32.gmra.mxu0 %v2938
    %v2940 = vpop.f32.mrf.mxu0
    %v2941 = vadd.f32 %v2875, %v2940
    %v2942 = vand.u32 %v1792, 4294901760
    %v2943 = vsub.f32 %v1792, %v2942
    %2944 = vmatmul.f32.gmra.mxu0 %v2943
    %v2945 = vpop.f32.mrf.mxu0
    %v2946 = vadd.f32 %v2879, %v2945
    %v2947 = vand.u32 %v1793, 4294901760
    %v2948 = vsub.f32 %v1793, %v2947
    %2949 = vmatmul.f32.gmra.mxu0 %v2948
    %v2950 = vpop.f32.mrf.mxu0
    %v2951 = vadd.f32 %v2883, %v2950
    %v2952 = vand.u32 %v1794, 4294901760
    %v2953 = vsub.f32 %v1794, %v2952
    %2954 = vmatmul.f32.gmra.mxu0 %v2953
    %v2955 = vpop.f32.mrf.mxu0
    %v2956 = vadd.f32 %v2887, %v2955
    %2957 = vdwg.mxu0
    %v2958 = vand.u32 %v1842, 4294901760
    %2959 = vmatpush.msra.mxu0 %v2958
    %v2960 = vand.u32 %v1841, 4294901760
    %2961 = vmatpush.msra.mxu0 %v2960
    %v2962 = vand.u32 %v1840, 4294901760
    %2963 = vmatpush.msra.mxu0 %v2962
    %v2964 = vand.u32 %v1839, 4294901760
    %2965 = vmatpush.msra.mxu0 %v2964
    %v2966 = vand.u32 %v1838, 4294901760
    %2967 = vmatpush.msra.mxu0 %v2966
    %v2968 = vand.u32 %v1837, 4294901760
    %2969 = vmatpush.msra.mxu0 %v2968
    %v2970 = vand.u32 %v1836, 4294901760
    %2971 = vmatpush.msra.mxu0 %v2970
    %v2972 = vand.u32 %v1835, 4294901760
    %2973 = vmatpush.msra.mxu0 %v2972
    %v2974 = vand.u32 %v1834, 4294901760
    %2975 = vmatpush.msra.mxu0 %v2974
    %v2976 = vand.u32 %v1833, 4294901760
    %2977 = vmatpush.msra.mxu0 %v2976
    %v2978 = vand.u32 %v1832, 4294901760
    %2979 = vmatpush.msra.mxu0 %v2978
    %v2980 = vand.u32 %v1831, 4294901760
    %2981 = vmatpush.msra.mxu0 %v2980
    %v2982 = vand.u32 %v1830, 4294901760
    %2983 = vmatpush.msra.mxu0 %v2982
    %v2984 = vand.u32 %v1829, 4294901760
    %2985 = vmatpush.msra.mxu0 %v2984
    %v2986 = vand.u32 %v1828, 4294901760
    %2987 = vmatpush.msra.mxu0 %v2986
    %v2988 = vand.u32 %v1827, 4294901760
    %2989 = vmatpush.msra.mxu0 %v2988
    %v2990 = vand.u32 %v1791, 4294901760
    %v2991 = vsub.f32 %v1791, %v2990
    %v2992 = vand.u32 %v2991, 4294901760
    %2993 = vmatmul.f32.gmra.mxu0 %v2992
    %v2994 = vpop.f32.mrf.mxu0
    %v2995 = vadd.f32 %v2941, %v2994
    %v2996 = vand.u32 %v1792, 4294901760
    %v2997 = vsub.f32 %v1792, %v2996
    %v2998 = vand.u32 %v2997, 4294901760
    %2999 = vmatmul.f32.gmra.mxu0 %v2998
    %v3000 = vpop.f32.mrf.mxu0
    %v3001 = vadd.f32 %v2946, %v3000
    %v3002 = vand.u32 %v1793, 4294901760
    %v3003 = vsub.f32 %v1793, %v3002
    %v3004 = vand.u32 %v3003, 4294901760
    %3005 = vmatmul.f32.gmra.mxu0 %v3004
    %v3006 = vpop.f32.mrf.mxu0
    %v3007 = vadd.f32 %v2951, %v3006
    %v3008 = vand.u32 %v1794, 4294901760
    %v3009 = vsub.f32 %v1794, %v3008
    %v3010 = vand.u32 %v3009, 4294901760
    %3011 = vmatmul.f32.gmra.mxu0 %v3010
    %v3012 = vpop.f32.mrf.mxu0
    %v3013 = vadd.f32 %v2956, %v3012
    %3014 = vdwg.mxu0
    %v3015 = vand.u32 %v1842, 4294901760
    %v3016 = vsub.f32 %v1842, %v3015
    %v3017 = vand.u32 %v3016, 4294901760
    %3018 = vmatpush.msra.mxu0 %v3017
    %v3019 = vand.u32 %v1841, 4294901760
    %v3020 = vsub.f32 %v1841, %v3019
    %v3021 = vand.u32 %v3020, 4294901760
    %3022 = vmatpush.msra.mxu0 %v3021
    %v3023 = vand.u32 %v1840, 4294901760
    %v3024 = vsub.f32 %v1840, %v3023
    %v3025 = vand.u32 %v3024, 4294901760
    %3026 = vmatpush.msra.mxu0 %v3025
    %v3027 = vand.u32 %v1839, 4294901760
    %v3028 = vsub.f32 %v1839, %v3027
    %v3029 = vand.u32 %v3028, 4294901760
    %3030 = vmatpush.msra.mxu0 %v3029
    %v3031 = vand.u32 %v1838, 4294901760
    %v3032 = vsub.f32 %v1838, %v3031
    %v3033 = vand.u32 %v3032, 4294901760
    %3034 = vmatpush.msra.mxu0 %v3033
    %v3035 = vand.u32 %v1837, 4294901760
    %v3036 = vsub.f32 %v1837, %v3035
    %v3037 = vand.u32 %v3036, 4294901760
    %3038 = vmatpush.msra.mxu0 %v3037
    %v3039 = vand.u32 %v1836, 4294901760
    %v3040 = vsub.f32 %v1836, %v3039
    %v3041 = vand.u32 %v3040, 4294901760
    %3042 = vmatpush.msra.mxu0 %v3041
    %v3043 = vand.u32 %v1835, 4294901760
    %v3044 = vsub.f32 %v1835, %v3043
    %v3045 = vand.u32 %v3044, 4294901760
    %3046 = vmatpush.msra.mxu0 %v3045
    %v3047 = vand.u32 %v1834, 4294901760
    %v3048 = vsub.f32 %v1834, %v3047
    %v3049 = vand.u32 %v3048, 4294901760
    %3050 = vmatpush.msra.mxu0 %v3049
    %v3051 = vand.u32 %v1833, 4294901760
    %v3052 = vsub.f32 %v1833, %v3051
    %v3053 = vand.u32 %v3052, 4294901760
    %3054 = vmatpush.msra.mxu0 %v3053
    %v3055 = vand.u32 %v1832, 4294901760
    %v3056 = vsub.f32 %v1832, %v3055
    %v3057 = vand.u32 %v3056, 4294901760
    %3058 = vmatpush.msra.mxu0 %v3057
    %v3059 = vand.u32 %v1831, 4294901760
    %v3060 = vsub.f32 %v1831, %v3059
    %v3061 = vand.u32 %v3060, 4294901760
    %3062 = vmatpush.msra.mxu0 %v3061
    %v3063 = vand.u32 %v1830, 4294901760
    %v3064 = vsub.f32 %v1830, %v3063
    %v3065 = vand.u32 %v3064, 4294901760
    %3066 = vmatpush.msra.mxu0 %v3065
    %v3067 = vand.u32 %v1829, 4294901760
    %v3068 = vsub.f32 %v1829, %v3067
    %v3069 = vand.u32 %v3068, 4294901760
    %3070 = vmatpush.msra.mxu0 %v3069
    %v3071 = vand.u32 %v1828, 4294901760
    %v3072 = vsub.f32 %v1828, %v3071
    %v3073 = vand.u32 %v3072, 4294901760
    %3074 = vmatpush.msra.mxu0 %v3073
    %v3075 = vand.u32 %v1827, 4294901760
    %v3076 = vsub.f32 %v1827, %v3075
    %v3077 = vand.u32 %v3076, 4294901760
    %3078 = vmatpush.msra.mxu0 %v3077
    %v3079 = vand.u32 %v1791, 4294901760
    %3080 = vmatmul.f32.gmra.mxu0 %v3079
    %v3081 = vpop.f32.mrf.mxu0
    %v3082 = vadd.f32 %v2995, %v3081
    %v3083 = vand.u32 %v1792, 4294901760
    %3084 = vmatmul.f32.gmra.mxu0 %v3083
    %v3085 = vpop.f32.mrf.mxu0
    %v3086 = vadd.f32 %v3001, %v3085
    %v3087 = vand.u32 %v1793, 4294901760
    %3088 = vmatmul.f32.gmra.mxu0 %v3087
    %v3089 = vpop.f32.mrf.mxu0
    %v3090 = vadd.f32 %v3007, %v3089
    %v3091 = vand.u32 %v1794, 4294901760
    %3092 = vmatmul.f32.gmra.mxu0 %v3091
    %v3093 = vpop.f32.mrf.mxu0
    %v3094 = vadd.f32 %v3013, %v3093
    %3095 = vdwg.mxu0
    %v3096 = vand.u32 %v1842, 4294901760
    %3097 = vmatpush.msra.mxu0 %v3096
    %v3098 = vand.u32 %v1841, 4294901760
    %3099 = vmatpush.msra.mxu0 %v3098
    %v3100 = vand.u32 %v1840, 4294901760
    %3101 = vmatpush.msra.mxu0 %v3100
    %v3102 = vand.u32 %v1839, 4294901760
    %3103 = vmatpush.msra.mxu0 %v3102
    %v3104 = vand.u32 %v1838, 4294901760
    %3105 = vmatpush.msra.mxu0 %v3104
    %v3106 = vand.u32 %v1837, 4294901760
    %3107 = vmatpush.msra.mxu0 %v3106
    %v3108 = vand.u32 %v1836, 4294901760
    %3109 = vmatpush.msra.mxu0 %v3108
    %v3110 = vand.u32 %v1835, 4294901760
    %3111 = vmatpush.msra.mxu0 %v3110
    %v3112 = vand.u32 %v1834, 4294901760
    %3113 = vmatpush.msra.mxu0 %v3112
    %v3114 = vand.u32 %v1833, 4294901760
    %3115 = vmatpush.msra.mxu0 %v3114
    %v3116 = vand.u32 %v1832, 4294901760
    %3117 = vmatpush.msra.mxu0 %v3116
    %v3118 = vand.u32 %v1831, 4294901760
    %3119 = vmatpush.msra.mxu0 %v3118
    %v3120 = vand.u32 %v1830, 4294901760
    %3121 = vmatpush.msra.mxu0 %v3120
    %v3122 = vand.u32 %v1829, 4294901760
    %3123 = vmatpush.msra.mxu0 %v3122
    %v3124 = vand.u32 %v1828, 4294901760
    %3125 = vmatpush.msra.mxu0 %v3124
    %v3126 = vand.u32 %v1827, 4294901760
    %3127 = vmatpush.msra.mxu0 %v3126
    %v3128 = vand.u32 %v1791, 4294901760
    %3129 = vmatmul.f32.gmra.mxu0 %v3128
    %v3130 = vpop.f32.mrf.mxu0
    %v3131 = vadd.f32 %v3082, %v3130
    %v3132 = vand.u32 %v1792, 4294901760
    %3133 = vmatmul.f32.gmra.mxu0 %v3132
    %v3134 = vpop.f32.mrf.mxu0
    %v3135 = vadd.f32 %v3086, %v3134
    %v3136 = vand.u32 %v1793, 4294901760
    %3137 = vmatmul.f32.gmra.mxu0 %v3136
    %v3138 = vpop.f32.mrf.mxu0
    %v3139 = vadd.f32 %v3090, %v3138
    %v3140 = vand.u32 %v1794, 4294901760
    %3141 = vmatmul.f32.gmra.mxu0 %v3140
    %v3142 = vpop.f32.mrf.mxu0
    %v3143 = vadd.f32 %v3094, %v3142
    %3144 = vdwg.mxu0
    %3145 = vst [vmem:[#allocation8] sm:$0xff] %v3131
    %3146 = vst [vmem:[#allocation8 + $0x8] sm:$0xff] %v3135
    %3147 = vst [vmem:[#allocation8 + $0x10] sm:$0xff] %v3139
    %3148 = vst [vmem:[#allocation8 + $0x18] sm:$0xff] %v3143
    // Predicated region
    $region26: #{tpu_custom_call.1} parent=1 // pred_check
      _
    $region27: #{tpu_custom_call.1} parent=1 // pred_check_branch
      %3150 = sbr.rel (0) target = $region29
    $region28: #{tpu_custom_call.1} parent=1 // pred_region
      %3152 = vsyncadd [#allocation4], 0
      %s3153 = sshll.u32 [#allocation8], 4
      %s3154 = int_to_ptr.vmem [resolvable:$true] %s3153
      %s3155 = sshll.u32 %s3, 4
      %s3156 = int_to_ptr.hbm [resolvable:$true] %s3155
      %3161 = dma.vmem_to_hbm [thread:$0]  %s3154, 512, %s3156, [#allocation4], 128, 128, 8
    $region29: #{tpu_custom_call.1} parent=1 // pred_fallthru
      _
    // Predicated region
    $region30: #{tpu_custom_call.1} parent=1 // pred_check
      _
    $region31: #{tpu_custom_call.1} parent=1 // pred_check_branch
      %3163 = sbr.rel (0) target = $region33
    $region32: #{tpu_custom_call.1} parent=1 // pred_region
      %3165 = dma.done [#allocation4], 512
    $region33: #{tpu_custom_call.1} parent=1 // pred_fallthru
      _
    %3166 = vsyncpa [#allocation3], 1
    %3167 = vsyncpa [#allocation6], 1
    %3168 = vsyncpa [#allocation4], 1

</llo_original>
